<compile_context>
chip_gen: v7x
topology: tpu7x:2x2x1
jax: 0.10.0
libtpu: 0.0.40
codegen_flags: <defaults>
</compile_context>

<pallas_src>
import numpy as np
import jax
import jax.numpy as jnp
from jax import lax
from jax.experimental import pallas as pl
from jax.experimental.pallas import tpu as pltpu

EMB = 768     # fixed by the module (Conv1d in_channels=768)
SEQ = 24      # fixed by x.reshape(-1, 768, 24)
NEG = -1e9    # additive mask for invalid conv positions (applied pre-activation)


def _vmem_capacity_bytes(default=64 << 20):
    try:
        info = pltpu.get_tpu_info()
        v = getattr(info, "vmem_capacity_bytes", None)
        return int(v) if v else default
    except Exception:
        return default


def make_berttcr_kernel(bb, ins_num, max_h, sum_f, fpad, n_models, packed):
    n_rows = bb * ins_num * SEQ
    inv_m = 1.0 / float(n_models)

    def kernel(x_ref, w_ref, b_ref, mask_ref, fcw_ref, fcb_ref,
               wsum_ref, bsum_ref, o_ref):
        x2d = x_ref[0]                                   # (n_rows, EMB) bf16

        if packed:
            # ONE full-row MXU matmul; taps & branches share the 128 lanes
            # (lane j = k*sum_f + filter).  Tap alignment shifts the narrow
            # f32 result on the XLU instead of re-multiplying or slicing the
            # wide input.  Rows/lanes that wrap only land on positions/lanes
            # that are masked or ignored downstream (weight columns for
            # taps k >= h are exactly zero).
            # TODO(synk): if the bundle dump shows the XLU slot binding after
            # the MXU reduction, stage `y` in a padded VMEM scratch and read
            # sublane-shifted slices via pl.ds instead of rolling.
            y = jnp.dot(x2d, w_ref[...], preferred_element_type=jnp.float32)
            acc = y
            for k in range(1, max_h):
                t = pltpu.roll(y, shift=n_rows - k, axis=0)        # row r <- r+k
                t = pltpu.roll(t, shift=fpad - k * sum_f, axis=1)  # lane f <- f+k*sum_f
                acc = acc + t
        else:
            # fallback: one lane-dense matmul per tap (general configs).
            acc = jnp.dot(x2d, w_ref[0], preferred_element_type=jnp.float32)
            for k in range(1, max_h):
                yk = jnp.dot(x2d, w_ref[k], preferred_element_type=jnp.float32)
                acc = acc + pltpu.roll(yk, shift=n_rows - k, axis=0)

        # Mask invalid positions on the PRE-activation, max-pool over SEQ
        # (AdaptiveMaxPool1d(1)), then bias + sigmoid on the pooled tensor.
        acc3 = acc.reshape(bb * ins_num, SEQ, fpad) + mask_ref[...]
        pooled = jnp.max(acc3, axis=1)                   # (bb*ins, fpad)
        feat = jax.nn.sigmoid(pooled + b_ref[...])       # 24x fewer sigmoids

        # fc(sum_f -> 1): VPU multiply + lane reduction (keeps MXU free).
        inst = jnp.sum(feat * fcw_ref[...], axis=1, keepdims=True) + fcb_ref[...]

        # 5-model ensemble collapsed exactly:
        #   sum_m (inst @ W_m^T + b_m) == inst @ (sum_m W_m^T) + sum_m b_m.
        # Per-bag contraction over ins_num = broadcast multiply with the
        # row-tiled summed weight + segmented sublane sum (no kron constant).
        p = inst * wsum_ref[...]                          # (bb*ins, 2)
        pred = jnp.sum(p.reshape(bb, ins_num, 2), axis=1) + bsum_ref[...]
        o_ref[0] = jax.nn.sigmoid(pred * inv_m)           # (bb, 2)

    return kernel


def berttcr_forward(x, params, *, filter_num, kernel_size, ins_num,
                    block_bags=None):
    """x: (N, 768, 24) float32 (PyTorch NCL layout), N = num_bags * ins_num."""
    N = x.shape[0]
    assert x.shape[1:] == (EMB, SEQ)
    assert N % ins_num == 0
    assert len(filter_num) == len(kernel_size)
    num_bags = N // ins_num
    sum_f = int(sum(filter_num))
    max_h = int(max(kernel_size))
    assert max_h <= SEQ, "kernel_size must not exceed sequence length"
    n_models = int(params["mw"].shape[0])
    offs = [0] + list(np.cumsum(filter_num).astype(int))

    # single-matmul tap packing fits when all (tap, filter) pairs fit 128 lanes
    packed = (max_h * sum_f) <= 128
    fpad = 128 if packed else 128 * max(1, pl.cdiv(sum_f, 128))

    # ---- generation-aware bags-per-grid-step (BB) + explicit VMEM limit ----
    vmem_cap = _vmem_capacity_bytes()                    # 128 MiB v5e/v6e, 64 MiB v7x
    bytes_per_bag = ins_num * SEQ * EMB * 2              # bf16
    if block_bags is None:
        target_block = max(bytes_per_bag, vmem_cap // 10)   # ~12 MiB / ~6 MiB blocks
        bb = max(1, min(num_bags, target_block // bytes_per_bag))
        if num_bags >= 2:
            bb = min(bb, pl.cdiv(num_bags, 2))  # keep >=2 grid steps (megacore/pipeline)
    else:
        bb = max(1, min(int(block_bags), num_bags))
    num_blocks = pl.cdiv(num_bags, bb)
    pad_bags = num_blocks * bb - num_bags
    n_rows = bb * ins_num * SEQ
    vmem_limit = int(min(96 << 20, (vmem_cap * 3) // 4))

    # ---- input: NCL -> NLC, bf16, one flat (rows, EMB) slab per block ------
    # TODO(synk): this transpose+cast pre-pass reads 4B/writes 2B per element
    # (~3x the kernel's own HBM traffic); have the upstream producer emit
    # (N, SEQ, 768) bf16 directly (or cache the converted tensor) when possible.
    x_nlc = jnp.transpose(x, (0, 2, 1)).astype(jnp.bfloat16)   # (N, SEQ, EMB)
    x_bags = x_nlc.reshape(num_bags, ins_num * SEQ, EMB)
    if pad_bags:
        x_bags = jnp.pad(x_bags, ((0, pad_bags), (0, 0), (0, 0)))
    x_k = x_bags.reshape(num_blocks, n_rows, EMB)

    # ---- conv weights / bias / position mask -------------------------------
    b_np = np.zeros((1, fpad), np.float32)
    mask_np = np.zeros((SEQ, fpad), np.float32)
    if packed:
        w_np = np.zeros((EMB, fpad), np.float32)
        for i, h in enumerate(kernel_size):
            w_i = np.asarray(params["conv_w"][i], np.float32)   # (F_i, EMB, h)
            for k in range(h):
                lo = k * sum_f + offs[i]
                w_np[:, lo:lo + (offs[i + 1] - offs[i])] = w_i[:, :, k].T
            b_np[0, offs[i]:offs[i + 1]] = np.asarray(params["conv_b"][i], np.float32)
            mask_np[SEQ - h + 1:, offs[i]:offs[i + 1]] = NEG
    else:
        w_np = np.zeros((max_h, EMB, fpad), np.float32)
        for i, h in enumerate(kernel_size):
            w_i = np.asarray(params["conv_w"][i], np.float32)
            for k in range(h):
                w_np[k, :, offs[i]:offs[i + 1]] = w_i[:, :, k].T
            b_np[0, offs[i]:offs[i + 1]] = np.asarray(params["conv_b"][i], np.float32)
            mask_np[SEQ - h + 1:, offs[i]:offs[i + 1]] = NEG
    w_cat = jnp.asarray(w_np, jnp.bfloat16)
    b_cat = jnp.asarray(b_np)
    mask = jnp.asarray(mask_np)

    # ---- fc + collapsed 5-model ensemble (no kron, no M=1 matmul) ----------
    fcw_np = np.zeros((1, fpad), np.float32)
    fcw_np[0, :sum_f] = np.asarray(params["fc_w"], np.float32).reshape(-1)
    fcw = jnp.asarray(fcw_np)
    fcb = jnp.asarray(params["fc_b"], jnp.float32).reshape(1, 1)

    wsum = jnp.sum(params["mw"], axis=0).T.astype(jnp.float32)   # (ins_num, 2)
    bsum = jnp.sum(params["mb"], axis=0).astype(jnp.float32).reshape(1, 2)
    wsum_tiled = jnp.tile(wsum, (bb, 1))                         # (bb*ins, 2)

    # ---- pallas call --------------------------------------------------------
    kernel = make_berttcr_kernel(bb, ins_num, max_h, sum_f, fpad, n_models, packed)
    zmap2 = lambda b: (0, 0)
    zmap3 = lambda b: (0, 0, 0)
    w_spec = (pl.BlockSpec((EMB, fpad), zmap2) if packed
              else pl.BlockSpec((max_h, EMB, fpad), zmap3))
    in_specs = [
        pl.BlockSpec((1, n_rows, EMB), lambda b: (b, 0, 0)),      # x block
        w_spec,                                                   # conv weights
        pl.BlockSpec((1, fpad), zmap2),                           # conv bias
        pl.BlockSpec((SEQ, fpad), zmap2),                         # position mask
        pl.BlockSpec((1, fpad), zmap2),                           # fc weight row
        pl.BlockSpec((1, 1), zmap2),                              # fc bias
        pl.BlockSpec((bb * ins_num, 2), zmap2),                   # tiled ensemble W
        pl.BlockSpec((1, 2), zmap2),                              # ensemble bias
    ]
    out_specs = pl.BlockSpec((1, bb, 2), lambda b: (b, 0, 0))

    n_mm = 1 if packed else max_h
    flops = int(2 * num_blocks * n_rows * EMB * fpad * n_mm
                + 4 * num_blocks * n_rows * fpad)
    trans = int(num_blocks * (bb * ins_num * fpad + bb * 2))
    bytes_accessed = int(x_k.size * 2 + w_cat.size * 2
                         + (b_cat.size + mask.size + fcw.size + 1
                            + wsum_tiled.size + 2) * 4
                         + num_blocks * bb * 2 * 4)

    out = pl.pallas_call(
        kernel,
        grid=(num_blocks,),
        in_specs=in_specs,
        out_specs=out_specs,
        out_shape=jax.ShapeDtypeStruct((num_blocks, bb, 2), jnp.float32),
        compiler_params=pltpu.CompilerParams(
            dimension_semantics=("parallel",),
            vmem_limit_bytes=vmem_limit),
        cost_estimate=pl.CostEstimate(flops=flops, transcendentals=trans,
                                      bytes_accessed=bytes_accessed),
    )(x_k, w_cat, b_cat, mask, fcw, fcb, wsum_tiled, bsum)

    return out.reshape(num_blocks * bb, 2)[:num_bags]


def berttcr_reference(x, params, filter_num, kernel_size, ins_num):
    """Pure-JAX f32 reference mirroring the PyTorch forward (eval mode)."""
    outs = []
    for i in range(len(kernel_size)):
        w = params["conv_w"][i]                          # (F, EMB, h)
        b = params["conv_b"][i]                          # (F,)
        y = lax.conv_general_dilated(
            x, w, window_strides=(1,), padding="VALID",
            dimension_numbers=("NCH", "OIH", "NCH"))
        y = jax.nn.sigmoid(y + b[None, :, None])
        outs.append(jnp.max(y, axis=2))                  # AdaptiveMaxPool1d(1)
    feat = jnp.concatenate(outs, axis=1)                 # (N, sum_f)
    inst = feat @ params["fc_w"].T + params["fc_b"]      # (N, 1)
    inst = inst.reshape(-1, ins_num)                     # (B, ins_num)
    n_models = params["mw"].shape[0]
    pred = jnp.zeros((inst.shape[0], 2), jnp.float32)
    for m in range(n_models):
        pred = pred + inst @ params["mw"][m].T + params["mb"][m]
    return jax.nn.sigmoid(pred / n_models)


if __name__ == "__main__":
    # small, module-consistent config
    filter_num = [3, 2, 3]        # sum = 8
    kernel_size = [2, 3, 4]
    ins_num = 8
    num_bags = 4
    N = num_bags * ins_num

    key = jax.random.PRNGKey(0)
    keys = jax.random.split(key, 4 + 2 * len(filter_num))

    x = jax.random.normal(keys[0], (N, EMB, SEQ), dtype=jnp.float32)

    conv_w, conv_b = [], []
    for i, h in enumerate(kernel_size):
        conv_w.append(0.05 * jax.random.normal(
            keys[1 + 2 * i], (filter_num[i], EMB, h), dtype=jnp.float32))
        conv_b.append(0.05 * jax.random.normal(
            keys[2 + 2 * i], (filter_num[i],), dtype=jnp.float32))

    k_fc, k_m = jax.random.split(keys[-1], 2)
    params = {
        "conv_w": conv_w,
        "conv_b": conv_b,
        "fc_w": 0.1 * jax.random.normal(k_fc, (1, sum(filter_num)), dtype=jnp.float32),
        "fc_b": 0.1 * jax.random.normal(jax.random.fold_in(k_fc, 1), (1,), dtype=jnp.float32),
        "mw": 0.1 * jax.random.normal(k_m, (5, 2, ins_num), dtype=jnp.float32),
        "mb": 0.1 * jax.random.normal(jax.random.fold_in(k_m, 1), (5, 2), dtype=jnp.float32),
    }

    out = berttcr_forward(x, params, filter_num=filter_num,
                          kernel_size=kernel_size, ins_num=ins_num)
    out = jax.block_until_ready(out)

    ref = berttcr_reference(x, params, filter_num, kernel_size, ins_num)
    assert out.shape == (num_bags, 2)
    # bf16 matmul inputs (f32 accumulation) -> loosened tolerance vs f32 ref.
    np.testing.assert_allclose(np.asarray(out), np.asarray(ref),
                               rtol=1e-2, atol=1e-2)
    print("KERNEL_OK")
</pallas_src>

<mosaic_0001>
module attributes {stable_mosaic.version = 11 : i64} {
  func.func @kernel(%arg0: i32, %arg1: memref<1x384x768xbf16, #tpu.memory_space<vmem>>, %arg2: memref<768x128xbf16, #tpu.memory_space<vmem>>, %arg3: memref<1x128xf32, #tpu.memory_space<vmem>>, %arg4: memref<24x128xf32, #tpu.memory_space<vmem>>, %arg5: memref<1x128xf32, #tpu.memory_space<vmem>>, %arg6: memref<1x1xf32, #tpu.memory_space<vmem>>, %arg7: memref<16x2xf32, #tpu.memory_space<vmem>>, %arg8: memref<1x2xf32, #tpu.memory_space<vmem>>, %arg9: memref<1x2x2xf32, #tpu.memory_space<vmem>>) attributes {dimension_semantics = [#tpu.dimension_semantics<parallel>], iteration_bounds = array<i64: 2>, scalar_prefetch = 0 : i64, scratch_operands = 0 : i64, tpu.core_type = #tpu.core_type<tc>, window_params = [{transform_indices = @transform_0, window_bounds = array<i64: 1, 384, 768>}, {pipeline_mode = #tpu.pipeline_mode<synchronous>, transform_indices = @transform_1, window_bounds = array<i64: 768, 128>}, {pipeline_mode = #tpu.pipeline_mode<synchronous>, transform_indices = @transform_2, window_bounds = array<i64: 1, 128>}, {pipeline_mode = #tpu.pipeline_mode<synchronous>, transform_indices = @transform_3, window_bounds = array<i64: 24, 128>}, {pipeline_mode = #tpu.pipeline_mode<synchronous>, transform_indices = @transform_4, window_bounds = array<i64: 1, 128>}, {pipeline_mode = #tpu.pipeline_mode<synchronous>, transform_indices = @transform_5, window_bounds = array<i64: 1, 1>}, {pipeline_mode = #tpu.pipeline_mode<synchronous>, transform_indices = @transform_6, window_bounds = array<i64: 16, 2>}, {pipeline_mode = #tpu.pipeline_mode<synchronous>, transform_indices = @transform_7, window_bounds = array<i64: 1, 2>}, {transform_indices = @transform_8, window_bounds = array<i64: 1, 2, 2>}]} {
    %c0 = arith.constant 0 : index
    %c0_0 = arith.constant 0 : index
    %c0_1 = arith.constant 0 : index
    %0 = vector.load %arg1[%c0, %c0_0, %c0_1] : memref<1x384x768xbf16, #tpu.memory_space<vmem>>, vector<1x384x768xbf16>
    %1 = vector.shape_cast %0 : vector<1x384x768xbf16> to vector<384x768xbf16>
    %c0_2 = arith.constant 0 : index
    %c0_3 = arith.constant 0 : index
    %2 = vector.load %arg2[%c0_2, %c0_3] : memref<768x128xbf16, #tpu.memory_space<vmem>>, vector<768x128xbf16>
    %cst = arith.constant dense<0.000000e+00> : vector<384x128xf32>
    %3 = tpu.matmul %1, %2, %cst {dimension_numbers = #tpu.dot_dimension_numbers<[1], [0], [0], [1], [0, 0, 1, 1], [], []>} : vector<384x768xbf16>, vector<768x128xbf16>, vector<384x128xf32> -> vector<384x128xf32>
    %c383_i32 = arith.constant 383 : i32
    %4 = tpu.dynamic_rotate %3 by %c383_i32 dim 0 : vector<384x128xf32>, i32 -> vector<384x128xf32>
    %c120_i32 = arith.constant 120 : i32
    %5 = tpu.dynamic_rotate %4 by %c120_i32 dim 1 : vector<384x128xf32>, i32 -> vector<384x128xf32>
    %6 = arith.addf %3, %5 : vector<384x128xf32>
    %c382_i32 = arith.constant 382 : i32
    %7 = tpu.dynamic_rotate %3 by %c382_i32 dim 0 : vector<384x128xf32>, i32 -> vector<384x128xf32>
    %c112_i32 = arith.constant 112 : i32
    %8 = tpu.dynamic_rotate %7 by %c112_i32 dim 1 : vector<384x128xf32>, i32 -> vector<384x128xf32>
    %9 = arith.addf %6, %8 : vector<384x128xf32>
    %c381_i32 = arith.constant 381 : i32
    %10 = tpu.dynamic_rotate %3 by %c381_i32 dim 0 : vector<384x128xf32>, i32 -> vector<384x128xf32>
    %c104_i32 = arith.constant 104 : i32
    %11 = tpu.dynamic_rotate %10 by %c104_i32 dim 1 : vector<384x128xf32>, i32 -> vector<384x128xf32>
    %12 = arith.addf %9, %11 : vector<384x128xf32>
    %13 = vector.shape_cast %12 : vector<384x128xf32> to vector<16x24x128xf32>
    %c0_4 = arith.constant 0 : index
    %c0_5 = arith.constant 0 : index
    %14 = vector.load %arg4[%c0_4, %c0_5] : memref<24x128xf32, #tpu.memory_space<vmem>>, vector<24x128xf32>
    %15 = vector.shape_cast %14 : vector<24x128xf32> to vector<1x24x128xf32>
    %16 = vector.broadcast %15 : vector<1x24x128xf32> to vector<16x24x128xf32>
    %17 = arith.addf %13, %16 : vector<16x24x128xf32>
    %cst_6 = arith.constant dense<0xFF800000> : vector<16x128xf32>
    %18 = vector.multi_reduction <maximumf>, %17, %cst_6 [1] : vector<16x24x128xf32> to vector<16x128xf32>
    %c0_7 = arith.constant 0 : index
    %c0_8 = arith.constant 0 : index
    %19 = vector.load %arg3[%c0_7, %c0_8] : memref<1x128xf32, #tpu.memory_space<vmem>>, vector<1x128xf32>
    %20 = vector.broadcast %19 : vector<1x128xf32> to vector<16x128xf32>
    %21 = arith.addf %18, %20 : vector<16x128xf32>
    %22 = arith.negf %21 : vector<16x128xf32>
    %23 = math.exp %22 : vector<16x128xf32>
    %cst_9 = arith.constant 1.000000e+00 : f32
    %24 = vector.broadcast %cst_9 : f32 to vector<16x128xf32>
    %25 = arith.addf %24, %23 : vector<16x128xf32>
    %26 = arith.divf %24, %25 : vector<16x128xf32>
    %c0_10 = arith.constant 0 : index
    %c0_11 = arith.constant 0 : index
    %27 = vector.load %arg5[%c0_10, %c0_11] : memref<1x128xf32, #tpu.memory_space<vmem>>, vector<1x128xf32>
    %28 = vector.broadcast %27 : vector<1x128xf32> to vector<16x128xf32>
    %29 = arith.mulf %26, %28 : vector<16x128xf32>
    %cst_12 = arith.constant dense<0.000000e+00> : vector<16xf32>
    %30 = vector.multi_reduction <add>, %29, %cst_12 [1] : vector<16x128xf32> to vector<16xf32>
    %31 = vector.shape_cast %30 : vector<16xf32> to vector<16x1xf32>
    %c0_13 = arith.constant 0 : index
    %c0_14 = arith.constant 0 : index
    %32 = vector.load %arg6[%c0_13, %c0_14] : memref<1x1xf32, #tpu.memory_space<vmem>>, vector<1x1xf32>
    %33 = vector.broadcast %32 : vector<1x1xf32> to vector<16x1xf32>
    %34 = arith.addf %31, %33 : vector<16x1xf32>
    %c0_15 = arith.constant 0 : index
    %c0_16 = arith.constant 0 : index
    %35 = vector.load %arg7[%c0_15, %c0_16] : memref<16x2xf32, #tpu.memory_space<vmem>>, vector<16x2xf32>
    %36 = vector.broadcast %34 : vector<16x1xf32> to vector<16x2xf32>
    %37 = arith.mulf %36, %35 : vector<16x2xf32>
    %38 = vector.shape_cast %37 : vector<16x2xf32> to vector<2x8x2xf32>
    %cst_17 = arith.constant dense<0.000000e+00> : vector<2x2xf32>
    %39 = vector.multi_reduction <add>, %38, %cst_17 [1] : vector<2x8x2xf32> to vector<2x2xf32>
    %c0_18 = arith.constant 0 : index
    %c0_19 = arith.constant 0 : index
    %40 = vector.load %arg8[%c0_18, %c0_19] : memref<1x2xf32, #tpu.memory_space<vmem>>, vector<1x2xf32>
    %41 = vector.broadcast %40 : vector<1x2xf32> to vector<2x2xf32>
    %42 = arith.addf %39, %41 : vector<2x2xf32>
    %cst_20 = arith.constant 2.000000e-01 : f32
    %43 = vector.broadcast %cst_20 : f32 to vector<2x2xf32>
    %44 = arith.mulf %42, %43 : vector<2x2xf32>
    %45 = arith.negf %44 : vector<2x2xf32>
    %46 = math.exp %45 : vector<2x2xf32>
    %cst_21 = arith.constant 1.000000e+00 : f32
    %47 = vector.broadcast %cst_21 : f32 to vector<2x2xf32>
    %48 = arith.addf %47, %46 : vector<2x2xf32>
    %49 = arith.divf %47, %48 : vector<2x2xf32>
    %c0_22 = arith.constant 0 : index
    %c0_23 = arith.constant 0 : index
    %c0_24 = arith.constant 0 : index
    %50 = vector.load %arg9[%c0_22, %c0_23, %c0_24] : memref<1x2x2xf32, #tpu.memory_space<vmem>>, vector<1x2x2xf32>
    %51 = vector.shape_cast %50 : vector<1x2x2xf32> to vector<2x2xf32>
    %52 = vector.shape_cast %49 : vector<2x2xf32> to vector<1x2x2xf32>
    tpu.vector_store %arg9[%c0_22, %c0_23, %c0_24], %52 {strides = array<i32>} : memref<1x2x2xf32, #tpu.memory_space<vmem>>, vector<1x2x2xf32>,
    return
  }
  func.func @transform_0(%arg0: i32) -> (i32, i32, i32) {
    %c0_i32 = arith.constant 0 : i32
    %c0_i32_0 = arith.constant 0 : i32
    %c0_i32_1 = arith.constant 0 : i32
    return %arg0, %c0_i32, %c0_i32_0 : i32, i32, i32
  }
  func.func @transform_1(%arg0: i32) -> (i32, i32) {
    %c0_i32 = arith.constant 0 : i32
    %c0_i32_0 = arith.constant 0 : i32
    %c0_i32_1 = arith.constant 0 : i32
    return %c0_i32, %c0_i32_0 : i32, i32
  }
  func.func @transform_2(%arg0: i32) -> (i32, i32) {
    %c0_i32 = arith.constant 0 : i32
    %c0_i32_0 = arith.constant 0 : i32
    %c0_i32_1 = arith.constant 0 : i32
    return %c0_i32, %c0_i32_0 : i32, i32
  }
  func.func @transform_3(%arg0: i32) -> (i32, i32) {
    %c0_i32 = arith.constant 0 : i32
    %c0_i32_0 = arith.constant 0 : i32
    %c0_i32_1 = arith.constant 0 : i32
    return %c0_i32, %c0_i32_0 : i32, i32
  }
  func.func @transform_4(%arg0: i32) -> (i32, i32) {
    %c0_i32 = arith.constant 0 : i32
    %c0_i32_0 = arith.constant 0 : i32
    %c0_i32_1 = arith.constant 0 : i32
    return %c0_i32, %c0_i32_0 : i32, i32
  }
  func.func @transform_5(%arg0: i32) -> (i32, i32) {
    %c0_i32 = arith.constant 0 : i32
    %c0_i32_0 = arith.constant 0 : i32
    %c0_i32_1 = arith.constant 0 : i32
    return %c0_i32, %c0_i32_0 : i32, i32
  }
  func.func @transform_6(%arg0: i32) -> (i32, i32) {
    %c0_i32 = arith.constant 0 : i32
    %c0_i32_0 = arith.constant 0 : i32
    %c0_i32_1 = arith.constant 0 : i32
    return %c0_i32, %c0_i32_0 : i32, i32
  }
  func.func @transform_7(%arg0: i32) -> (i32, i32) {
    %c0_i32 = arith.constant 0 : i32
    %c0_i32_0 = arith.constant 0 : i32
    %c0_i32_1 = arith.constant 0 : i32
    return %c0_i32, %c0_i32_0 : i32, i32
  }
  func.func @transform_8(%arg0: i32) -> (i32, i32, i32) {
    %c0_i32 = arith.constant 0 : i32
    %c0_i32_0 = arith.constant 0 : i32
    %c0_i32_1 = arith.constant 0 : i32
    return %arg0, %c0_i32, %c0_i32_0 : i32, i32, i32
  }
}

</mosaic_0001>

<llo_original>
// kernel: tpu_custom_call.1
$region0: #{tpu_custom_call.1}
  #allocation0 [shape = 'u32[]', space=smem, size = 0x4, offset = 0x4, fixed_abs, tag = 'smem constant byte address 0x4 - core index']
  #allocation1 [shape = 'u32[144,128]{1,0:T(1,128)}', space=vmem, size = 0x12000, scoped, tag = 'internal scratch']
  #allocation2 [shape = 'f32[1,1]{1,0:T(1,128)S(1)}', space=vmem, size = 0x200, scoped, tag = 'scoped memory for tpu_custom_call.1']
  %s0 = inlined_call_operand.hbm [shape: bf16[2,384,768], index: 0, kind: input, shape index: {}]
  %s1 = inlined_call_operand.hbm [shape: bf16[768,128], index: 1, kind: input, shape index: {}]
  %s2 = inlined_call_operand.hbm [shape: f32[1,128], index: 2, kind: input, shape index: {}]
  %s3 = inlined_call_operand.hbm [shape: f32[24,128], index: 3, kind: input, shape index: {}]
  %s4 = inlined_call_operand.hbm [shape: f32[1,128], index: 4, kind: input, shape index: {}]
  %s5 = inlined_call_operand.<no memory space> [shape: f32[1,1], index: 5, kind: input, shape index: {}]
  %s6 = inlined_call_operand.vmem [shape: f32[16,2], index: 6, kind: input, shape index: {}]
  %s7 = inlined_call_operand.hbm [shape: f32[1,2], index: 7, kind: input, shape index: {}]
  %s8 = inlined_call_operand.hbm [shape: f32[2,2,2], index: 8, kind: output, shape index: {}]
  %s9 = sld [smem:[#allocation0]]
  $region89: #{tpu_custom_call.1} parent=0
    _
  %s11 = ssub.s32 1, %s9
  %s12 = scalar_select 0, %s11, %s9
  %v13 = vstv %s5
  %14 = vst [vmem:[#allocation2] sm:$0x1] %v13
  $region1: #{tpu_custom_call.1} parent=0
    #allocation3 [shape = 'u8[1179648]{0}', space=vmem, size = 0x120000, scoped, tag = 'input window, operand 0']
    #allocation4 [shape = 's32[2]{0}', space=sflag, size = 0x8, scoped, tag = 'scoped memory for tpu_custom_call.1']
    #allocation5 [shape = 's32[2]{0}', space=sflag, size = 0x8, scoped, tag = 'scoped memory for tpu_custom_call.1']
    #allocation6 [shape = 'u8[196608]{0}', space=vmem, size = 0x30000, scoped, tag = 'input window, operand 1, single buffered']
    #allocation7 [shape = 's32[1]{0}', space=sflag, size = 0x4, scoped, tag = 'scoped memory for tpu_custom_call.1']
    #allocation8 [shape = 'u8[512]{0}', space=vmem, size = 0x400, scoped, tag = 'input window, operand 2, single buffered']
    #allocation9 [shape = 'u8[12288]{0}', space=vmem, size = 0x3000, scoped, tag = 'input window, operand 3, single buffered']
    #allocation10 [shape = 's32[1]{0}', space=sflag, size = 0x4, scoped, tag = 'scoped memory for tpu_custom_call.1']
    #allocation11 [shape = 'u8[512]{0}', space=vmem, size = 0x400, scoped, tag = 'input window, operand 4, single buffered']
    #allocation12 [shape = 'u8[512]{0}', space=vmem, size = 0x400, scoped, tag = 'input window, operand 7, single buffered']
    #allocation13 [shape = 's32[1]{0}', space=sflag, size = 0x4, scoped, tag = 'scoped memory for tpu_custom_call.1']
    #allocation14 [shape = 'u8[2048]{0}', space=vmem, size = 0x800, scoped, tag = 'output window, operand 0']
    %15 = vsyncpa [#allocation4], 0
    %s16 = scalar_lea.sflag [#allocation4], 1
    %17 = vsyncpa %s16, 0
    %18 = vsyncpa [#allocation7], 0
    %19 = vsyncpa [#allocation10], 0
    %20 = vsyncpa [#allocation13], 0
    %21 = vsyncpa [#allocation5], 0
    %s22 = scalar_lea.sflag [#allocation5], 1
    %23 = vsyncpa %s22, 0
    loop: start=0, step=1, limit=4
    $region2: #{tpu_custom_call.1} parent=1 // loop_pre_header
      _
    $region3: #{tpu_custom_call.1} parent=1 // loop_header
      %s25 = sphi 0, %s29
      %p26 = scmp.ge.s32.totalorder %s25, 4
      %s35 = sphi 0, %s37
      %s38 = sphi 0, %s35
      %s39 = sphi 0, %s38
      %s55 = sphi 0, %s39
      %s59 = sphi 0, %s59
      %s61 = sphi 0, %s59
      %s62 = sphi 0, %s61
      %s76 = sphi 0, %s62
      %s80 = sphi 0, %s80
      %s82 = sphi 0, %s80
      %s83 = sphi 0, %s82
      %s97 = sphi 0, %s83
      %s101 = sphi 0, %s101
      %s103 = sphi 0, %s101
      %s104 = sphi 0, %s103
      %s118 = sphi 0, %s104
      %s122 = sphi 0, %s122
      %s124 = sphi 0, %s122
      %s125 = sphi 0, %s124
      %s139 = sphi 0, %s125
      %s143 = sphi 0, %s143
      %s145 = sphi 0, %s143
      %s146 = sphi 0, %s145
      %s160 = sphi 0, %s146
      %s164 = sphi 0, %s164
      %s166 = sphi 0, %s164
      %s167 = sphi 0, %s166
      %s181 = sphi 0, %s167
      %s185 = sphi 0, %s185
      %s187 = sphi 0, %s185
      %s188 = sphi 0, %s187
      %s202 = sphi 0, %s188
      %s208 = sphi 0, %s210
      %s211 = sphi 0, %s208
      %s212 = sphi 0, %s211
      %s228 = sphi 0, %s212
    $region4: #{tpu_custom_call.1} parent=1 // loop_header_branch
      %28 = sbr.rel (%p26) target = $region8
    $region5: #{tpu_custom_call.1} parent=1 // loop_body
      %s30 = ssub.s32 %s25, 1
      %s31 = ssub.s32 %s25, 2
      %s32 = sadd.s32 %s25, 1
      %s33 = ssub.s32 %s25, %s32
      %p34 = scmp.eq.s32.totalorder %s33, 0
      %s36 = sadd.s32 %s35, 1
      %s37 = scalar_select %p34, %s35, %s36
      %p40 = pneg %p34
      %p41 = scmp.eq.s32.totalorder %s25, 1
      %p42 = por %p40, %p41
      %p43 = scmp.ne.s32.totalorder %s35, %s38
      %p44 = scmp.eq.s32.totalorder %s25, 0
      %p45 = por %p43, %p44
      %p46 = scmp.ne.s32.totalorder %s35, %s38
      %p47 = scmp.eq.s32.totalorder %s30, 1
      %p48 = por %p46, %p47
      %p49 = scmp.ne.s32.totalorder %s38, %s39
      %p50 = scmp.eq.s32.totalorder %s30, 0
      %p51 = por %p49, %p50
      %p52 = scmp.ne.s32.totalorder %s38, %s39
      %p53 = scmp.eq.s32.totalorder %s31, 1
      %p54 = por %p52, %p53
      %p56 = scmp.ne.s32.totalorder %s39, %s55
      %p57 = scmp.eq.s32.totalorder %s31, 0
      %p58 = por %p56, %p57
      %s60 = sadd.s32 %s59, 1
      %p63 = scmp.eq.s32.totalorder %s25, 1
      %p64 = scmp.ne.s32.totalorder %s59, %s61
      %p65 = scmp.eq.s32.totalorder %s25, 0
      %p66 = por %p64, %p65
      %p67 = scmp.ne.s32.totalorder %s59, %s61
      %p68 = scmp.eq.s32.totalorder %s30, 1
      %p69 = por %p67, %p68
      %p70 = scmp.ne.s32.totalorder %s61, %s62
      %p71 = scmp.eq.s32.totalorder %s30, 0
      %p72 = por %p70, %p71
      %p73 = scmp.ne.s32.totalorder %s61, %s62
      %p74 = scmp.eq.s32.totalorder %s31, 1
      %p75 = por %p73, %p74
      %p77 = scmp.ne.s32.totalorder %s62, %s76
      %p78 = scmp.eq.s32.totalorder %s31, 0
      %p79 = por %p77, %p78
      %s81 = sadd.s32 %s80, 1
      %p84 = scmp.eq.s32.totalorder %s25, 1
      %p85 = scmp.ne.s32.totalorder %s80, %s82
      %p86 = scmp.eq.s32.totalorder %s25, 0
      %p87 = por %p85, %p86
      %p88 = scmp.ne.s32.totalorder %s80, %s82
      %p89 = scmp.eq.s32.totalorder %s30, 1
      %p90 = por %p88, %p89
      %p91 = scmp.ne.s32.totalorder %s82, %s83
      %p92 = scmp.eq.s32.totalorder %s30, 0
      %p93 = por %p91, %p92
      %p94 = scmp.ne.s32.totalorder %s82, %s83
      %p95 = scmp.eq.s32.totalorder %s31, 1
      %p96 = por %p94, %p95
      %p98 = scmp.ne.s32.totalorder %s83, %s97
      %p99 = scmp.eq.s32.totalorder %s31, 0
      %p100 = por %p98, %p99
      %s102 = sadd.s32 %s101, 1
      %p105 = scmp.eq.s32.totalorder %s25, 1
      %p106 = scmp.ne.s32.totalorder %s101, %s103
      %p107 = scmp.eq.s32.totalorder %s25, 0
      %p108 = por %p106, %p107
      %p109 = scmp.ne.s32.totalorder %s101, %s103
      %p110 = scmp.eq.s32.totalorder %s30, 1
      %p111 = por %p109, %p110
      %p112 = scmp.ne.s32.totalorder %s103, %s104
      %p113 = scmp.eq.s32.totalorder %s30, 0
      %p114 = por %p112, %p113
      %p115 = scmp.ne.s32.totalorder %s103, %s104
      %p116 = scmp.eq.s32.totalorder %s31, 1
      %p117 = por %p115, %p116
      %p119 = scmp.ne.s32.totalorder %s104, %s118
      %p120 = scmp.eq.s32.totalorder %s31, 0
      %p121 = por %p119, %p120
      %s123 = sadd.s32 %s122, 1
      %p126 = scmp.eq.s32.totalorder %s25, 1
      %p127 = scmp.ne.s32.totalorder %s122, %s124
      %p128 = scmp.eq.s32.totalorder %s25, 0
      %p129 = por %p127, %p128
      %p130 = scmp.ne.s32.totalorder %s122, %s124
      %p131 = scmp.eq.s32.totalorder %s30, 1
      %p132 = por %p130, %p131
      %p133 = scmp.ne.s32.totalorder %s124, %s125
      %p134 = scmp.eq.s32.totalorder %s30, 0
      %p135 = por %p133, %p134
      %p136 = scmp.ne.s32.totalorder %s124, %s125
      %p137 = scmp.eq.s32.totalorder %s31, 1
      %p138 = por %p136, %p137
      %p140 = scmp.ne.s32.totalorder %s125, %s139
      %p141 = scmp.eq.s32.totalorder %s31, 0
      %p142 = por %p140, %p141
      %s144 = sadd.s32 %s143, 1
      %p147 = scmp.eq.s32.totalorder %s25, 1
      %p148 = scmp.ne.s32.totalorder %s143, %s145
      %p149 = scmp.eq.s32.totalorder %s25, 0
      %p150 = por %p148, %p149
      %p151 = scmp.ne.s32.totalorder %s143, %s145
      %p152 = scmp.eq.s32.totalorder %s30, 1
      %p153 = por %p151, %p152
      %p154 = scmp.ne.s32.totalorder %s145, %s146
      %p155 = scmp.eq.s32.totalorder %s30, 0
      %p156 = por %p154, %p155
      %p157 = scmp.ne.s32.totalorder %s145, %s146
      %p158 = scmp.eq.s32.totalorder %s31, 1
      %p159 = por %p157, %p158
      %p161 = scmp.ne.s32.totalorder %s146, %s160
      %p162 = scmp.eq.s32.totalorder %s31, 0
      %p163 = por %p161, %p162
      %s165 = sadd.s32 %s164, 1
      %p168 = scmp.eq.s32.totalorder %s25, 1
      %p169 = scmp.ne.s32.totalorder %s164, %s166
      %p170 = scmp.eq.s32.totalorder %s25, 0
      %p171 = por %p169, %p170
      %p172 = scmp.ne.s32.totalorder %s164, %s166
      %p173 = scmp.eq.s32.totalorder %s30, 1
      %p174 = por %p172, %p173
      %p175 = scmp.ne.s32.totalorder %s166, %s167
      %p176 = scmp.eq.s32.totalorder %s30, 0
      %p177 = por %p175, %p176
      %p178 = scmp.ne.s32.totalorder %s166, %s167
      %p179 = scmp.eq.s32.totalorder %s31, 1
      %p180 = por %p178, %p179
      %p182 = scmp.ne.s32.totalorder %s167, %s181
      %p183 = scmp.eq.s32.totalorder %s31, 0
      %p184 = por %p182, %p183
      %s186 = sadd.s32 %s185, 1
      %p189 = scmp.eq.s32.totalorder %s25, 1
      %p190 = scmp.ne.s32.totalorder %s185, %s187
      %p191 = scmp.eq.s32.totalorder %s25, 0
      %p192 = por %p190, %p191
      %p193 = scmp.ne.s32.totalorder %s185, %s187
      %p194 = scmp.eq.s32.totalorder %s30, 1
      %p195 = por %p193, %p194
      %p196 = scmp.ne.s32.totalorder %s187, %s188
      %p197 = scmp.eq.s32.totalorder %s30, 0
      %p198 = por %p196, %p197
      %p199 = scmp.ne.s32.totalorder %s187, %s188
      %p200 = scmp.eq.s32.totalorder %s31, 1
      %p201 = por %p199, %p200
      %p203 = scmp.ne.s32.totalorder %s188, %s202
      %p204 = scmp.eq.s32.totalorder %s31, 0
      %p205 = por %p203, %p204
      %s206 = ssub.s32 %s25, %s32
      %p207 = scmp.eq.s32.totalorder %s206, 0
      %s209 = sadd.s32 %s208, 1
      %s210 = scalar_select %p207, %s208, %s209
      %p213 = pneg %p207
      %p214 = scmp.eq.s32.totalorder %s25, 1
      %p215 = por %p213, %p214
      %p216 = scmp.ne.s32.totalorder %s208, %s211
      %p217 = scmp.eq.s32.totalorder %s25, 0
      %p218 = por %p216, %p217
      %p219 = scmp.ne.s32.totalorder %s208, %s211
      %p220 = scmp.eq.s32.totalorder %s30, 1
      %p221 = por %p219, %p220
      %p222 = scmp.ne.s32.totalorder %s211, %s212
      %p223 = scmp.eq.s32.totalorder %s30, 0
      %p224 = por %p222, %p223
      %p225 = scmp.ne.s32.totalorder %s211, %s212
      %p226 = scmp.eq.s32.totalorder %s31, 1
      %p227 = por %p225, %p226
      %p229 = scmp.ne.s32.totalorder %s212, %s228
      %p230 = scmp.eq.s32.totalorder %s31, 0
      %p231 = por %p229, %p230
      %p232 = scmp.le.s32.totalorder 1, %s25
      %p233 = scmp.lt.s32.totalorder %s25, 3
      %p234 = pnand %p232, %p233
      %p235 = pneg %p234
      // Predicated region
      $region9: #{tpu_custom_call.1} parent=5 // pred_check
        _
      $region10: #{tpu_custom_call.1} parent=5 // pred_check_branch
        %237 = sbr.rel (%p234) target = $region12
      $region11: #{tpu_custom_call.1} parent=5 // pred_region
        %s238 = ssub.s32 %s25, 1
        // Predicated region
        $region13: #{tpu_custom_call.1} parent=11 // pred_check
          %p239 = pneg %p72
        $region14: #{tpu_custom_call.1} parent=11 // pred_check_branch
          %241 = sbr.rel (%p239) target = $region16
        $region15: #{tpu_custom_call.1} parent=11 // pred_region
          %s243 = ssub.s32 6144, 6144
          %244 = vsyncadd [#allocation7], %s243
          %s245 = sshll.u32 [#allocation6], 4
          %s246 = int_to_ptr.vmem [resolvable:$true] %s245
          %251 = dma.hbm_to_vmem [thread:$0]  %s1, 6144, %s246, [#allocation7], 64, 64, 4
        $region16: #{tpu_custom_call.1} parent=11 // pred_fallthru
          _
        // Predicated region
        $region17: #{tpu_custom_call.1} parent=11 // pred_check
          %p252 = pneg %p93
        $region18: #{tpu_custom_call.1} parent=11 // pred_check_branch
          %254 = sbr.rel (%p252) target = $region20
        $region19: #{tpu_custom_call.1} parent=11 // pred_region
          %s256 = ssub.s32 16, 16
          %257 = vsyncadd [#allocation7], %s256
          %s259 = sshll.u32 [#allocation8], 4
          %s260 = int_to_ptr.vmem [resolvable:$true] %s259
          %262 = dma.hbm_to_vmem [thread:$0]  %s2, 16, %s260, [#allocation7]
        $region20: #{tpu_custom_call.1} parent=11 // pred_fallthru
          _
        // Predicated region
        $region21: #{tpu_custom_call.1} parent=11 // pred_check
          %p263 = pneg %p114
        $region22: #{tpu_custom_call.1} parent=11 // pred_check_branch
          %265 = sbr.rel (%p263) target = $region24
        $region23: #{tpu_custom_call.1} parent=11 // pred_region
          %s267 = ssub.s32 384, 384
          %268 = vsyncadd [#allocation10], %s267
          %s269 = sshll.u32 [#allocation9], 4
          %s270 = int_to_ptr.vmem [resolvable:$true] %s269
          %275 = dma.hbm_to_vmem [thread:$0]  %s3, 384, %s270, [#allocation10], 128, 128, 8
        $region24: #{tpu_custom_call.1} parent=11 // pred_fallthru
          _
        // Predicated region
        $region25: #{tpu_custom_call.1} parent=11 // pred_check
          %p276 = pneg %p135
        $region26: #{tpu_custom_call.1} parent=11 // pred_check_branch
          %278 = sbr.rel (%p276) target = $region28
        $region27: #{tpu_custom_call.1} parent=11 // pred_region
          %s280 = ssub.s32 16, 16
          %281 = vsyncadd [#allocation10], %s280
          %s283 = sshll.u32 [#allocation11], 4
          %s284 = int_to_ptr.vmem [resolvable:$true] %s283
          %286 = dma.hbm_to_vmem [thread:$0]  %s4, 16, %s284, [#allocation10]
        $region28: #{tpu_custom_call.1} parent=11 // pred_fallthru
          _
        // Predicated region
        $region29: #{tpu_custom_call.1} parent=11 // pred_check
          %p287 = pneg %p156
        $region30: #{tpu_custom_call.1} parent=11 // pred_check_branch
          %289 = sbr.rel (%p287) target = $region32
        $region31: #{tpu_custom_call.1} parent=11 // pred_region
          _
        $region32: #{tpu_custom_call.1} parent=11 // pred_fallthru
          _
        // Predicated region
        $region33: #{tpu_custom_call.1} parent=11 // pred_check
          %p290 = pneg %p177
        $region34: #{tpu_custom_call.1} parent=11 // pred_check_branch
          %292 = sbr.rel (%p290) target = $region36
        $region35: #{tpu_custom_call.1} parent=11 // pred_region
          _
        $region36: #{tpu_custom_call.1} parent=11 // pred_fallthru
          _
        // Predicated region
        $region37: #{tpu_custom_call.1} parent=11 // pred_check
          %p293 = pneg %p198
        $region38: #{tpu_custom_call.1} parent=11 // pred_check_branch
          %295 = sbr.rel (%p293) target = $region40
        $region39: #{tpu_custom_call.1} parent=11 // pred_region
          %s297 = ssub.s32 16, 16
          %298 = vsyncadd [#allocation13], %s297
          %s300 = sshll.u32 [#allocation12], 4
          %s301 = int_to_ptr.vmem [resolvable:$true] %s300
          %303 = dma.hbm_to_vmem [thread:$0]  %s7, 16, %s301, [#allocation13]
        $region40: #{tpu_custom_call.1} parent=11 // pred_fallthru
          _
      $region12: #{tpu_custom_call.1} parent=5 // pred_fallthru
        _
      %p304 = scmp.lt.s32.totalorder %s25, 2
      // Predicated region
      $region41: #{tpu_custom_call.1} parent=5 // pred_check
        %p305 = pneg %p304
      $region42: #{tpu_custom_call.1} parent=5 // pred_check_branch
        %307 = sbr.rel (%p305) target = $region44
      $region43: #{tpu_custom_call.1} parent=5 // pred_region
        // Predicated region
        $region45: #{tpu_custom_call.1} parent=43 // pred_check
          %p308 = pneg %p45
        $region46: #{tpu_custom_call.1} parent=43 // pred_check_branch
          %310 = sbr.rel (%p308) target = $region48
        $region47: #{tpu_custom_call.1} parent=43 // pred_region
          %s311 = sand.u32 %s35, 1
          %s312 = scalar_lea.sflag [#allocation4], %s311
          %s313 = sand.u32 %s35, 1
          %s314 = smul.addr %s313, 1152
          %s315 = scalar_lea.vmem [#allocation3], %s314
          %s317 = ssub.s32 18432, 18432
          %318 = vsyncadd %s312, %s317
          %s319 = smul.addr %s25, 288
          %s320 = smul.addr %s319, 64
          %s321 = scalar_lea.hbm %s0, %s320
          %s322 = sshll.u32 %s315, 4
          %s323 = int_to_ptr.vmem [resolvable:$true] %s322
          %328 = dma.hbm_to_vmem [thread:$0]  %s321, 18432, %s323, %s312, 384, 384, 24
        $region48: #{tpu_custom_call.1} parent=43 // pred_fallthru
          _
      $region44: #{tpu_custom_call.1} parent=5 // pred_fallthru
        _
      %p329 = scmp.le.s32.totalorder 1, %s25
      %p330 = scmp.lt.s32.totalorder %s25, 3
      %p331 = pnand %p329, %p330
      %p332 = pneg %p331
      // Predicated region
      $region49: #{tpu_custom_call.1} parent=5 // pred_check
        _
      $region50: #{tpu_custom_call.1} parent=5 // pred_check_branch
        %334 = sbr.rel (%p331) target = $region52
      $region51: #{tpu_custom_call.1} parent=5 // pred_region
        %s335 = ssub.s32 %s25, 1
        %s336 = sand.u32 %s38, 1
        %s337 = scalar_lea.sflag [#allocation4], %s336
        %s338 = sand.u32 %s38, 1
        %s339 = smul.addr %s338, 1152
        %s340 = scalar_lea.vmem [#allocation3], %s339
        // Predicated region
        $region53: #{tpu_custom_call.1} parent=51 // pred_check
          %p341 = pneg %p51
        $region54: #{tpu_custom_call.1} parent=51 // pred_check_branch
          %343 = sbr.rel (%p341) target = $region56
        $region55: #{tpu_custom_call.1} parent=51 // pred_region
          %344 = dma.done %s337, 18432
        $region56: #{tpu_custom_call.1} parent=51 // pred_fallthru
          _
        // Predicated region
        $region57: #{tpu_custom_call.1} parent=51 // pred_check
          %p345 = pneg %p72
        $region58: #{tpu_custom_call.1} parent=51 // pred_check_branch
          %347 = sbr.rel (%p345) target = $region60
        $region59: #{tpu_custom_call.1} parent=51 // pred_region
          %348 = dma.done [#allocation7], 6144
        $region60: #{tpu_custom_call.1} parent=51 // pred_fallthru
          _
        // Predicated region
        $region61: #{tpu_custom_call.1} parent=51 // pred_check
          %p349 = pneg %p93
        $region62: #{tpu_custom_call.1} parent=51 // pred_check_branch
          %351 = sbr.rel (%p349) target = $region64
        $region63: #{tpu_custom_call.1} parent=51 // pred_region
          %352 = dma.done [#allocation7], 16
        $region64: #{tpu_custom_call.1} parent=51 // pred_fallthru
          _
        // Predicated region
        $region65: #{tpu_custom_call.1} parent=51 // pred_check
          %p353 = pneg %p114
        $region66: #{tpu_custom_call.1} parent=51 // pred_check_branch
          %355 = sbr.rel (%p353) target = $region68
        $region67: #{tpu_custom_call.1} parent=51 // pred_region
          %356 = dma.done [#allocation10], 384
        $region68: #{tpu_custom_call.1} parent=51 // pred_fallthru
          _
        // Predicated region
        $region69: #{tpu_custom_call.1} parent=51 // pred_check
          %p357 = pneg %p135
        $region70: #{tpu_custom_call.1} parent=51 // pred_check_branch
          %359 = sbr.rel (%p357) target = $region72
        $region71: #{tpu_custom_call.1} parent=51 // pred_region
          %360 = dma.done [#allocation10], 16
        $region72: #{tpu_custom_call.1} parent=51 // pred_fallthru
          _
        // Predicated region
        $region73: #{tpu_custom_call.1} parent=51 // pred_check
          %p361 = pneg %p198
        $region74: #{tpu_custom_call.1} parent=51 // pred_check_branch
          %363 = sbr.rel (%p361) target = $region76
        $region75: #{tpu_custom_call.1} parent=51 // pred_region
          %364 = dma.done [#allocation13], 16
        $region76: #{tpu_custom_call.1} parent=51 // pred_fallthru
          _
        %s365 = sand.u32 %s38, 1
        %s366 = scalar_lea.sflag [#allocation4], %s365
        %s367 = sand.u32 %s38, 1
        %s368 = smul.addr %s367, 1152
        %s369 = scalar_lea.vmem [#allocation3], %s368
        %p370 = pneg %p51
        %p371 = pneg %p48
        %p372 = pneg %p72
        %p373 = pneg %p69
        %p374 = pneg %p93
        %p375 = pneg %p90
        %p376 = pneg %p114
        %p377 = pneg %p111
        %p378 = pneg %p135
        %p379 = pneg %p132
        %p380 = pneg %p156
        %p381 = pneg %p153
        %p382 = pneg %p177
        %p383 = pneg %p174
        %p384 = pneg %p198
        %p385 = pneg %p195
        %p386 = pneg %p224
        %p387 = pneg %p221
        %s388 = sand.u32 %s211, 1
        %s389 = scalar_lea.sflag [#allocation5], %s388
        %s390 = sand.u32 %s211, 1
        %s391 = smul.addr %s390, 2
        %s392 = scalar_lea.vmem [#allocation14], %s391
        %v394 = vld [vmem:[%s340] sm:$0xff]
        %v395 = vld [vmem:[%s340 + $0x8] sm:$0xff]
        %v396 = vld [vmem:[%s340 + $0x10] sm:$0xff]
        %v397 = vld [vmem:[%s340 + $0x18] sm:$0xff]
        %v398 = vld [vmem:[%s340 + $0x20] sm:$0xff]
        %v399 = vld [vmem:[%s340 + $0x28] sm:$0xff]
        %v400 = vld [vmem:[%s340 + $0x30] sm:$0xff]
        %v401 = vld [vmem:[%s340 + $0x38] sm:$0xff]
        %v402 = vld [vmem:[%s340 + $0x40] sm:$0xff]
        %v403 = vld [vmem:[%s340 + $0x48] sm:$0xff]
        %v404 = vld [vmem:[%s340 + $0x50] sm:$0xff]
        %v405 = vld [vmem:[%s340 + $0x58] sm:$0xff]
        %v406 = vld [vmem:[%s340 + $0x60] sm:$0xff]
        %v407 = vld [vmem:[%s340 + $0x68] sm:$0xff]
        %v408 = vld [vmem:[%s340 + $0x70] sm:$0xff]
        %v409 = vld [vmem:[%s340 + $0x78] sm:$0xff]
        %v410 = vld [vmem:[%s340 + $0x80] sm:$0xff]
        %v411 = vld [vmem:[%s340 + $0x88] sm:$0xff]
        %v412 = vld [vmem:[%s340 + $0x90] sm:$0xff]
        %v413 = vld [vmem:[%s340 + $0x98] sm:$0xff]
        %v414 = vld [vmem:[%s340 + $0xa0] sm:$0xff]
        %v415 = vld [vmem:[%s340 + $0xa8] sm:$0xff]
        %v416 = vld [vmem:[%s340 + $0xb0] sm:$0xff]
        %v417 = vld [vmem:[%s340 + $0xb8] sm:$0xff]
        %v418 = vld [vmem:[%s340 + $0xc0] sm:$0xff]
        %v419 = vld [vmem:[%s340 + $0xc8] sm:$0xff]
        %v420 = vld [vmem:[%s340 + $0xd0] sm:$0xff]
        %v421 = vld [vmem:[%s340 + $0xd8] sm:$0xff]
        %v422 = vld [vmem:[%s340 + $0xe0] sm:$0xff]
        %v423 = vld [vmem:[%s340 + $0xe8] sm:$0xff]
        %v424 = vld [vmem:[%s340 + $0xf0] sm:$0xff]
        %v425 = vld [vmem:[%s340 + $0xf8] sm:$0xff]
        %v426 = vld [vmem:[%s340 + $0x100] sm:$0xff]
        %v427 = vld [vmem:[%s340 + $0x108] sm:$0xff]
        %v428 = vld [vmem:[%s340 + $0x110] sm:$0xff]
        %v429 = vld [vmem:[%s340 + $0x118] sm:$0xff]
        %v430 = vld [vmem:[%s340 + $0x120] sm:$0xff]
        %v431 = vld [vmem:[%s340 + $0x128] sm:$0xff]
        %v432 = vld [vmem:[%s340 + $0x130] sm:$0xff]
        %v433 = vld [vmem:[%s340 + $0x138] sm:$0xff]
        %v434 = vld [vmem:[%s340 + $0x140] sm:$0xff]
        %v435 = vld [vmem:[%s340 + $0x148] sm:$0xff]
        %v436 = vld [vmem:[%s340 + $0x150] sm:$0xff]
        %v437 = vld [vmem:[%s340 + $0x158] sm:$0xff]
        %v438 = vld [vmem:[%s340 + $0x160] sm:$0xff]
        %v439 = vld [vmem:[%s340 + $0x168] sm:$0xff]
        %v440 = vld [vmem:[%s340 + $0x170] sm:$0xff]
        %v441 = vld [vmem:[%s340 + $0x178] sm:$0xff]
        %v442 = vld [vmem:[%s340 + $0x180] sm:$0xff]
        %v443 = vld [vmem:[%s340 + $0x188] sm:$0xff]
        %v444 = vld [vmem:[%s340 + $0x190] sm:$0xff]
        %v445 = vld [vmem:[%s340 + $0x198] sm:$0xff]
        %v446 = vld [vmem:[%s340 + $0x1a0] sm:$0xff]
        %v447 = vld [vmem:[%s340 + $0x1a8] sm:$0xff]
        %v448 = vld [vmem:[%s340 + $0x1b0] sm:$0xff]
        %v449 = vld [vmem:[%s340 + $0x1b8] sm:$0xff]
        %v450 = vld [vmem:[%s340 + $0x1c0] sm:$0xff]
        %v451 = vld [vmem:[%s340 + $0x1c8] sm:$0xff]
        %v452 = vld [vmem:[%s340 + $0x1d0] sm:$0xff]
        %v453 = vld [vmem:[%s340 + $0x1d8] sm:$0xff]
        %v454 = vld [vmem:[%s340 + $0x1e0] sm:$0xff]
        %v455 = vld [vmem:[%s340 + $0x1e8] sm:$0xff]
        %v456 = vld [vmem:[%s340 + $0x1f0] sm:$0xff]
        %v457 = vld [vmem:[%s340 + $0x1f8] sm:$0xff]
        %v458 = vld [vmem:[%s340 + $0x200] sm:$0xff]
        %v459 = vld [vmem:[%s340 + $0x208] sm:$0xff]
        %v460 = vld [vmem:[%s340 + $0x210] sm:$0xff]
        %v461 = vld [vmem:[%s340 + $0x218] sm:$0xff]
        %v462 = vld [vmem:[%s340 + $0x220] sm:$0xff]
        %v463 = vld [vmem:[%s340 + $0x228] sm:$0xff]
        %v464 = vld [vmem:[%s340 + $0x230] sm:$0xff]
        %v465 = vld [vmem:[%s340 + $0x238] sm:$0xff]
        %v466 = vld [vmem:[%s340 + $0x240] sm:$0xff]
        %v467 = vld [vmem:[%s340 + $0x248] sm:$0xff]
        %v468 = vld [vmem:[%s340 + $0x250] sm:$0xff]
        %v469 = vld [vmem:[%s340 + $0x258] sm:$0xff]
        %v470 = vld [vmem:[%s340 + $0x260] sm:$0xff]
        %v471 = vld [vmem:[%s340 + $0x268] sm:$0xff]
        %v472 = vld [vmem:[%s340 + $0x270] sm:$0xff]
        %v473 = vld [vmem:[%s340 + $0x278] sm:$0xff]
        %v474 = vld [vmem:[%s340 + $0x280] sm:$0xff]
        %v475 = vld [vmem:[%s340 + $0x288] sm:$0xff]
        %v476 = vld [vmem:[%s340 + $0x290] sm:$0xff]
        %v477 = vld [vmem:[%s340 + $0x298] sm:$0xff]
        %v478 = vld [vmem:[%s340 + $0x2a0] sm:$0xff]
        %v479 = vld [vmem:[%s340 + $0x2a8] sm:$0xff]
        %v480 = vld [vmem:[%s340 + $0x2b0] sm:$0xff]
        %v481 = vld [vmem:[%s340 + $0x2b8] sm:$0xff]
        %v482 = vld [vmem:[%s340 + $0x2c0] sm:$0xff]
        %v483 = vld [vmem:[%s340 + $0x2c8] sm:$0xff]
        %v484 = vld [vmem:[%s340 + $0x2d0] sm:$0xff]
        %v485 = vld [vmem:[%s340 + $0x2d8] sm:$0xff]
        %v486 = vld [vmem:[%s340 + $0x2e0] sm:$0xff]
        %v487 = vld [vmem:[%s340 + $0x2e8] sm:$0xff]
        %v488 = vld [vmem:[%s340 + $0x2f0] sm:$0xff]
        %v489 = vld [vmem:[%s340 + $0x2f8] sm:$0xff]
        %v490 = vld [vmem:[%s340 + $0x300] sm:$0xff]
        %v491 = vld [vmem:[%s340 + $0x308] sm:$0xff]
        %v492 = vld [vmem:[%s340 + $0x310] sm:$0xff]
        %v493 = vld [vmem:[%s340 + $0x318] sm:$0xff]
        %v494 = vld [vmem:[%s340 + $0x320] sm:$0xff]
        %v495 = vld [vmem:[%s340 + $0x328] sm:$0xff]
        %v496 = vld [vmem:[%s340 + $0x330] sm:$0xff]
        %v497 = vld [vmem:[%s340 + $0x338] sm:$0xff]
        %v498 = vld [vmem:[%s340 + $0x340] sm:$0xff]
        %v499 = vld [vmem:[%s340 + $0x348] sm:$0xff]
        %v500 = vld [vmem:[%s340 + $0x350] sm:$0xff]
        %v501 = vld [vmem:[%s340 + $0x358] sm:$0xff]
        %v502 = vld [vmem:[%s340 + $0x360] sm:$0xff]
        %v503 = vld [vmem:[%s340 + $0x368] sm:$0xff]
        %v504 = vld [vmem:[%s340 + $0x370] sm:$0xff]
        %v505 = vld [vmem:[%s340 + $0x378] sm:$0xff]
        %v506 = vld [vmem:[%s340 + $0x380] sm:$0xff]
        %v507 = vld [vmem:[%s340 + $0x388] sm:$0xff]
        %v508 = vld [vmem:[%s340 + $0x390] sm:$0xff]
        %v509 = vld [vmem:[%s340 + $0x398] sm:$0xff]
        %v510 = vld [vmem:[%s340 + $0x3a0] sm:$0xff]
        %v511 = vld [vmem:[%s340 + $0x3a8] sm:$0xff]
        %v512 = vld [vmem:[%s340 + $0x3b0] sm:$0xff]
        %v513 = vld [vmem:[%s340 + $0x3b8] sm:$0xff]
        %v514 = vld [vmem:[%s340 + $0x3c0] sm:$0xff]
        %v515 = vld [vmem:[%s340 + $0x3c8] sm:$0xff]
        %v516 = vld [vmem:[%s340 + $0x3d0] sm:$0xff]
        %v517 = vld [vmem:[%s340 + $0x3d8] sm:$0xff]
        %v518 = vld [vmem:[%s340 + $0x3e0] sm:$0xff]
        %v519 = vld [vmem:[%s340 + $0x3e8] sm:$0xff]
        %v520 = vld [vmem:[%s340 + $0x3f0] sm:$0xff]
        %v521 = vld [vmem:[%s340 + $0x3f8] sm:$0xff]
        %v522 = vld [vmem:[%s340 + $0x400] sm:$0xff]
        %v523 = vld [vmem:[%s340 + $0x408] sm:$0xff]
        %v524 = vld [vmem:[%s340 + $0x410] sm:$0xff]
        %v525 = vld [vmem:[%s340 + $0x418] sm:$0xff]
        %v526 = vld [vmem:[%s340 + $0x420] sm:$0xff]
        %v527 = vld [vmem:[%s340 + $0x428] sm:$0xff]
        %v528 = vld [vmem:[%s340 + $0x430] sm:$0xff]
        %v529 = vld [vmem:[%s340 + $0x438] sm:$0xff]
        %v530 = vld [vmem:[%s340 + $0x440] sm:$0xff]
        %v531 = vld [vmem:[%s340 + $0x448] sm:$0xff]
        %v532 = vld [vmem:[%s340 + $0x450] sm:$0xff]
        %v533 = vld [vmem:[%s340 + $0x458] sm:$0xff]
        %v534 = vld [vmem:[%s340 + $0x460] sm:$0xff]
        %v535 = vld [vmem:[%s340 + $0x468] sm:$0xff]
        %v536 = vld [vmem:[%s340 + $0x470] sm:$0xff]
        %v537 = vld [vmem:[%s340 + $0x478] sm:$0xff]
        %v538 = vld [vmem:[#allocation6] sm:$0xf]
        %v539 = vld [vmem:[#allocation6 + $0x4] sm:$0xf]
        %v540 = vld [vmem:[#allocation6 + $0x8] sm:$0xf]
        %v541 = vld [vmem:[#allocation6 + $0xc] sm:$0xf]
        %v542 = vld [vmem:[#allocation6 + $0x10] sm:$0xf]
        %v543 = vld [vmem:[#allocation6 + $0x14] sm:$0xf]
        %v544 = vld [vmem:[#allocation6 + $0x18] sm:$0xf]
        %v545 = vld [vmem:[#allocation6 + $0x1c] sm:$0xf]
        %v546 = vld [vmem:[#allocation6 + $0x20] sm:$0xf]
        %v547 = vld [vmem:[#allocation6 + $0x24] sm:$0xf]
        %v548 = vld [vmem:[#allocation6 + $0x28] sm:$0xf]
        %v549 = vld [vmem:[#allocation6 + $0x2c] sm:$0xf]
        %v550 = vld [vmem:[#allocation6 + $0x30] sm:$0xf]
        %v551 = vld [vmem:[#allocation6 + $0x34] sm:$0xf]
        %v552 = vld [vmem:[#allocation6 + $0x38] sm:$0xf]
        %v553 = vld [vmem:[#allocation6 + $0x3c] sm:$0xf]
        %v554 = vld [vmem:[#allocation6 + $0x40] sm:$0xf]
        %v555 = vld [vmem:[#allocation6 + $0x44] sm:$0xf]
        %v556 = vld [vmem:[#allocation6 + $0x48] sm:$0xf]
        %v557 = vld [vmem:[#allocation6 + $0x4c] sm:$0xf]
        %v558 = vld [vmem:[#allocation6 + $0x50] sm:$0xf]
        %v559 = vld [vmem:[#allocation6 + $0x54] sm:$0xf]
        %v560 = vld [vmem:[#allocation6 + $0x58] sm:$0xf]
        %v561 = vld [vmem:[#allocation6 + $0x5c] sm:$0xf]
        %v562 = vld [vmem:[#allocation6 + $0x60] sm:$0xf]
        %v563 = vld [vmem:[#allocation6 + $0x64] sm:$0xf]
        %v564 = vld [vmem:[#allocation6 + $0x68] sm:$0xf]
        %v565 = vld [vmem:[#allocation6 + $0x6c] sm:$0xf]
        %v566 = vld [vmem:[#allocation6 + $0x70] sm:$0xf]
        %v567 = vld [vmem:[#allocation6 + $0x74] sm:$0xf]
        %v568 = vld [vmem:[#allocation6 + $0x78] sm:$0xf]
        %v569 = vld [vmem:[#allocation6 + $0x7c] sm:$0xf]
        %v570 = vld [vmem:[#allocation6 + $0x80] sm:$0xf]
        %v571 = vld [vmem:[#allocation6 + $0x84] sm:$0xf]
        %v572 = vld [vmem:[#allocation6 + $0x88] sm:$0xf]
        %v573 = vld [vmem:[#allocation6 + $0x8c] sm:$0xf]
        %v574 = vld [vmem:[#allocation6 + $0x90] sm:$0xf]
        %v575 = vld [vmem:[#allocation6 + $0x94] sm:$0xf]
        %v576 = vld [vmem:[#allocation6 + $0x98] sm:$0xf]
        %v577 = vld [vmem:[#allocation6 + $0x9c] sm:$0xf]
        %v578 = vld [vmem:[#allocation6 + $0xa0] sm:$0xf]
        %v579 = vld [vmem:[#allocation6 + $0xa4] sm:$0xf]
        %v580 = vld [vmem:[#allocation6 + $0xa8] sm:$0xf]
        %v581 = vld [vmem:[#allocation6 + $0xac] sm:$0xf]
        %v582 = vld [vmem:[#allocation6 + $0xb0] sm:$0xf]
        %v583 = vld [vmem:[#allocation6 + $0xb4] sm:$0xf]
        %v584 = vld [vmem:[#allocation6 + $0xb8] sm:$0xf]
        %v585 = vld [vmem:[#allocation6 + $0xbc] sm:$0xf]
        %v586 = vld [vmem:[#allocation6 + $0xc0] sm:$0xf]
        %v587 = vld [vmem:[#allocation6 + $0xc4] sm:$0xf]
        %v588 = vld [vmem:[#allocation6 + $0xc8] sm:$0xf]
        %v589 = vld [vmem:[#allocation6 + $0xcc] sm:$0xf]
        %v590 = vld [vmem:[#allocation6 + $0xd0] sm:$0xf]
        %v591 = vld [vmem:[#allocation6 + $0xd4] sm:$0xf]
        %v592 = vld [vmem:[#allocation6 + $0xd8] sm:$0xf]
        %v593 = vld [vmem:[#allocation6 + $0xdc] sm:$0xf]
        %v594 = vld [vmem:[#allocation6 + $0xe0] sm:$0xf]
        %v595 = vld [vmem:[#allocation6 + $0xe4] sm:$0xf]
        %v596 = vld [vmem:[#allocation6 + $0xe8] sm:$0xf]
        %v597 = vld [vmem:[#allocation6 + $0xec] sm:$0xf]
        %v598 = vld [vmem:[#allocation6 + $0xf0] sm:$0xf]
        %v599 = vld [vmem:[#allocation6 + $0xf4] sm:$0xf]
        %v600 = vld [vmem:[#allocation6 + $0xf8] sm:$0xf]
        %v601 = vld [vmem:[#allocation6 + $0xfc] sm:$0xf]
        %v602 = vld [vmem:[#allocation6 + $0x100] sm:$0xf]
        %v603 = vld [vmem:[#allocation6 + $0x104] sm:$0xf]
        %v604 = vld [vmem:[#allocation6 + $0x108] sm:$0xf]
        %v605 = vld [vmem:[#allocation6 + $0x10c] sm:$0xf]
        %v606 = vld [vmem:[#allocation6 + $0x110] sm:$0xf]
        %v607 = vld [vmem:[#allocation6 + $0x114] sm:$0xf]
        %v608 = vld [vmem:[#allocation6 + $0x118] sm:$0xf]
        %v609 = vld [vmem:[#allocation6 + $0x11c] sm:$0xf]
        %v610 = vld [vmem:[#allocation6 + $0x120] sm:$0xf]
        %v611 = vld [vmem:[#allocation6 + $0x124] sm:$0xf]
        %v612 = vld [vmem:[#allocation6 + $0x128] sm:$0xf]
        %v613 = vld [vmem:[#allocation6 + $0x12c] sm:$0xf]
        %v614 = vld [vmem:[#allocation6 + $0x130] sm:$0xf]
        %v615 = vld [vmem:[#allocation6 + $0x134] sm:$0xf]
        %v616 = vld [vmem:[#allocation6 + $0x138] sm:$0xf]
        %v617 = vld [vmem:[#allocation6 + $0x13c] sm:$0xf]
        %v618 = vld [vmem:[#allocation6 + $0x140] sm:$0xf]
        %v619 = vld [vmem:[#allocation6 + $0x144] sm:$0xf]
        %v620 = vld [vmem:[#allocation6 + $0x148] sm:$0xf]
        %v621 = vld [vmem:[#allocation6 + $0x14c] sm:$0xf]
        %v622 = vld [vmem:[#allocation6 + $0x150] sm:$0xf]
        %v623 = vld [vmem:[#allocation6 + $0x154] sm:$0xf]
        %v624 = vld [vmem:[#allocation6 + $0x158] sm:$0xf]
        %v625 = vld [vmem:[#allocation6 + $0x15c] sm:$0xf]
        %v626 = vld [vmem:[#allocation6 + $0x160] sm:$0xf]
        %v627 = vld [vmem:[#allocation6 + $0x164] sm:$0xf]
        %v628 = vld [vmem:[#allocation6 + $0x168] sm:$0xf]
        %v629 = vld [vmem:[#allocation6 + $0x16c] sm:$0xf]
        %v630 = vld [vmem:[#allocation6 + $0x170] sm:$0xf]
        %v631 = vld [vmem:[#allocation6 + $0x174] sm:$0xf]
        %v632 = vld [vmem:[#allocation6 + $0x178] sm:$0xf]
        %v633 = vld [vmem:[#allocation6 + $0x17c] sm:$0xf]
        %v778 = vunpack.c.l.b16 %v394
        %v779 = vunpack.c.h.b16 %v394
        %v780 = vunpack.c.l.b16 %v395
        %v781 = vunpack.c.h.b16 %v395
        %v782 = vunpack.c.l.b16 %v396
        %v783 = vunpack.c.h.b16 %v396
        %v784 = vunpack.c.l.b16 %v397
        %v785 = vunpack.c.h.b16 %v397
        %v786 = vunpack.c.l.b16 %v398
        %v787 = vunpack.c.h.b16 %v398
        %v788 = vunpack.c.l.b16 %v399
        %v789 = vunpack.c.h.b16 %v399
        %v790 = vunpack.c.l.b16 %v400
        %v791 = vunpack.c.h.b16 %v400
        %v792 = vunpack.c.l.b16 %v401
        %v793 = vunpack.c.h.b16 %v401
        %v794 = vunpack.c.l.b16 %v402
        %v795 = vunpack.c.h.b16 %v402
        %v796 = vunpack.c.l.b16 %v403
        %v797 = vunpack.c.h.b16 %v403
        %v798 = vunpack.c.l.b16 %v404
        %v799 = vunpack.c.h.b16 %v404
        %v800 = vunpack.c.l.b16 %v405
        %v801 = vunpack.c.h.b16 %v405
        %v802 = vunpack.c.l.b16 %v406
        %v803 = vunpack.c.h.b16 %v406
        %v804 = vunpack.c.l.b16 %v407
        %v805 = vunpack.c.h.b16 %v407
        %v806 = vunpack.c.l.b16 %v408
        %v807 = vunpack.c.h.b16 %v408
        %v808 = vunpack.c.l.b16 %v409
        %v809 = vunpack.c.h.b16 %v409
        %v810 = vunpack.c.l.b16 %v410
        %v811 = vunpack.c.h.b16 %v410
        %v812 = vunpack.c.l.b16 %v411
        %v813 = vunpack.c.h.b16 %v411
        %v814 = vunpack.c.l.b16 %v412
        %v815 = vunpack.c.h.b16 %v412
        %v816 = vunpack.c.l.b16 %v413
        %v817 = vunpack.c.h.b16 %v413
        %v818 = vunpack.c.l.b16 %v414
        %v819 = vunpack.c.h.b16 %v414
        %v820 = vunpack.c.l.b16 %v415
        %v821 = vunpack.c.h.b16 %v415
        %v822 = vunpack.c.l.b16 %v416
        %v823 = vunpack.c.h.b16 %v416
        %v824 = vunpack.c.l.b16 %v417
        %v825 = vunpack.c.h.b16 %v417
        %v826 = vunpack.c.l.b16 %v418
        %v827 = vunpack.c.h.b16 %v418
        %v828 = vunpack.c.l.b16 %v419
        %v829 = vunpack.c.h.b16 %v419
        %v830 = vunpack.c.l.b16 %v420
        %v831 = vunpack.c.h.b16 %v420
        %v832 = vunpack.c.l.b16 %v421
        %v833 = vunpack.c.h.b16 %v421
        %v834 = vunpack.c.l.b16 %v422
        %v835 = vunpack.c.h.b16 %v422
        %v836 = vunpack.c.l.b16 %v423
        %v837 = vunpack.c.h.b16 %v423
        %v838 = vunpack.c.l.b16 %v424
        %v839 = vunpack.c.h.b16 %v424
        %v840 = vunpack.c.l.b16 %v425
        %v841 = vunpack.c.h.b16 %v425
        %v842 = vunpack.c.l.b16 %v426
        %v843 = vunpack.c.h.b16 %v426
        %v844 = vunpack.c.l.b16 %v427
        %v845 = vunpack.c.h.b16 %v427
        %v846 = vunpack.c.l.b16 %v428
        %v847 = vunpack.c.h.b16 %v428
        %v848 = vunpack.c.l.b16 %v429
        %v849 = vunpack.c.h.b16 %v429
        %v850 = vunpack.c.l.b16 %v430
        %v851 = vunpack.c.h.b16 %v430
        %v852 = vunpack.c.l.b16 %v431
        %v853 = vunpack.c.h.b16 %v431
        %v854 = vunpack.c.l.b16 %v432
        %v855 = vunpack.c.h.b16 %v432
        %v856 = vunpack.c.l.b16 %v433
        %v857 = vunpack.c.h.b16 %v433
        %v858 = vunpack.c.l.b16 %v434
        %v859 = vunpack.c.h.b16 %v434
        %v860 = vunpack.c.l.b16 %v435
        %v861 = vunpack.c.h.b16 %v435
        %v862 = vunpack.c.l.b16 %v436
        %v863 = vunpack.c.h.b16 %v436
        %v864 = vunpack.c.l.b16 %v437
        %v865 = vunpack.c.h.b16 %v437
        %v866 = vunpack.c.l.b16 %v438
        %v867 = vunpack.c.h.b16 %v438
        %v868 = vunpack.c.l.b16 %v439
        %v869 = vunpack.c.h.b16 %v439
        %v870 = vunpack.c.l.b16 %v440
        %v871 = vunpack.c.h.b16 %v440
        %v872 = vunpack.c.l.b16 %v441
        %v873 = vunpack.c.h.b16 %v441
        %v874 = vunpack.c.l.b16 %v442
        %v875 = vunpack.c.h.b16 %v442
        %v876 = vunpack.c.l.b16 %v443
        %v877 = vunpack.c.h.b16 %v443
        %v878 = vunpack.c.l.b16 %v444
        %v879 = vunpack.c.h.b16 %v444
        %v880 = vunpack.c.l.b16 %v445
        %v881 = vunpack.c.h.b16 %v445
        %v882 = vunpack.c.l.b16 %v446
        %v883 = vunpack.c.h.b16 %v446
        %v884 = vunpack.c.l.b16 %v447
        %v885 = vunpack.c.h.b16 %v447
        %v886 = vunpack.c.l.b16 %v448
        %v887 = vunpack.c.h.b16 %v448
        %v888 = vunpack.c.l.b16 %v449
        %v889 = vunpack.c.h.b16 %v449
        %v890 = vunpack.c.l.b16 %v450
        %v891 = vunpack.c.h.b16 %v450
        %v892 = vunpack.c.l.b16 %v451
        %v893 = vunpack.c.h.b16 %v451
        %v894 = vunpack.c.l.b16 %v452
        %v895 = vunpack.c.h.b16 %v452
        %v896 = vunpack.c.l.b16 %v453
        %v897 = vunpack.c.h.b16 %v453
        %v898 = vunpack.c.l.b16 %v454
        %v899 = vunpack.c.h.b16 %v454
        %v900 = vunpack.c.l.b16 %v455
        %v901 = vunpack.c.h.b16 %v455
        %v902 = vunpack.c.l.b16 %v456
        %v903 = vunpack.c.h.b16 %v456
        %v904 = vunpack.c.l.b16 %v457
        %v905 = vunpack.c.h.b16 %v457
        %v906 = vunpack.c.l.b16 %v458
        %v907 = vunpack.c.h.b16 %v458
        %v908 = vunpack.c.l.b16 %v459
        %v909 = vunpack.c.h.b16 %v459
        %v910 = vunpack.c.l.b16 %v460
        %v911 = vunpack.c.h.b16 %v460
        %v912 = vunpack.c.l.b16 %v461
        %v913 = vunpack.c.h.b16 %v461
        %v914 = vunpack.c.l.b16 %v462
        %v915 = vunpack.c.h.b16 %v462
        %v916 = vunpack.c.l.b16 %v463
        %v917 = vunpack.c.h.b16 %v463
        %v918 = vunpack.c.l.b16 %v464
        %v919 = vunpack.c.h.b16 %v464
        %v920 = vunpack.c.l.b16 %v465
        %v921 = vunpack.c.h.b16 %v465
        %v922 = vunpack.c.l.b16 %v466
        %v923 = vunpack.c.h.b16 %v466
        %v924 = vunpack.c.l.b16 %v467
        %v925 = vunpack.c.h.b16 %v467
        %v926 = vunpack.c.l.b16 %v468
        %v927 = vunpack.c.h.b16 %v468
        %v928 = vunpack.c.l.b16 %v469
        %v929 = vunpack.c.h.b16 %v469
        %v930 = vunpack.c.l.b16 %v470
        %v931 = vunpack.c.h.b16 %v470
        %v932 = vunpack.c.l.b16 %v471
        %v933 = vunpack.c.h.b16 %v471
        %v934 = vunpack.c.l.b16 %v472
        %v935 = vunpack.c.h.b16 %v472
        %v936 = vunpack.c.l.b16 %v473
        %v937 = vunpack.c.h.b16 %v473
        %v938 = vunpack.c.l.b16 %v474
        %v939 = vunpack.c.h.b16 %v474
        %v940 = vunpack.c.l.b16 %v475
        %v941 = vunpack.c.h.b16 %v475
        %v942 = vunpack.c.l.b16 %v476
        %v943 = vunpack.c.h.b16 %v476
        %v944 = vunpack.c.l.b16 %v477
        %v945 = vunpack.c.h.b16 %v477
        %v946 = vunpack.c.l.b16 %v478
        %v947 = vunpack.c.h.b16 %v478
        %v948 = vunpack.c.l.b16 %v479
        %v949 = vunpack.c.h.b16 %v479
        %v950 = vunpack.c.l.b16 %v480
        %v951 = vunpack.c.h.b16 %v480
        %v952 = vunpack.c.l.b16 %v481
        %v953 = vunpack.c.h.b16 %v481
        %v954 = vunpack.c.l.b16 %v482
        %v955 = vunpack.c.h.b16 %v482
        %v956 = vunpack.c.l.b16 %v483
        %v957 = vunpack.c.h.b16 %v483
        %v958 = vunpack.c.l.b16 %v484
        %v959 = vunpack.c.h.b16 %v484
        %v960 = vunpack.c.l.b16 %v485
        %v961 = vunpack.c.h.b16 %v485
        %v962 = vunpack.c.l.b16 %v486
        %v963 = vunpack.c.h.b16 %v486
        %v964 = vunpack.c.l.b16 %v487
        %v965 = vunpack.c.h.b16 %v487
        %v966 = vunpack.c.l.b16 %v488
        %v967 = vunpack.c.h.b16 %v488
        %v968 = vunpack.c.l.b16 %v489
        %v969 = vunpack.c.h.b16 %v489
        %v970 = vunpack.c.l.b16 %v490
        %v971 = vunpack.c.h.b16 %v490
        %v972 = vunpack.c.l.b16 %v491
        %v973 = vunpack.c.h.b16 %v491
        %v974 = vunpack.c.l.b16 %v492
        %v975 = vunpack.c.h.b16 %v492
        %v976 = vunpack.c.l.b16 %v493
        %v977 = vunpack.c.h.b16 %v493
        %v978 = vunpack.c.l.b16 %v494
        %v979 = vunpack.c.h.b16 %v494
        %v980 = vunpack.c.l.b16 %v495
        %v981 = vunpack.c.h.b16 %v495
        %v982 = vunpack.c.l.b16 %v496
        %v983 = vunpack.c.h.b16 %v496
        %v984 = vunpack.c.l.b16 %v497
        %v985 = vunpack.c.h.b16 %v497
        %v986 = vunpack.c.l.b16 %v498
        %v987 = vunpack.c.h.b16 %v498
        %v988 = vunpack.c.l.b16 %v499
        %v989 = vunpack.c.h.b16 %v499
        %v990 = vunpack.c.l.b16 %v500
        %v991 = vunpack.c.h.b16 %v500
        %v992 = vunpack.c.l.b16 %v501
        %v993 = vunpack.c.h.b16 %v501
        %v994 = vunpack.c.l.b16 %v502
        %v995 = vunpack.c.h.b16 %v502
        %v996 = vunpack.c.l.b16 %v503
        %v997 = vunpack.c.h.b16 %v503
        %v998 = vunpack.c.l.b16 %v504
        %v999 = vunpack.c.h.b16 %v504
        %v1000 = vunpack.c.l.b16 %v505
        %v1001 = vunpack.c.h.b16 %v505
        %v1002 = vunpack.c.l.b16 %v506
        %v1003 = vunpack.c.h.b16 %v506
        %v1004 = vunpack.c.l.b16 %v507
        %v1005 = vunpack.c.h.b16 %v507
        %v1006 = vunpack.c.l.b16 %v508
        %v1007 = vunpack.c.h.b16 %v508
        %v1008 = vunpack.c.l.b16 %v509
        %v1009 = vunpack.c.h.b16 %v509
        %v1010 = vunpack.c.l.b16 %v510
        %v1011 = vunpack.c.h.b16 %v510
        %v1012 = vunpack.c.l.b16 %v511
        %v1013 = vunpack.c.h.b16 %v511
        %v1014 = vunpack.c.l.b16 %v512
        %v1015 = vunpack.c.h.b16 %v512
        %v1016 = vunpack.c.l.b16 %v513
        %v1017 = vunpack.c.h.b16 %v513
        %v1018 = vunpack.c.l.b16 %v514
        %v1019 = vunpack.c.h.b16 %v514
        %v1020 = vunpack.c.l.b16 %v515
        %v1021 = vunpack.c.h.b16 %v515
        %v1022 = vunpack.c.l.b16 %v516
        %v1023 = vunpack.c.h.b16 %v516
        %v1024 = vunpack.c.l.b16 %v517
        %v1025 = vunpack.c.h.b16 %v517
        %v1026 = vunpack.c.l.b16 %v518
        %v1027 = vunpack.c.h.b16 %v518
        %v1028 = vunpack.c.l.b16 %v519
        %v1029 = vunpack.c.h.b16 %v519
        %v1030 = vunpack.c.l.b16 %v520
        %v1031 = vunpack.c.h.b16 %v520
        %v1032 = vunpack.c.l.b16 %v521
        %v1033 = vunpack.c.h.b16 %v521
        %v1034 = vunpack.c.l.b16 %v522
        %v1035 = vunpack.c.h.b16 %v522
        %v1036 = vunpack.c.l.b16 %v523
        %v1037 = vunpack.c.h.b16 %v523
        %v1038 = vunpack.c.l.b16 %v524
        %v1039 = vunpack.c.h.b16 %v524
        %v1040 = vunpack.c.l.b16 %v525
        %v1041 = vunpack.c.h.b16 %v525
        %v1042 = vunpack.c.l.b16 %v526
        %v1043 = vunpack.c.h.b16 %v526
        %v1044 = vunpack.c.l.b16 %v527
        %v1045 = vunpack.c.h.b16 %v527
        %v1046 = vunpack.c.l.b16 %v528
        %v1047 = vunpack.c.h.b16 %v528
        %v1048 = vunpack.c.l.b16 %v529
        %v1049 = vunpack.c.h.b16 %v529
        %v1050 = vunpack.c.l.b16 %v530
        %v1051 = vunpack.c.h.b16 %v530
        %v1052 = vunpack.c.l.b16 %v531
        %v1053 = vunpack.c.h.b16 %v531
        %v1054 = vunpack.c.l.b16 %v532
        %v1055 = vunpack.c.h.b16 %v532
        %v1056 = vunpack.c.l.b16 %v533
        %v1057 = vunpack.c.h.b16 %v533
        %v1058 = vunpack.c.l.b16 %v534
        %v1059 = vunpack.c.h.b16 %v534
        %v1060 = vunpack.c.l.b16 %v535
        %v1061 = vunpack.c.h.b16 %v535
        %v1062 = vunpack.c.l.b16 %v536
        %v1063 = vunpack.c.h.b16 %v536
        %v1064 = vunpack.c.l.b16 %v537
        %v1065 = vunpack.c.h.b16 %v537
        %v1066 = vpack.c.b16 %v784, %v778
        %v1067 = vpack.c.b16 %v785, %v779
        %v1068 = vpack.c.b16 %v786, %v780
        %v1069 = vpack.c.b16 %v787, %v781
        %v1070 = vpack.c.b16 %v788, %v782
        %v1071 = vpack.c.b16 %v789, %v783
        %v1072 = vpack.c.b16 %v796, %v790
        %v1073 = vpack.c.b16 %v797, %v791
        %v1074 = vpack.c.b16 %v798, %v792
        %v1075 = vpack.c.b16 %v799, %v793
        %v1076 = vpack.c.b16 %v800, %v794
        %v1077 = vpack.c.b16 %v801, %v795
        %v1078 = vpack.c.b16 %v808, %v802
        %v1079 = vpack.c.b16 %v809, %v803
        %v1080 = vpack.c.b16 %v810, %v804
        %v1081 = vpack.c.b16 %v811, %v805
        %v1082 = vpack.c.b16 %v812, %v806
        %v1083 = vpack.c.b16 %v813, %v807
        %v1084 = vpack.c.b16 %v820, %v814
        %v1085 = vpack.c.b16 %v821, %v815
        %v1086 = vpack.c.b16 %v822, %v816
        %v1087 = vpack.c.b16 %v823, %v817
        %v1088 = vpack.c.b16 %v824, %v818
        %v1089 = vpack.c.b16 %v825, %v819
        %v1090 = vpack.c.b16 %v832, %v826
        %v1091 = vpack.c.b16 %v833, %v827
        %v1092 = vpack.c.b16 %v834, %v828
        %v1093 = vpack.c.b16 %v835, %v829
        %v1094 = vpack.c.b16 %v836, %v830
        %v1095 = vpack.c.b16 %v837, %v831
        %v1096 = vpack.c.b16 %v844, %v838
        %v1097 = vpack.c.b16 %v845, %v839
        %v1098 = vpack.c.b16 %v846, %v840
        %v1099 = vpack.c.b16 %v847, %v841
        %v1100 = vpack.c.b16 %v848, %v842
        %v1101 = vpack.c.b16 %v849, %v843
        %v1102 = vpack.c.b16 %v856, %v850
        %v1103 = vpack.c.b16 %v857, %v851
        %v1104 = vpack.c.b16 %v858, %v852
        %v1105 = vpack.c.b16 %v859, %v853
        %v1106 = vpack.c.b16 %v860, %v854
        %v1107 = vpack.c.b16 %v861, %v855
        %v1108 = vpack.c.b16 %v868, %v862
        %v1109 = vpack.c.b16 %v869, %v863
        %v1110 = vpack.c.b16 %v870, %v864
        %v1111 = vpack.c.b16 %v871, %v865
        %v1112 = vpack.c.b16 %v872, %v866
        %v1113 = vpack.c.b16 %v873, %v867
        %v1114 = vpack.c.b16 %v880, %v874
        %v1115 = vpack.c.b16 %v881, %v875
        %v1116 = vpack.c.b16 %v882, %v876
        %v1117 = vpack.c.b16 %v883, %v877
        %v1118 = vpack.c.b16 %v884, %v878
        %v1119 = vpack.c.b16 %v885, %v879
        %v1120 = vpack.c.b16 %v892, %v886
        %v1121 = vpack.c.b16 %v893, %v887
        %v1122 = vpack.c.b16 %v894, %v888
        %v1123 = vpack.c.b16 %v895, %v889
        %v1124 = vpack.c.b16 %v896, %v890
        %v1125 = vpack.c.b16 %v897, %v891
        %v1126 = vpack.c.b16 %v904, %v898
        %v1127 = vpack.c.b16 %v905, %v899
        %v1128 = vpack.c.b16 %v906, %v900
        %v1129 = vpack.c.b16 %v907, %v901
        %v1130 = vpack.c.b16 %v908, %v902
        %v1131 = vpack.c.b16 %v909, %v903
        %v1132 = vpack.c.b16 %v916, %v910
        %v1133 = vpack.c.b16 %v917, %v911
        %v1134 = vpack.c.b16 %v918, %v912
        %v1135 = vpack.c.b16 %v919, %v913
        %v1136 = vpack.c.b16 %v920, %v914
        %v1137 = vpack.c.b16 %v921, %v915
        %v1138 = vpack.c.b16 %v928, %v922
        %v1139 = vpack.c.b16 %v929, %v923
        %v1140 = vpack.c.b16 %v930, %v924
        %v1141 = vpack.c.b16 %v931, %v925
        %v1142 = vpack.c.b16 %v932, %v926
        %v1143 = vpack.c.b16 %v933, %v927
        %v1144 = vpack.c.b16 %v940, %v934
        %v1145 = vpack.c.b16 %v941, %v935
        %v1146 = vpack.c.b16 %v942, %v936
        %v1147 = vpack.c.b16 %v943, %v937
        %v1148 = vpack.c.b16 %v944, %v938
        %v1149 = vpack.c.b16 %v945, %v939
        %v1150 = vpack.c.b16 %v952, %v946
        %v1151 = vpack.c.b16 %v953, %v947
        %v1152 = vpack.c.b16 %v954, %v948
        %v1153 = vpack.c.b16 %v955, %v949
        %v1154 = vpack.c.b16 %v956, %v950
        %v1155 = vpack.c.b16 %v957, %v951
        %v1156 = vpack.c.b16 %v964, %v958
        %v1157 = vpack.c.b16 %v965, %v959
        %v1158 = vpack.c.b16 %v966, %v960
        %v1159 = vpack.c.b16 %v967, %v961
        %v1160 = vpack.c.b16 %v968, %v962
        %v1161 = vpack.c.b16 %v969, %v963
        %v1162 = vpack.c.b16 %v976, %v970
        %v1163 = vpack.c.b16 %v977, %v971
        %v1164 = vpack.c.b16 %v978, %v972
        %v1165 = vpack.c.b16 %v979, %v973
        %v1166 = vpack.c.b16 %v980, %v974
        %v1167 = vpack.c.b16 %v981, %v975
        %v1168 = vpack.c.b16 %v988, %v982
        %v1169 = vpack.c.b16 %v989, %v983
        %v1170 = vpack.c.b16 %v990, %v984
        %v1171 = vpack.c.b16 %v991, %v985
        %v1172 = vpack.c.b16 %v992, %v986
        %v1173 = vpack.c.b16 %v993, %v987
        %v1174 = vpack.c.b16 %v1000, %v994
        %v1175 = vpack.c.b16 %v1001, %v995
        %v1176 = vpack.c.b16 %v1002, %v996
        %v1177 = vpack.c.b16 %v1003, %v997
        %v1178 = vpack.c.b16 %v1004, %v998
        %v1179 = vpack.c.b16 %v1005, %v999
        %v1180 = vpack.c.b16 %v1012, %v1006
        %v1181 = vpack.c.b16 %v1013, %v1007
        %v1182 = vpack.c.b16 %v1014, %v1008
        %v1183 = vpack.c.b16 %v1015, %v1009
        %v1184 = vpack.c.b16 %v1016, %v1010
        %v1185 = vpack.c.b16 %v1017, %v1011
        %v1186 = vpack.c.b16 %v1024, %v1018
        %v1187 = vpack.c.b16 %v1025, %v1019
        %v1188 = vpack.c.b16 %v1026, %v1020
        %v1189 = vpack.c.b16 %v1027, %v1021
        %v1190 = vpack.c.b16 %v1028, %v1022
        %v1191 = vpack.c.b16 %v1029, %v1023
        %v1192 = vpack.c.b16 %v1036, %v1030
        %v1193 = vpack.c.b16 %v1037, %v1031
        %v1194 = vpack.c.b16 %v1038, %v1032
        %v1195 = vpack.c.b16 %v1039, %v1033
        %v1196 = vpack.c.b16 %v1040, %v1034
        %v1197 = vpack.c.b16 %v1041, %v1035
        %v1198 = vpack.c.b16 %v1048, %v1042
        %v1199 = vpack.c.b16 %v1049, %v1043
        %v1200 = vpack.c.b16 %v1050, %v1044
        %v1201 = vpack.c.b16 %v1051, %v1045
        %v1202 = vpack.c.b16 %v1052, %v1046
        %v1203 = vpack.c.b16 %v1053, %v1047
        %v1204 = vpack.c.b16 %v1060, %v1054
        %v1205 = vpack.c.b16 %v1061, %v1055
        %v1206 = vpack.c.b16 %v1062, %v1056
        %v1207 = vpack.c.b16 %v1063, %v1057
        %v1208 = vpack.c.b16 %v1064, %v1058
        %v1209 = vpack.c.b16 %v1065, %v1059
        %v1450 = vunpack.c.l.b16 %v538
        %v1451 = vunpack.c.l.b16 %v539
        %v1452 = vunpack.c.l.b16 %v540
        %v1453 = vunpack.c.l.b16 %v541
        %v1454 = vunpack.c.l.b16 %v542
        %v1455 = vunpack.c.l.b16 %v543
        %v1456 = vunpack.c.l.b16 %v544
        %v1457 = vunpack.c.l.b16 %v545
        %v1458 = vunpack.c.l.b16 %v546
        %v1459 = vunpack.c.l.b16 %v547
        %v1460 = vunpack.c.l.b16 %v548
        %v1461 = vunpack.c.l.b16 %v549
        %v1462 = vunpack.c.l.b16 %v550
        %v1463 = vunpack.c.l.b16 %v551
        %v1464 = vunpack.c.l.b16 %v552
        %v1465 = vunpack.c.l.b16 %v553
        %v1466 = vunpack.c.l.b16 %v554
        %v1467 = vunpack.c.l.b16 %v555
        %v1468 = vunpack.c.l.b16 %v556
        %v1469 = vunpack.c.l.b16 %v557
        %v1470 = vunpack.c.l.b16 %v558
        %v1471 = vunpack.c.l.b16 %v559
        %v1472 = vunpack.c.l.b16 %v560
        %v1473 = vunpack.c.l.b16 %v561
        %v1474 = vunpack.c.l.b16 %v562
        %v1475 = vunpack.c.l.b16 %v563
        %v1476 = vunpack.c.l.b16 %v564
        %v1477 = vunpack.c.l.b16 %v565
        %v1478 = vunpack.c.l.b16 %v566
        %v1479 = vunpack.c.l.b16 %v567
        %v1480 = vunpack.c.l.b16 %v568
        %v1481 = vunpack.c.l.b16 %v569
        %v1482 = vunpack.c.l.b16 %v570
        %v1483 = vunpack.c.l.b16 %v571
        %v1484 = vunpack.c.l.b16 %v572
        %v1485 = vunpack.c.l.b16 %v573
        %v1486 = vunpack.c.l.b16 %v574
        %v1487 = vunpack.c.l.b16 %v575
        %v1488 = vunpack.c.l.b16 %v576
        %v1489 = vunpack.c.l.b16 %v577
        %v1490 = vunpack.c.l.b16 %v578
        %v1491 = vunpack.c.l.b16 %v579
        %v1492 = vunpack.c.l.b16 %v580
        %v1493 = vunpack.c.l.b16 %v581
        %v1494 = vunpack.c.l.b16 %v582
        %v1495 = vunpack.c.l.b16 %v583
        %v1496 = vunpack.c.l.b16 %v584
        %v1497 = vunpack.c.l.b16 %v585
        %v1498 = vunpack.c.l.b16 %v586
        %v1499 = vunpack.c.l.b16 %v587
        %v1500 = vunpack.c.l.b16 %v588
        %v1501 = vunpack.c.l.b16 %v589
        %v1502 = vunpack.c.l.b16 %v590
        %v1503 = vunpack.c.l.b16 %v591
        %v1504 = vunpack.c.l.b16 %v592
        %v1505 = vunpack.c.l.b16 %v593
        %v1506 = vunpack.c.l.b16 %v594
        %v1507 = vunpack.c.l.b16 %v595
        %v1508 = vunpack.c.l.b16 %v596
        %v1509 = vunpack.c.l.b16 %v597
        %v1510 = vunpack.c.l.b16 %v598
        %v1511 = vunpack.c.l.b16 %v599
        %v1512 = vunpack.c.l.b16 %v600
        %v1513 = vunpack.c.l.b16 %v601
        %v1514 = vunpack.c.l.b16 %v602
        %v1515 = vunpack.c.l.b16 %v603
        %v1516 = vunpack.c.l.b16 %v604
        %v1517 = vunpack.c.l.b16 %v605
        %v1518 = vunpack.c.l.b16 %v606
        %v1519 = vunpack.c.l.b16 %v607
        %v1520 = vunpack.c.l.b16 %v608
        %v1521 = vunpack.c.l.b16 %v609
        %v1522 = vunpack.c.l.b16 %v610
        %v1523 = vunpack.c.l.b16 %v611
        %v1524 = vunpack.c.l.b16 %v612
        %v1525 = vunpack.c.l.b16 %v613
        %v1526 = vunpack.c.l.b16 %v614
        %v1527 = vunpack.c.l.b16 %v615
        %v1528 = vunpack.c.l.b16 %v616
        %v1529 = vunpack.c.l.b16 %v617
        %v1530 = vunpack.c.l.b16 %v618
        %v1531 = vunpack.c.l.b16 %v619
        %v1532 = vunpack.c.l.b16 %v620
        %v1533 = vunpack.c.l.b16 %v621
        %v1534 = vunpack.c.l.b16 %v622
        %v1535 = vunpack.c.l.b16 %v623
        %v1536 = vunpack.c.l.b16 %v624
        %v1537 = vunpack.c.l.b16 %v625
        %v1538 = vunpack.c.l.b16 %v626
        %v1539 = vunpack.c.l.b16 %v627
        %v1540 = vunpack.c.l.b16 %v628
        %v1541 = vunpack.c.l.b16 %v629
        %v1542 = vunpack.c.l.b16 %v630
        %v1543 = vunpack.c.l.b16 %v631
        %v1544 = vunpack.c.l.b16 %v632
        %v1545 = vunpack.c.l.b16 %v633
        %v1546 = vpack.c.b16 %v1451, %v1450
        %v1547 = vpack.c.b16 %v1453, %v1452
        %v1548 = vpack.c.b16 %v1455, %v1454
        %v1549 = vpack.c.b16 %v1457, %v1456
        %v1550 = vpack.c.b16 %v1459, %v1458
        %v1551 = vpack.c.b16 %v1461, %v1460
        %v1552 = vpack.c.b16 %v1463, %v1462
        %v1553 = vpack.c.b16 %v1465, %v1464
        %v1554 = vpack.c.b16 %v1467, %v1466
        %v1555 = vpack.c.b16 %v1469, %v1468
        %v1556 = vpack.c.b16 %v1471, %v1470
        %v1557 = vpack.c.b16 %v1473, %v1472
        %v1558 = vpack.c.b16 %v1475, %v1474
        %v1559 = vpack.c.b16 %v1477, %v1476
        %v1560 = vpack.c.b16 %v1479, %v1478
        %v1561 = vpack.c.b16 %v1481, %v1480
        %v1562 = vpack.c.b16 %v1483, %v1482
        %v1563 = vpack.c.b16 %v1485, %v1484
        %v1564 = vpack.c.b16 %v1487, %v1486
        %v1565 = vpack.c.b16 %v1489, %v1488
        %v1566 = vpack.c.b16 %v1491, %v1490
        %v1567 = vpack.c.b16 %v1493, %v1492
        %v1568 = vpack.c.b16 %v1495, %v1494
        %v1569 = vpack.c.b16 %v1497, %v1496
        %v1570 = vpack.c.b16 %v1499, %v1498
        %v1571 = vpack.c.b16 %v1501, %v1500
        %v1572 = vpack.c.b16 %v1503, %v1502
        %v1573 = vpack.c.b16 %v1505, %v1504
        %v1574 = vpack.c.b16 %v1507, %v1506
        %v1575 = vpack.c.b16 %v1509, %v1508
        %v1576 = vpack.c.b16 %v1511, %v1510
        %v1577 = vpack.c.b16 %v1513, %v1512
        %v1578 = vpack.c.b16 %v1515, %v1514
        %v1579 = vpack.c.b16 %v1517, %v1516
        %v1580 = vpack.c.b16 %v1519, %v1518
        %v1581 = vpack.c.b16 %v1521, %v1520
        %v1582 = vpack.c.b16 %v1523, %v1522
        %v1583 = vpack.c.b16 %v1525, %v1524
        %v1584 = vpack.c.b16 %v1527, %v1526
        %v1585 = vpack.c.b16 %v1529, %v1528
        %v1586 = vpack.c.b16 %v1531, %v1530
        %v1587 = vpack.c.b16 %v1533, %v1532
        %v1588 = vpack.c.b16 %v1535, %v1534
        %v1589 = vpack.c.b16 %v1537, %v1536
        %v1590 = vpack.c.b16 %v1539, %v1538
        %v1591 = vpack.c.b16 %v1541, %v1540
        %v1592 = vpack.c.b16 %v1543, %v1542
        %v1593 = vpack.c.b16 %v1545, %v1544
        %1642 = vmatprep.subr.bf16.mxu0 0
        %1643 = vmatpush1.bf16.msra.mxu0 %v1546
        %1644 = vmatprep.subr.bf16.mxu0 0
        %1645 = vmatpush1.bf16.msra.mxu0 %v1547
        %1646 = vmatprep.subr.bf16.mxu0 0
        %1647 = vmatpush1.bf16.msra.mxu0 %v1548
        %1648 = vmatprep.subr.bf16.mxu0 0
        %1649 = vmatpush1.bf16.msra.mxu0 %v1549
        %1650 = vmatprep.subr.bf16.mxu0 0
        %1651 = vmatpush1.bf16.msra.mxu0 %v1550
        %1652 = vmatprep.subr.bf16.mxu0 0
        %1653 = vmatpush1.bf16.msra.mxu0 %v1551
        %1654 = vmatprep.subr.bf16.mxu0 0
        %1655 = vmatpush1.bf16.msra.mxu0 %v1552
        %1656 = vmatprep.subr.bf16.mxu0 0
        %1657 = vmatpush1.bf16.msra.mxu0 %v1553
        %1658 = vmatprep.subr.bf16.mxu0 0
        %1659 = vmatpush1.bf16.msra.mxu0 %v1554
        %1660 = vmatprep.subr.bf16.mxu0 0
        %1661 = vmatpush1.bf16.msra.mxu0 %v1555
        %1662 = vmatprep.subr.bf16.mxu0 0
        %1663 = vmatpush1.bf16.msra.mxu0 %v1556
        %1664 = vmatprep.subr.bf16.mxu0 0
        %1665 = vmatpush1.bf16.msra.mxu0 %v1557
        %1666 = vmatprep.subr.bf16.mxu0 0
        %1667 = vmatpush1.bf16.msra.mxu0 %v1558
        %1668 = vmatprep.subr.bf16.mxu0 0
        %1669 = vmatpush1.bf16.msra.mxu0 %v1559
        %1670 = vmatprep.subr.bf16.mxu0 0
        %1671 = vmatpush1.bf16.msra.mxu0 %v1560
        %1672 = vmatprep.subr.bf16.mxu0 0
        %1673 = vmatpush1.bf16.msra.mxu0 %v1561
        %1674 = vmatprep.mubr.bf16.mxu0 %v1067
        %1675 = vmatmul.mubr.bf16.gmra.mrb[0].mxu0 %v1066
        %v1676 = vpop.f32.mrb[0].mxu0
        %v1677 = vadd.f32 0.0, %v1676
        %v1678 = vpop.f32.mrb[0].mxu0
        %v1679 = vpop.f32.mrb[0].mxu0
        %v1680 = vadd.f32 0.0, %v1679
        %v1681 = vpop.f32.mrb[0].mxu0
        %1682 = vmatprep.mubr.bf16.mxu0 %v1073
        %1683 = vmatmul.mubr.bf16.gmra.mrb[0].mxu0 %v1072
        %v1684 = vpop.f32.mrb[0].mxu0
        %v1685 = vadd.f32 0.0, %v1684
        %v1686 = vpop.f32.mrb[0].mxu0
        %v1687 = vpop.f32.mrb[0].mxu0
        %v1688 = vadd.f32 0.0, %v1687
        %v1689 = vpop.f32.mrb[0].mxu0
        %1690 = vmatprep.mubr.bf16.mxu0 %v1079
        %1691 = vmatmul.mubr.bf16.gmra.mrb[0].mxu0 %v1078
        %v1692 = vpop.f32.mrb[0].mxu0
        %v1693 = vadd.f32 0.0, %v1692
        %v1694 = vpop.f32.mrb[0].mxu0
        %v1695 = vpop.f32.mrb[0].mxu0
        %v1696 = vadd.f32 0.0, %v1695
        %v1697 = vpop.f32.mrb[0].mxu0
        %1698 = vmatprep.mubr.bf16.mxu0 %v1085
        %1699 = vmatmul.mubr.bf16.gmra.mrb[0].mxu0 %v1084
        %v1700 = vpop.f32.mrb[0].mxu0
        %v1701 = vadd.f32 0.0, %v1700
        %v1702 = vpop.f32.mrb[0].mxu0
        %v1703 = vpop.f32.mrb[0].mxu0
        %v1704 = vadd.f32 0.0, %v1703
        %v1705 = vpop.f32.mrb[0].mxu0
        %1706 = vmatprep.mubr.bf16.mxu0 %v1091
        %1707 = vmatmul.mubr.bf16.gmra.mrb[0].mxu0 %v1090
        %v1708 = vpop.f32.mrb[0].mxu0
        %v1709 = vadd.f32 0.0, %v1708
        %v1710 = vpop.f32.mrb[0].mxu0
        %v1711 = vpop.f32.mrb[0].mxu0
        %v1712 = vadd.f32 0.0, %v1711
        %v1713 = vpop.f32.mrb[0].mxu0
        %1714 = vmatprep.mubr.bf16.mxu0 %v1097
        %1715 = vmatmul.mubr.bf16.gmra.mrb[0].mxu0 %v1096
        %v1716 = vpop.f32.mrb[0].mxu0
        %v1717 = vadd.f32 0.0, %v1716
        %v1718 = vpop.f32.mrb[0].mxu0
        %v1719 = vpop.f32.mrb[0].mxu0
        %v1720 = vadd.f32 0.0, %v1719
        %v1721 = vpop.f32.mrb[0].mxu0
        %1722 = vmatprep.mubr.bf16.mxu0 %v1103
        %1723 = vmatmul.mubr.bf16.gmra.mrb[0].mxu0 %v1102
        %v1724 = vpop.f32.mrb[0].mxu0
        %v1725 = vadd.f32 0.0, %v1724
        %v1726 = vpop.f32.mrb[0].mxu0
        %v1727 = vpop.f32.mrb[0].mxu0
        %v1728 = vadd.f32 0.0, %v1727
        %v1729 = vpop.f32.mrb[0].mxu0
        %1730 = vmatprep.mubr.bf16.mxu0 %v1109
        %1731 = vmatmul.mubr.bf16.gmra.mrb[0].mxu0 %v1108
        %v1732 = vpop.f32.mrb[0].mxu0
        %v1733 = vadd.f32 0.0, %v1732
        %v1734 = vpop.f32.mrb[0].mxu0
        %v1735 = vpop.f32.mrb[0].mxu0
        %v1736 = vadd.f32 0.0, %v1735
        %v1737 = vpop.f32.mrb[0].mxu0
        %1738 = vmatprep.mubr.bf16.mxu0 %v1115
        %1739 = vmatmul.mubr.bf16.gmra.mrb[0].mxu0 %v1114
        %v1740 = vpop.f32.mrb[0].mxu0
        %v1741 = vadd.f32 0.0, %v1740
        %v1742 = vpop.f32.mrb[0].mxu0
        %v1743 = vpop.f32.mrb[0].mxu0
        %v1744 = vadd.f32 0.0, %v1743
        %v1745 = vpop.f32.mrb[0].mxu0
        %1746 = vmatprep.mubr.bf16.mxu0 %v1121
        %1747 = vmatmul.mubr.bf16.gmra.mrb[0].mxu0 %v1120
        %v1748 = vpop.f32.mrb[0].mxu0
        %v1749 = vadd.f32 0.0, %v1748
        %v1750 = vpop.f32.mrb[0].mxu0
        %v1751 = vpop.f32.mrb[0].mxu0
        %v1752 = vadd.f32 0.0, %v1751
        %v1753 = vpop.f32.mrb[0].mxu0
        %1754 = vmatprep.mubr.bf16.mxu0 %v1127
        %1755 = vmatmul.mubr.bf16.gmra.mrb[0].mxu0 %v1126
        %v1756 = vpop.f32.mrb[0].mxu0
        %v1757 = vadd.f32 0.0, %v1756
        %v1758 = vpop.f32.mrb[0].mxu0
        %v1759 = vpop.f32.mrb[0].mxu0
        %v1760 = vadd.f32 0.0, %v1759
        %v1761 = vpop.f32.mrb[0].mxu0
        %1762 = vmatprep.mubr.bf16.mxu0 %v1133
        %1763 = vmatmul.mubr.bf16.gmra.mrb[0].mxu0 %v1132
        %v1764 = vpop.f32.mrb[0].mxu0
        %v1765 = vadd.f32 0.0, %v1764
        %v1766 = vpop.f32.mrb[0].mxu0
        %v1767 = vpop.f32.mrb[0].mxu0
        %v1768 = vadd.f32 0.0, %v1767
        %v1769 = vpop.f32.mrb[0].mxu0
        %1770 = vmatprep.mubr.bf16.mxu0 %v1139
        %1771 = vmatmul.mubr.bf16.gmra.mrb[0].mxu0 %v1138
        %v1772 = vpop.f32.mrb[0].mxu0
        %v1773 = vadd.f32 0.0, %v1772
        %v1774 = vpop.f32.mrb[0].mxu0
        %v1775 = vpop.f32.mrb[0].mxu0
        %v1776 = vadd.f32 0.0, %v1775
        %v1777 = vpop.f32.mrb[0].mxu0
        %1778 = vmatprep.mubr.bf16.mxu0 %v1145
        %1779 = vmatmul.mubr.bf16.gmra.mrb[0].mxu0 %v1144
        %v1780 = vpop.f32.mrb[0].mxu0
        %v1781 = vadd.f32 0.0, %v1780
        %v1782 = vpop.f32.mrb[0].mxu0
        %v1783 = vpop.f32.mrb[0].mxu0
        %v1784 = vadd.f32 0.0, %v1783
        %v1785 = vpop.f32.mrb[0].mxu0
        %1786 = vmatprep.mubr.bf16.mxu0 %v1151
        %1787 = vmatmul.mubr.bf16.gmra.mrb[0].mxu0 %v1150
        %v1788 = vpop.f32.mrb[0].mxu0
        %v1789 = vadd.f32 0.0, %v1788
        %v1790 = vpop.f32.mrb[0].mxu0
        %v1791 = vpop.f32.mrb[0].mxu0
        %v1792 = vadd.f32 0.0, %v1791
        %v1793 = vpop.f32.mrb[0].mxu0
        %1794 = vmatprep.mubr.bf16.mxu0 %v1157
        %1795 = vmatmul.mubr.bf16.gmra.mrb[0].mxu0 %v1156
        %v1796 = vpop.f32.mrb[0].mxu0
        %v1797 = vadd.f32 0.0, %v1796
        %v1798 = vpop.f32.mrb[0].mxu0
        %v1799 = vpop.f32.mrb[0].mxu0
        %v1800 = vadd.f32 0.0, %v1799
        %v1801 = vpop.f32.mrb[0].mxu0
        %1802 = vmatprep.mubr.bf16.mxu0 %v1163
        %1803 = vmatmul.mubr.bf16.gmra.mrb[0].mxu0 %v1162
        %v1804 = vpop.f32.mrb[0].mxu0
        %v1805 = vadd.f32 0.0, %v1804
        %v1806 = vpop.f32.mrb[0].mxu0
        %v1807 = vpop.f32.mrb[0].mxu0
        %v1808 = vadd.f32 0.0, %v1807
        %v1809 = vpop.f32.mrb[0].mxu0
        %1810 = vmatprep.mubr.bf16.mxu0 %v1169
        %1811 = vmatmul.mubr.bf16.gmra.mrb[0].mxu0 %v1168
        %v1812 = vpop.f32.mrb[0].mxu0
        %v1813 = vadd.f32 0.0, %v1812
        %v1814 = vpop.f32.mrb[0].mxu0
        %v1815 = vpop.f32.mrb[0].mxu0
        %v1816 = vadd.f32 0.0, %v1815
        %v1817 = vpop.f32.mrb[0].mxu0
        %1818 = vmatprep.mubr.bf16.mxu0 %v1175
        %1819 = vmatmul.mubr.bf16.gmra.mrb[0].mxu0 %v1174
        %v1820 = vpop.f32.mrb[0].mxu0
        %v1821 = vadd.f32 0.0, %v1820
        %v1822 = vpop.f32.mrb[0].mxu0
        %v1823 = vpop.f32.mrb[0].mxu0
        %v1824 = vadd.f32 0.0, %v1823
        %v1825 = vpop.f32.mrb[0].mxu0
        %1826 = vmatprep.mubr.bf16.mxu0 %v1181
        %1827 = vmatmul.mubr.bf16.gmra.mrb[0].mxu0 %v1180
        %v1828 = vpop.f32.mrb[0].mxu0
        %v1829 = vadd.f32 0.0, %v1828
        %v1830 = vpop.f32.mrb[0].mxu0
        %v1831 = vpop.f32.mrb[0].mxu0
        %v1832 = vadd.f32 0.0, %v1831
        %v1833 = vpop.f32.mrb[0].mxu0
        %1834 = vmatprep.mubr.bf16.mxu0 %v1187
        %1835 = vmatmul.mubr.bf16.gmra.mrb[0].mxu0 %v1186
        %v1836 = vpop.f32.mrb[0].mxu0
        %v1837 = vadd.f32 0.0, %v1836
        %v1838 = vpop.f32.mrb[0].mxu0
        %v1839 = vpop.f32.mrb[0].mxu0
        %v1840 = vadd.f32 0.0, %v1839
        %v1841 = vpop.f32.mrb[0].mxu0
        %1842 = vmatprep.mubr.bf16.mxu0 %v1193
        %1843 = vmatmul.mubr.bf16.gmra.mrb[0].mxu0 %v1192
        %v1844 = vpop.f32.mrb[0].mxu0
        %v1845 = vadd.f32 0.0, %v1844
        %v1846 = vpop.f32.mrb[0].mxu0
        %v1847 = vpop.f32.mrb[0].mxu0
        %v1848 = vadd.f32 0.0, %v1847
        %v1849 = vpop.f32.mrb[0].mxu0
        %1850 = vmatprep.mubr.bf16.mxu0 %v1199
        %1851 = vmatmul.mubr.bf16.gmra.mrb[0].mxu0 %v1198
        %v1852 = vpop.f32.mrb[0].mxu0
        %v1853 = vadd.f32 0.0, %v1852
        %v1854 = vpop.f32.mrb[0].mxu0
        %v1855 = vpop.f32.mrb[0].mxu0
        %v1856 = vadd.f32 0.0, %v1855
        %v1857 = vpop.f32.mrb[0].mxu0
        %1858 = vmatprep.mubr.bf16.mxu0 %v1205
        %1859 = vmatmul.mubr.bf16.gmra.mrb[0].mxu0 %v1204
        %v1860 = vpop.f32.mrb[0].mxu0
        %v1861 = vadd.f32 0.0, %v1860
        %v1862 = vpop.f32.mrb[0].mxu0
        %v1863 = vpop.f32.mrb[0].mxu0
        %v1864 = vadd.f32 0.0, %v1863
        %v1865 = vpop.f32.mrb[0].mxu0
        %1866 = vdwg.mxu0
        %1867 = vmatprep.subr.bf16.mxu0 0
        %1868 = vmatpush1.bf16.msra.mxu0 %v1562
        %1869 = vmatprep.subr.bf16.mxu0 0
        %1870 = vmatpush1.bf16.msra.mxu0 %v1563
        %1871 = vmatprep.subr.bf16.mxu0 0
        %1872 = vmatpush1.bf16.msra.mxu0 %v1564
        %1873 = vmatprep.subr.bf16.mxu0 0
        %1874 = vmatpush1.bf16.msra.mxu0 %v1565
        %1875 = vmatprep.subr.bf16.mxu0 0
        %1876 = vmatpush1.bf16.msra.mxu0 %v1566
        %1877 = vmatprep.subr.bf16.mxu0 0
        %1878 = vmatpush1.bf16.msra.mxu0 %v1567
        %1879 = vmatprep.subr.bf16.mxu0 0
        %1880 = vmatpush1.bf16.msra.mxu0 %v1568
        %1881 = vmatprep.subr.bf16.mxu0 0
        %1882 = vmatpush1.bf16.msra.mxu0 %v1569
        %1883 = vmatprep.subr.bf16.mxu0 0
        %1884 = vmatpush1.bf16.msra.mxu0 %v1570
        %1885 = vmatprep.subr.bf16.mxu0 0
        %1886 = vmatpush1.bf16.msra.mxu0 %v1571
        %1887 = vmatprep.subr.bf16.mxu0 0
        %1888 = vmatpush1.bf16.msra.mxu0 %v1572
        %1889 = vmatprep.subr.bf16.mxu0 0
        %1890 = vmatpush1.bf16.msra.mxu0 %v1573
        %1891 = vmatprep.subr.bf16.mxu0 0
        %1892 = vmatpush1.bf16.msra.mxu0 %v1574
        %1893 = vmatprep.subr.bf16.mxu0 0
        %1894 = vmatpush1.bf16.msra.mxu0 %v1575
        %1895 = vmatprep.subr.bf16.mxu0 0
        %1896 = vmatpush1.bf16.msra.mxu0 %v1576
        %1897 = vmatprep.subr.bf16.mxu0 0
        %1898 = vmatpush1.bf16.msra.mxu0 %v1577
        %1899 = vmatprep.mubr.bf16.mxu0 %v1069
        %1900 = vmatmul.mubr.bf16.gmra.mrb[0].mxu0 %v1068
        %v1901 = vpop.f32.mrb[0].mxu0
        %v1902 = vadd.f32 %v1677, %v1901
        %v1903 = vpop.f32.mrb[0].mxu0
        %v1904 = vpop.f32.mrb[0].mxu0
        %v1905 = vadd.f32 %v1680, %v1904
        %v1906 = vpop.f32.mrb[0].mxu0
        %1907 = vmatprep.mubr.bf16.mxu0 %v1075
        %1908 = vmatmul.mubr.bf16.gmra.mrb[0].mxu0 %v1074
        %v1909 = vpop.f32.mrb[0].mxu0
        %v1910 = vadd.f32 %v1685, %v1909
        %v1911 = vpop.f32.mrb[0].mxu0
        %v1912 = vpop.f32.mrb[0].mxu0
        %v1913 = vadd.f32 %v1688, %v1912
        %v1914 = vpop.f32.mrb[0].mxu0
        %1915 = vmatprep.mubr.bf16.mxu0 %v1081
        %1916 = vmatmul.mubr.bf16.gmra.mrb[0].mxu0 %v1080
        %v1917 = vpop.f32.mrb[0].mxu0
        %v1918 = vadd.f32 %v1693, %v1917
        %v1919 = vpop.f32.mrb[0].mxu0
        %v1920 = vpop.f32.mrb[0].mxu0
        %v1921 = vadd.f32 %v1696, %v1920
        %v1922 = vpop.f32.mrb[0].mxu0
        %1923 = vmatprep.mubr.bf16.mxu0 %v1087
        %1924 = vmatmul.mubr.bf16.gmra.mrb[0].mxu0 %v1086
        %v1925 = vpop.f32.mrb[0].mxu0
        %v1926 = vadd.f32 %v1701, %v1925
        %v1927 = vpop.f32.mrb[0].mxu0
        %v1928 = vpop.f32.mrb[0].mxu0
        %v1929 = vadd.f32 %v1704, %v1928
        %v1930 = vpop.f32.mrb[0].mxu0
        %1931 = vmatprep.mubr.bf16.mxu0 %v1093
        %1932 = vmatmul.mubr.bf16.gmra.mrb[0].mxu0 %v1092
        %v1933 = vpop.f32.mrb[0].mxu0
        %v1934 = vadd.f32 %v1709, %v1933
        %v1935 = vpop.f32.mrb[0].mxu0
        %v1936 = vpop.f32.mrb[0].mxu0
        %v1937 = vadd.f32 %v1712, %v1936
        %v1938 = vpop.f32.mrb[0].mxu0
        %1939 = vmatprep.mubr.bf16.mxu0 %v1099
        %1940 = vmatmul.mubr.bf16.gmra.mrb[0].mxu0 %v1098
        %v1941 = vpop.f32.mrb[0].mxu0
        %v1942 = vadd.f32 %v1717, %v1941
        %v1943 = vpop.f32.mrb[0].mxu0
        %v1944 = vpop.f32.mrb[0].mxu0
        %v1945 = vadd.f32 %v1720, %v1944
        %v1946 = vpop.f32.mrb[0].mxu0
        %1947 = vmatprep.mubr.bf16.mxu0 %v1105
        %1948 = vmatmul.mubr.bf16.gmra.mrb[0].mxu0 %v1104
        %v1949 = vpop.f32.mrb[0].mxu0
        %v1950 = vadd.f32 %v1725, %v1949
        %v1951 = vpop.f32.mrb[0].mxu0
        %v1952 = vpop.f32.mrb[0].mxu0
        %v1953 = vadd.f32 %v1728, %v1952
        %v1954 = vpop.f32.mrb[0].mxu0
        %1955 = vmatprep.mubr.bf16.mxu0 %v1111
        %1956 = vmatmul.mubr.bf16.gmra.mrb[0].mxu0 %v1110
        %v1957 = vpop.f32.mrb[0].mxu0
        %v1958 = vadd.f32 %v1733, %v1957
        %v1959 = vpop.f32.mrb[0].mxu0
        %v1960 = vpop.f32.mrb[0].mxu0
        %v1961 = vadd.f32 %v1736, %v1960
        %v1962 = vpop.f32.mrb[0].mxu0
        %1963 = vmatprep.mubr.bf16.mxu0 %v1117
        %1964 = vmatmul.mubr.bf16.gmra.mrb[0].mxu0 %v1116
        %v1965 = vpop.f32.mrb[0].mxu0
        %v1966 = vadd.f32 %v1741, %v1965
        %v1967 = vpop.f32.mrb[0].mxu0
        %v1968 = vpop.f32.mrb[0].mxu0
        %v1969 = vadd.f32 %v1744, %v1968
        %v1970 = vpop.f32.mrb[0].mxu0
        %1971 = vmatprep.mubr.bf16.mxu0 %v1123
        %1972 = vmatmul.mubr.bf16.gmra.mrb[0].mxu0 %v1122
        %v1973 = vpop.f32.mrb[0].mxu0
        %v1974 = vadd.f32 %v1749, %v1973
        %v1975 = vpop.f32.mrb[0].mxu0
        %v1976 = vpop.f32.mrb[0].mxu0
        %v1977 = vadd.f32 %v1752, %v1976
        %v1978 = vpop.f32.mrb[0].mxu0
        %1979 = vmatprep.mubr.bf16.mxu0 %v1129
        %1980 = vmatmul.mubr.bf16.gmra.mrb[0].mxu0 %v1128
        %v1981 = vpop.f32.mrb[0].mxu0
        %v1982 = vadd.f32 %v1757, %v1981
        %v1983 = vpop.f32.mrb[0].mxu0
        %v1984 = vpop.f32.mrb[0].mxu0
        %v1985 = vadd.f32 %v1760, %v1984
        %v1986 = vpop.f32.mrb[0].mxu0
        %1987 = vmatprep.mubr.bf16.mxu0 %v1135
        %1988 = vmatmul.mubr.bf16.gmra.mrb[0].mxu0 %v1134
        %v1989 = vpop.f32.mrb[0].mxu0
        %v1990 = vadd.f32 %v1765, %v1989
        %v1991 = vpop.f32.mrb[0].mxu0
        %v1992 = vpop.f32.mrb[0].mxu0
        %v1993 = vadd.f32 %v1768, %v1992
        %v1994 = vpop.f32.mrb[0].mxu0
        %1995 = vmatprep.mubr.bf16.mxu0 %v1141
        %1996 = vmatmul.mubr.bf16.gmra.mrb[0].mxu0 %v1140
        %v1997 = vpop.f32.mrb[0].mxu0
        %v1998 = vadd.f32 %v1773, %v1997
        %v1999 = vpop.f32.mrb[0].mxu0
        %v2000 = vpop.f32.mrb[0].mxu0
        %v2001 = vadd.f32 %v1776, %v2000
        %v2002 = vpop.f32.mrb[0].mxu0
        %2003 = vmatprep.mubr.bf16.mxu0 %v1147
        %2004 = vmatmul.mubr.bf16.gmra.mrb[0].mxu0 %v1146
        %v2005 = vpop.f32.mrb[0].mxu0
        %v2006 = vadd.f32 %v1781, %v2005
        %v2007 = vpop.f32.mrb[0].mxu0
        %v2008 = vpop.f32.mrb[0].mxu0
        %v2009 = vadd.f32 %v1784, %v2008
        %v2010 = vpop.f32.mrb[0].mxu0
        %2011 = vmatprep.mubr.bf16.mxu0 %v1153
        %2012 = vmatmul.mubr.bf16.gmra.mrb[0].mxu0 %v1152
        %v2013 = vpop.f32.mrb[0].mxu0
        %v2014 = vadd.f32 %v1789, %v2013
        %v2015 = vpop.f32.mrb[0].mxu0
        %v2016 = vpop.f32.mrb[0].mxu0
        %v2017 = vadd.f32 %v1792, %v2016
        %v2018 = vpop.f32.mrb[0].mxu0
        %2019 = vmatprep.mubr.bf16.mxu0 %v1159
        %2020 = vmatmul.mubr.bf16.gmra.mrb[0].mxu0 %v1158
        %v2021 = vpop.f32.mrb[0].mxu0
        %v2022 = vadd.f32 %v1797, %v2021
        %v2023 = vpop.f32.mrb[0].mxu0
        %v2024 = vpop.f32.mrb[0].mxu0
        %v2025 = vadd.f32 %v1800, %v2024
        %v2026 = vpop.f32.mrb[0].mxu0
        %2027 = vmatprep.mubr.bf16.mxu0 %v1165
        %2028 = vmatmul.mubr.bf16.gmra.mrb[0].mxu0 %v1164
        %v2029 = vpop.f32.mrb[0].mxu0
        %v2030 = vadd.f32 %v1805, %v2029
        %v2031 = vpop.f32.mrb[0].mxu0
        %v2032 = vpop.f32.mrb[0].mxu0
        %v2033 = vadd.f32 %v1808, %v2032
        %v2034 = vpop.f32.mrb[0].mxu0
        %2035 = vmatprep.mubr.bf16.mxu0 %v1171
        %2036 = vmatmul.mubr.bf16.gmra.mrb[0].mxu0 %v1170
        %v2037 = vpop.f32.mrb[0].mxu0
        %v2038 = vadd.f32 %v1813, %v2037
        %v2039 = vpop.f32.mrb[0].mxu0
        %v2040 = vpop.f32.mrb[0].mxu0
        %v2041 = vadd.f32 %v1816, %v2040
        %v2042 = vpop.f32.mrb[0].mxu0
        %2043 = vmatprep.mubr.bf16.mxu0 %v1177
        %2044 = vmatmul.mubr.bf16.gmra.mrb[0].mxu0 %v1176
        %v2045 = vpop.f32.mrb[0].mxu0
        %v2046 = vadd.f32 %v1821, %v2045
        %v2047 = vpop.f32.mrb[0].mxu0
        %v2048 = vpop.f32.mrb[0].mxu0
        %v2049 = vadd.f32 %v1824, %v2048
        %v2050 = vpop.f32.mrb[0].mxu0
        %2051 = vmatprep.mubr.bf16.mxu0 %v1183
        %2052 = vmatmul.mubr.bf16.gmra.mrb[0].mxu0 %v1182
        %v2053 = vpop.f32.mrb[0].mxu0
        %v2054 = vadd.f32 %v1829, %v2053
        %v2055 = vpop.f32.mrb[0].mxu0
        %v2056 = vpop.f32.mrb[0].mxu0
        %v2057 = vadd.f32 %v1832, %v2056
        %v2058 = vpop.f32.mrb[0].mxu0
        %2059 = vmatprep.mubr.bf16.mxu0 %v1189
        %2060 = vmatmul.mubr.bf16.gmra.mrb[0].mxu0 %v1188
        %v2061 = vpop.f32.mrb[0].mxu0
        %v2062 = vadd.f32 %v1837, %v2061
        %v2063 = vpop.f32.mrb[0].mxu0
        %v2064 = vpop.f32.mrb[0].mxu0
        %v2065 = vadd.f32 %v1840, %v2064
        %v2066 = vpop.f32.mrb[0].mxu0
        %2067 = vmatprep.mubr.bf16.mxu0 %v1195
        %2068 = vmatmul.mubr.bf16.gmra.mrb[0].mxu0 %v1194
        %v2069 = vpop.f32.mrb[0].mxu0
        %v2070 = vadd.f32 %v1845, %v2069
        %v2071 = vpop.f32.mrb[0].mxu0
        %v2072 = vpop.f32.mrb[0].mxu0
        %v2073 = vadd.f32 %v1848, %v2072
        %v2074 = vpop.f32.mrb[0].mxu0
        %2075 = vmatprep.mubr.bf16.mxu0 %v1201
        %2076 = vmatmul.mubr.bf16.gmra.mrb[0].mxu0 %v1200
        %v2077 = vpop.f32.mrb[0].mxu0
        %v2078 = vadd.f32 %v1853, %v2077
        %v2079 = vpop.f32.mrb[0].mxu0
        %v2080 = vpop.f32.mrb[0].mxu0
        %v2081 = vadd.f32 %v1856, %v2080
        %v2082 = vpop.f32.mrb[0].mxu0
        %2083 = vmatprep.mubr.bf16.mxu0 %v1207
        %2084 = vmatmul.mubr.bf16.gmra.mrb[0].mxu0 %v1206
        %v2085 = vpop.f32.mrb[0].mxu0
        %v2086 = vadd.f32 %v1861, %v2085
        %v2087 = vpop.f32.mrb[0].mxu0
        %v2088 = vpop.f32.mrb[0].mxu0
        %v2089 = vadd.f32 %v1864, %v2088
        %v2090 = vpop.f32.mrb[0].mxu0
        %2091 = vdwg.mxu0
        %2092 = vmatprep.subr.bf16.mxu0 0
        %2093 = vmatpush1.bf16.msra.mxu0 %v1578
        %2094 = vmatprep.subr.bf16.mxu0 0
        %2095 = vmatpush1.bf16.msra.mxu0 %v1579
        %2096 = vmatprep.subr.bf16.mxu0 0
        %2097 = vmatpush1.bf16.msra.mxu0 %v1580
        %2098 = vmatprep.subr.bf16.mxu0 0
        %2099 = vmatpush1.bf16.msra.mxu0 %v1581
        %2100 = vmatprep.subr.bf16.mxu0 0
        %2101 = vmatpush1.bf16.msra.mxu0 %v1582
        %2102 = vmatprep.subr.bf16.mxu0 0
        %2103 = vmatpush1.bf16.msra.mxu0 %v1583
        %2104 = vmatprep.subr.bf16.mxu0 0
        %2105 = vmatpush1.bf16.msra.mxu0 %v1584
        %2106 = vmatprep.subr.bf16.mxu0 0
        %2107 = vmatpush1.bf16.msra.mxu0 %v1585
        %2108 = vmatprep.subr.bf16.mxu0 0
        %2109 = vmatpush1.bf16.msra.mxu0 %v1586
        %2110 = vmatprep.subr.bf16.mxu0 0
        %2111 = vmatpush1.bf16.msra.mxu0 %v1587
        %2112 = vmatprep.subr.bf16.mxu0 0
        %2113 = vmatpush1.bf16.msra.mxu0 %v1588
        %2114 = vmatprep.subr.bf16.mxu0 0
        %2115 = vmatpush1.bf16.msra.mxu0 %v1589
        %2116 = vmatprep.subr.bf16.mxu0 0
        %2117 = vmatpush1.bf16.msra.mxu0 %v1590
        %2118 = vmatprep.subr.bf16.mxu0 0
        %2119 = vmatpush1.bf16.msra.mxu0 %v1591
        %2120 = vmatprep.subr.bf16.mxu0 0
        %2121 = vmatpush1.bf16.msra.mxu0 %v1592
        %2122 = vmatprep.subr.bf16.mxu0 0
        %2123 = vmatpush1.bf16.msra.mxu0 %v1593
        %2124 = vmatprep.mubr.bf16.mxu0 %v1071
        %2125 = vmatmul.mubr.bf16.gmra.mrb[0].mxu0 %v1070
        %v2126 = vpop.f32.mrb[0].mxu0
        %v2127 = vadd.f32 %v1902, %v2126
        %v2128 = vpop.f32.mrb[0].mxu0
        %v2129 = vpop.f32.mrb[0].mxu0
        %v2130 = vadd.f32 %v1905, %v2129
        %v2131 = vpop.f32.mrb[0].mxu0
        %2132 = vmatprep.mubr.bf16.mxu0 %v1077
        %2133 = vmatmul.mubr.bf16.gmra.mrb[0].mxu0 %v1076
        %v2134 = vpop.f32.mrb[0].mxu0
        %v2135 = vadd.f32 %v1910, %v2134
        %v2136 = vpop.f32.mrb[0].mxu0
        %v2137 = vpop.f32.mrb[0].mxu0
        %v2138 = vadd.f32 %v1913, %v2137
        %v2139 = vpop.f32.mrb[0].mxu0
        %2140 = vmatprep.mubr.bf16.mxu0 %v1083
        %2141 = vmatmul.mubr.bf16.gmra.mrb[0].mxu0 %v1082
        %v2142 = vpop.f32.mrb[0].mxu0
        %v2143 = vadd.f32 %v1918, %v2142
        %v2144 = vpop.f32.mrb[0].mxu0
        %v2145 = vpop.f32.mrb[0].mxu0
        %v2146 = vadd.f32 %v1921, %v2145
        %v2147 = vpop.f32.mrb[0].mxu0
        %2148 = vmatprep.mubr.bf16.mxu0 %v1089
        %2149 = vmatmul.mubr.bf16.gmra.mrb[0].mxu0 %v1088
        %v2150 = vpop.f32.mrb[0].mxu0
        %v2151 = vadd.f32 %v1926, %v2150
        %v2152 = vpop.f32.mrb[0].mxu0
        %v2153 = vpop.f32.mrb[0].mxu0
        %v2154 = vadd.f32 %v1929, %v2153
        %v2155 = vpop.f32.mrb[0].mxu0
        %2156 = vmatprep.mubr.bf16.mxu0 %v1095
        %2157 = vmatmul.mubr.bf16.gmra.mrb[0].mxu0 %v1094
        %v2158 = vpop.f32.mrb[0].mxu0
        %v2159 = vadd.f32 %v1934, %v2158
        %v2160 = vpop.f32.mrb[0].mxu0
        %v2161 = vpop.f32.mrb[0].mxu0
        %v2162 = vadd.f32 %v1937, %v2161
        %v2163 = vpop.f32.mrb[0].mxu0
        %2164 = vmatprep.mubr.bf16.mxu0 %v1101
        %2165 = vmatmul.mubr.bf16.gmra.mrb[0].mxu0 %v1100
        %v2166 = vpop.f32.mrb[0].mxu0
        %v2167 = vadd.f32 %v1942, %v2166
        %v2168 = vpop.f32.mrb[0].mxu0
        %v2169 = vpop.f32.mrb[0].mxu0
        %v2170 = vadd.f32 %v1945, %v2169
        %v2171 = vpop.f32.mrb[0].mxu0
        %2172 = vmatprep.mubr.bf16.mxu0 %v1107
        %2173 = vmatmul.mubr.bf16.gmra.mrb[0].mxu0 %v1106
        %v2174 = vpop.f32.mrb[0].mxu0
        %v2175 = vadd.f32 %v1950, %v2174
        %v2176 = vpop.f32.mrb[0].mxu0
        %v2177 = vpop.f32.mrb[0].mxu0
        %v2178 = vadd.f32 %v1953, %v2177
        %v2179 = vpop.f32.mrb[0].mxu0
        %2180 = vmatprep.mubr.bf16.mxu0 %v1113
        %2181 = vmatmul.mubr.bf16.gmra.mrb[0].mxu0 %v1112
        %v2182 = vpop.f32.mrb[0].mxu0
        %v2183 = vadd.f32 %v1958, %v2182
        %v2184 = vpop.f32.mrb[0].mxu0
        %v2185 = vpop.f32.mrb[0].mxu0
        %v2186 = vadd.f32 %v1961, %v2185
        %v2187 = vpop.f32.mrb[0].mxu0
        %2188 = vmatprep.mubr.bf16.mxu0 %v1119
        %2189 = vmatmul.mubr.bf16.gmra.mrb[0].mxu0 %v1118
        %v2190 = vpop.f32.mrb[0].mxu0
        %v2191 = vadd.f32 %v1966, %v2190
        %v2192 = vpop.f32.mrb[0].mxu0
        %v2193 = vpop.f32.mrb[0].mxu0
        %v2194 = vadd.f32 %v1969, %v2193
        %v2195 = vpop.f32.mrb[0].mxu0
        %2196 = vmatprep.mubr.bf16.mxu0 %v1125
        %2197 = vmatmul.mubr.bf16.gmra.mrb[0].mxu0 %v1124
        %v2198 = vpop.f32.mrb[0].mxu0
        %v2199 = vadd.f32 %v1974, %v2198
        %v2200 = vpop.f32.mrb[0].mxu0
        %v2201 = vpop.f32.mrb[0].mxu0
        %v2202 = vadd.f32 %v1977, %v2201
        %v2203 = vpop.f32.mrb[0].mxu0
        %2204 = vmatprep.mubr.bf16.mxu0 %v1131
        %2205 = vmatmul.mubr.bf16.gmra.mrb[0].mxu0 %v1130
        %v2206 = vpop.f32.mrb[0].mxu0
        %v2207 = vadd.f32 %v1982, %v2206
        %v2208 = vpop.f32.mrb[0].mxu0
        %v2209 = vpop.f32.mrb[0].mxu0
        %v2210 = vadd.f32 %v1985, %v2209
        %v2211 = vpop.f32.mrb[0].mxu0
        %2212 = vmatprep.mubr.bf16.mxu0 %v1137
        %2213 = vmatmul.mubr.bf16.gmra.mrb[0].mxu0 %v1136
        %v2214 = vpop.f32.mrb[0].mxu0
        %v2215 = vadd.f32 %v1990, %v2214
        %v2216 = vpop.f32.mrb[0].mxu0
        %v2217 = vpop.f32.mrb[0].mxu0
        %v2218 = vadd.f32 %v1993, %v2217
        %v2219 = vpop.f32.mrb[0].mxu0
        %2220 = vmatprep.mubr.bf16.mxu0 %v1143
        %2221 = vmatmul.mubr.bf16.gmra.mrb[0].mxu0 %v1142
        %v2222 = vpop.f32.mrb[0].mxu0
        %v2223 = vadd.f32 %v1998, %v2222
        %v2224 = vpop.f32.mrb[0].mxu0
        %v2225 = vpop.f32.mrb[0].mxu0
        %v2226 = vadd.f32 %v2001, %v2225
        %v2227 = vpop.f32.mrb[0].mxu0
        %2228 = vmatprep.mubr.bf16.mxu0 %v1149
        %2229 = vmatmul.mubr.bf16.gmra.mrb[0].mxu0 %v1148
        %v2230 = vpop.f32.mrb[0].mxu0
        %v2231 = vadd.f32 %v2006, %v2230
        %v2232 = vpop.f32.mrb[0].mxu0
        %v2233 = vpop.f32.mrb[0].mxu0
        %v2234 = vadd.f32 %v2009, %v2233
        %v2235 = vpop.f32.mrb[0].mxu0
        %2236 = vmatprep.mubr.bf16.mxu0 %v1155
        %2237 = vmatmul.mubr.bf16.gmra.mrb[0].mxu0 %v1154
        %v2238 = vpop.f32.mrb[0].mxu0
        %v2239 = vadd.f32 %v2014, %v2238
        %v2240 = vpop.f32.mrb[0].mxu0
        %v2241 = vpop.f32.mrb[0].mxu0
        %v2242 = vadd.f32 %v2017, %v2241
        %v2243 = vpop.f32.mrb[0].mxu0
        %2244 = vmatprep.mubr.bf16.mxu0 %v1161
        %2245 = vmatmul.mubr.bf16.gmra.mrb[0].mxu0 %v1160
        %v2246 = vpop.f32.mrb[0].mxu0
        %v2247 = vadd.f32 %v2022, %v2246
        %v2248 = vpop.f32.mrb[0].mxu0
        %v2249 = vpop.f32.mrb[0].mxu0
        %v2250 = vadd.f32 %v2025, %v2249
        %v2251 = vpop.f32.mrb[0].mxu0
        %2252 = vmatprep.mubr.bf16.mxu0 %v1167
        %2253 = vmatmul.mubr.bf16.gmra.mrb[0].mxu0 %v1166
        %v2254 = vpop.f32.mrb[0].mxu0
        %v2255 = vadd.f32 %v2030, %v2254
        %v2256 = vpop.f32.mrb[0].mxu0
        %v2257 = vpop.f32.mrb[0].mxu0
        %v2258 = vadd.f32 %v2033, %v2257
        %v2259 = vpop.f32.mrb[0].mxu0
        %2260 = vmatprep.mubr.bf16.mxu0 %v1173
        %2261 = vmatmul.mubr.bf16.gmra.mrb[0].mxu0 %v1172
        %v2262 = vpop.f32.mrb[0].mxu0
        %v2263 = vadd.f32 %v2038, %v2262
        %v2264 = vpop.f32.mrb[0].mxu0
        %v2265 = vpop.f32.mrb[0].mxu0
        %v2266 = vadd.f32 %v2041, %v2265
        %v2267 = vpop.f32.mrb[0].mxu0
        %2268 = vmatprep.mubr.bf16.mxu0 %v1179
        %2269 = vmatmul.mubr.bf16.gmra.mrb[0].mxu0 %v1178
        %v2270 = vpop.f32.mrb[0].mxu0
        %v2271 = vadd.f32 %v2046, %v2270
        %v2272 = vpop.f32.mrb[0].mxu0
        %v2273 = vpop.f32.mrb[0].mxu0
        %v2274 = vadd.f32 %v2049, %v2273
        %v2275 = vpop.f32.mrb[0].mxu0
        %2276 = vmatprep.mubr.bf16.mxu0 %v1185
        %2277 = vmatmul.mubr.bf16.gmra.mrb[0].mxu0 %v1184
        %v2278 = vpop.f32.mrb[0].mxu0
        %v2279 = vadd.f32 %v2054, %v2278
        %v2280 = vpop.f32.mrb[0].mxu0
        %v2281 = vpop.f32.mrb[0].mxu0
        %v2282 = vadd.f32 %v2057, %v2281
        %v2283 = vpop.f32.mrb[0].mxu0
        %2284 = vmatprep.mubr.bf16.mxu0 %v1191
        %2285 = vmatmul.mubr.bf16.gmra.mrb[0].mxu0 %v1190
        %v2286 = vpop.f32.mrb[0].mxu0
        %v2287 = vadd.f32 %v2062, %v2286
        %v2288 = vpop.f32.mrb[0].mxu0
        %v2289 = vpop.f32.mrb[0].mxu0
        %v2290 = vadd.f32 %v2065, %v2289
        %v2291 = vpop.f32.mrb[0].mxu0
        %2292 = vmatprep.mubr.bf16.mxu0 %v1197
        %2293 = vmatmul.mubr.bf16.gmra.mrb[0].mxu0 %v1196
        %v2294 = vpop.f32.mrb[0].mxu0
        %v2295 = vadd.f32 %v2070, %v2294
        %v2296 = vpop.f32.mrb[0].mxu0
        %v2297 = vpop.f32.mrb[0].mxu0
        %v2298 = vadd.f32 %v2073, %v2297
        %v2299 = vpop.f32.mrb[0].mxu0
        %2300 = vmatprep.mubr.bf16.mxu0 %v1203
        %2301 = vmatmul.mubr.bf16.gmra.mrb[0].mxu0 %v1202
        %v2302 = vpop.f32.mrb[0].mxu0
        %v2303 = vadd.f32 %v2078, %v2302
        %v2304 = vpop.f32.mrb[0].mxu0
        %v2305 = vpop.f32.mrb[0].mxu0
        %v2306 = vadd.f32 %v2081, %v2305
        %v2307 = vpop.f32.mrb[0].mxu0
        %2308 = vmatprep.mubr.bf16.mxu0 %v1209
        %2309 = vmatmul.mubr.bf16.gmra.mrb[0].mxu0 %v1208
        %v2310 = vpop.f32.mrb[0].mxu0
        %v2311 = vadd.f32 %v2086, %v2310
        %v2312 = vpop.f32.mrb[0].mxu0
        %v2313 = vpop.f32.mrb[0].mxu0
        %v2314 = vadd.f32 %v2089, %v2313
        %v2315 = vpop.f32.mrb[0].mxu0
        %2316 = vdwg.mxu0
        %v2317 = vrot.slane %v2127, 1
        %v2318 = vrot.slane %v2130, 1
        %v2319 = vrot.slane %v2135, 1
        %v2320 = vrot.slane %v2138, 1
        %v2321 = vrot.slane %v2143, 1
        %v2322 = vrot.slane %v2146, 1
        %v2323 = vrot.slane %v2151, 1
        %v2324 = vrot.slane %v2154, 1
        %v2325 = vrot.slane %v2159, 1
        %v2326 = vrot.slane %v2162, 1
        %v2327 = vrot.slane %v2167, 1
        %v2328 = vrot.slane %v2170, 1
        %v2329 = vrot.slane %v2175, 1
        %v2330 = vrot.slane %v2178, 1
        %v2331 = vrot.slane %v2183, 1
        %v2332 = vrot.slane %v2186, 1
        %v2333 = vrot.slane %v2191, 1
        %v2334 = vrot.slane %v2194, 1
        %v2335 = vrot.slane %v2199, 1
        %v2336 = vrot.slane %v2202, 1
        %v2337 = vrot.slane %v2207, 1
        %v2338 = vrot.slane %v2210, 1
        %v2339 = vrot.slane %v2215, 1
        %v2340 = vrot.slane %v2218, 1
        %v2341 = vrot.slane %v2223, 1
        %v2342 = vrot.slane %v2226, 1
        %v2343 = vrot.slane %v2231, 1
        %v2344 = vrot.slane %v2234, 1
        %v2345 = vrot.slane %v2239, 1
        %v2346 = vrot.slane %v2242, 1
        %v2347 = vrot.slane %v2247, 1
        %v2348 = vrot.slane %v2250, 1
        %v2349 = vrot.slane %v2255, 1
        %v2350 = vrot.slane %v2258, 1
        %v2351 = vrot.slane %v2263, 1
        %v2352 = vrot.slane %v2266, 1
        %v2353 = vrot.slane %v2271, 1
        %v2354 = vrot.slane %v2274, 1
        %v2355 = vrot.slane %v2279, 1
        %v2356 = vrot.slane %v2282, 1
        %v2357 = vrot.slane %v2287, 1
        %v2358 = vrot.slane %v2290, 1
        %v2359 = vrot.slane %v2295, 1
        %v2360 = vrot.slane %v2298, 1
        %v2361 = vrot.slane %v2303, 1
        %v2362 = vrot.slane %v2306, 1
        %v2363 = vrot.slane %v2311, 1
        %v2364 = vrot.slane %v2314, 1
        %v2365 = vlaneseq
        %v2366 = vshrl.u32 %v2365, 7
        %vm2367 = vcmp.lt.s32.totalorder %v2366, 7
        %v2368 = vsel %vm2367, %v2363, %v2364
        %v2369 = vsel %vm2367, %v2362, %v2363
        %v2370 = vsel %vm2367, %v2361, %v2362
        %v2371 = vsel %vm2367, %v2360, %v2361
        %v2372 = vsel %vm2367, %v2359, %v2360
        %v2373 = vsel %vm2367, %v2358, %v2359
        %v2374 = vsel %vm2367, %v2357, %v2358
        %v2375 = vsel %vm2367, %v2356, %v2357
        %v2376 = vsel %vm2367, %v2355, %v2356
        %v2377 = vsel %vm2367, %v2354, %v2355
        %v2378 = vsel %vm2367, %v2353, %v2354
        %v2379 = vsel %vm2367, %v2352, %v2353
        %v2380 = vsel %vm2367, %v2351, %v2352
        %v2381 = vsel %vm2367, %v2350, %v2351
        %v2382 = vsel %vm2367, %v2349, %v2350
        %v2383 = vsel %vm2367, %v2348, %v2349
        %v2384 = vsel %vm2367, %v2347, %v2348
        %v2385 = vsel %vm2367, %v2346, %v2347
        %v2386 = vsel %vm2367, %v2345, %v2346
        %v2387 = vsel %vm2367, %v2344, %v2345
        %v2388 = vsel %vm2367, %v2343, %v2344
        %v2389 = vsel %vm2367, %v2342, %v2343
        %v2390 = vsel %vm2367, %v2341, %v2342
        %v2391 = vsel %vm2367, %v2340, %v2341
        %v2392 = vsel %vm2367, %v2339, %v2340
        %v2393 = vsel %vm2367, %v2338, %v2339
        %v2394 = vsel %vm2367, %v2337, %v2338
        %v2395 = vsel %vm2367, %v2336, %v2337
        %v2396 = vsel %vm2367, %v2335, %v2336
        %v2397 = vsel %vm2367, %v2334, %v2335
        %v2398 = vsel %vm2367, %v2333, %v2334
        %v2399 = vsel %vm2367, %v2332, %v2333
        %v2400 = vsel %vm2367, %v2331, %v2332
        %v2401 = vsel %vm2367, %v2330, %v2331
        %v2402 = vsel %vm2367, %v2329, %v2330
        %v2403 = vsel %vm2367, %v2328, %v2329
        %v2404 = vsel %vm2367, %v2327, %v2328
        %v2405 = vsel %vm2367, %v2326, %v2327
        %v2406 = vsel %vm2367, %v2325, %v2326
        %v2407 = vsel %vm2367, %v2324, %v2325
        %v2408 = vsel %vm2367, %v2323, %v2324
        %v2409 = vsel %vm2367, %v2322, %v2323
        %v2410 = vsel %vm2367, %v2321, %v2322
        %v2411 = vsel %vm2367, %v2320, %v2321
        %v2412 = vsel %vm2367, %v2319, %v2320
        %v2413 = vsel %vm2367, %v2318, %v2319
        %v2414 = vsel %vm2367, %v2317, %v2318
        %v2415 = vsel %vm2367, %v2364, %v2317
        %2416 = vrot.lane.b32.xlu0 %v2414, 120
        %v2417 = vpop.permute.xlu0 %2416
        %2418 = vrot.lane.b32.xlu0 %v2413, 120
        %v2419 = vpop.permute.xlu0 %2418
        %2420 = vrot.lane.b32.xlu0 %v2412, 120
        %v2421 = vpop.permute.xlu0 %2420
        %2422 = vrot.lane.b32.xlu0 %v2411, 120
        %v2423 = vpop.permute.xlu0 %2422
        %2424 = vrot.lane.b32.xlu0 %v2410, 120
        %v2425 = vpop.permute.xlu0 %2424
        %2426 = vrot.lane.b32.xlu0 %v2409, 120
        %v2427 = vpop.permute.xlu0 %2426
        %2428 = vrot.lane.b32.xlu0 %v2408, 120
        %v2429 = vpop.permute.xlu0 %2428
        %2430 = vrot.lane.b32.xlu0 %v2407, 120
        %v2431 = vpop.permute.xlu0 %2430
        %2432 = vrot.lane.b32.xlu0 %v2406, 120
        %v2433 = vpop.permute.xlu0 %2432
        %2434 = vrot.lane.b32.xlu0 %v2405, 120
        %v2435 = vpop.permute.xlu0 %2434
        %2436 = vrot.lane.b32.xlu0 %v2404, 120
        %v2437 = vpop.permute.xlu0 %2436
        %2438 = vrot.lane.b32.xlu0 %v2403, 120
        %v2439 = vpop.permute.xlu0 %2438
        %2440 = vrot.lane.b32.xlu0 %v2402, 120
        %v2441 = vpop.permute.xlu0 %2440
        %2442 = vrot.lane.b32.xlu0 %v2401, 120
        %v2443 = vpop.permute.xlu0 %2442
        %2444 = vrot.lane.b32.xlu0 %v2400, 120
        %v2445 = vpop.permute.xlu0 %2444
        %2446 = vrot.lane.b32.xlu0 %v2399, 120
        %v2447 = vpop.permute.xlu0 %2446
        %2448 = vrot.lane.b32.xlu0 %v2398, 120
        %v2449 = vpop.permute.xlu0 %2448
        %2450 = vrot.lane.b32.xlu0 %v2397, 120
        %v2451 = vpop.permute.xlu0 %2450
        %2452 = vrot.lane.b32.xlu0 %v2396, 120
        %v2453 = vpop.permute.xlu0 %2452
        %2454 = vrot.lane.b32.xlu0 %v2395, 120
        %v2455 = vpop.permute.xlu0 %2454
        %2456 = vrot.lane.b32.xlu0 %v2394, 120
        %v2457 = vpop.permute.xlu0 %2456
        %2458 = vrot.lane.b32.xlu0 %v2393, 120
        %v2459 = vpop.permute.xlu0 %2458
        %2460 = vrot.lane.b32.xlu0 %v2392, 120
        %v2461 = vpop.permute.xlu0 %2460
        %2462 = vrot.lane.b32.xlu0 %v2391, 120
        %v2463 = vpop.permute.xlu0 %2462
        %2464 = vrot.lane.b32.xlu0 %v2390, 120
        %v2465 = vpop.permute.xlu0 %2464
        %2466 = vrot.lane.b32.xlu0 %v2389, 120
        %v2467 = vpop.permute.xlu0 %2466
        %2468 = vrot.lane.b32.xlu0 %v2388, 120
        %v2469 = vpop.permute.xlu0 %2468
        %2470 = vrot.lane.b32.xlu0 %v2387, 120
        %v2471 = vpop.permute.xlu0 %2470
        %2472 = vrot.lane.b32.xlu0 %v2386, 120
        %v2473 = vpop.permute.xlu0 %2472
        %2474 = vrot.lane.b32.xlu0 %v2385, 120
        %v2475 = vpop.permute.xlu0 %2474
        %2476 = vrot.lane.b32.xlu0 %v2384, 120
        %v2477 = vpop.permute.xlu0 %2476
        %2478 = vrot.lane.b32.xlu0 %v2383, 120
        %v2479 = vpop.permute.xlu0 %2478
        %2480 = vrot.lane.b32.xlu0 %v2382, 120
        %v2481 = vpop.permute.xlu0 %2480
        %2482 = vrot.lane.b32.xlu0 %v2381, 120
        %v2483 = vpop.permute.xlu0 %2482
        %2484 = vrot.lane.b32.xlu0 %v2380, 120
        %v2485 = vpop.permute.xlu0 %2484
        %2486 = vrot.lane.b32.xlu0 %v2379, 120
        %v2487 = vpop.permute.xlu0 %2486
        %2488 = vrot.lane.b32.xlu0 %v2378, 120
        %v2489 = vpop.permute.xlu0 %2488
        %2490 = vrot.lane.b32.xlu0 %v2377, 120
        %v2491 = vpop.permute.xlu0 %2490
        %2492 = vrot.lane.b32.xlu0 %v2376, 120
        %v2493 = vpop.permute.xlu0 %2492
        %2494 = vrot.lane.b32.xlu0 %v2375, 120
        %v2495 = vpop.permute.xlu0 %2494
        %2496 = vrot.lane.b32.xlu0 %v2374, 120
        %v2497 = vpop.permute.xlu0 %2496
        %2498 = vrot.lane.b32.xlu0 %v2373, 120
        %v2499 = vpop.permute.xlu0 %2498
        %2500 = vrot.lane.b32.xlu0 %v2372, 120
        %v2501 = vpop.permute.xlu0 %2500
        %2502 = vrot.lane.b32.xlu0 %v2371, 120
        %v2503 = vpop.permute.xlu0 %2502
        %2504 = vrot.lane.b32.xlu0 %v2370, 120
        %v2505 = vpop.permute.xlu0 %2504
        %2506 = vrot.lane.b32.xlu0 %v2369, 120
        %v2507 = vpop.permute.xlu0 %2506
        %2508 = vrot.lane.b32.xlu0 %v2368, 120
        %v2509 = vpop.permute.xlu0 %2508
        %2510 = vrot.lane.b32.xlu0 %v2415, 120
        %v2511 = vpop.permute.xlu0 %2510
        %v2512 = vadd.f32 %v2127, %v2417
        %v2513 = vadd.f32 %v2130, %v2419
        %v2514 = vadd.f32 %v2135, %v2421
        %v2515 = vadd.f32 %v2138, %v2423
        %v2516 = vadd.f32 %v2143, %v2425
        %v2517 = vadd.f32 %v2146, %v2427
        %v2518 = vadd.f32 %v2151, %v2429
        %v2519 = vadd.f32 %v2154, %v2431
        %v2520 = vadd.f32 %v2159, %v2433
        %v2521 = vadd.f32 %v2162, %v2435
        %v2522 = vadd.f32 %v2167, %v2437
        %v2523 = vadd.f32 %v2170, %v2439
        %v2524 = vadd.f32 %v2175, %v2441
        %v2525 = vadd.f32 %v2178, %v2443
        %v2526 = vadd.f32 %v2183, %v2445
        %v2527 = vadd.f32 %v2186, %v2447
        %v2528 = vadd.f32 %v2191, %v2449
        %v2529 = vadd.f32 %v2194, %v2451
        %v2530 = vadd.f32 %v2199, %v2453
        %v2531 = vadd.f32 %v2202, %v2455
        %v2532 = vadd.f32 %v2207, %v2457
        %v2533 = vadd.f32 %v2210, %v2459
        %v2534 = vadd.f32 %v2215, %v2461
        %v2535 = vadd.f32 %v2218, %v2463
        %v2536 = vadd.f32 %v2223, %v2465
        %v2537 = vadd.f32 %v2226, %v2467
        %v2538 = vadd.f32 %v2231, %v2469
        %v2539 = vadd.f32 %v2234, %v2471
        %v2540 = vadd.f32 %v2239, %v2473
        %v2541 = vadd.f32 %v2242, %v2475
        %v2542 = vadd.f32 %v2247, %v2477
        %v2543 = vadd.f32 %v2250, %v2479
        %v2544 = vadd.f32 %v2255, %v2481
        %v2545 = vadd.f32 %v2258, %v2483
        %v2546 = vadd.f32 %v2263, %v2485
        %v2547 = vadd.f32 %v2266, %v2487
        %v2548 = vadd.f32 %v2271, %v2489
        %v2549 = vadd.f32 %v2274, %v2491
        %v2550 = vadd.f32 %v2279, %v2493
        %v2551 = vadd.f32 %v2282, %v2495
        %v2552 = vadd.f32 %v2287, %v2497
        %v2553 = vadd.f32 %v2290, %v2499
        %v2554 = vadd.f32 %v2295, %v2501
        %v2555 = vadd.f32 %v2298, %v2503
        %v2556 = vadd.f32 %v2303, %v2505
        %v2557 = vadd.f32 %v2306, %v2507
        %v2558 = vadd.f32 %v2311, %v2509
        %v2559 = vadd.f32 %v2314, %v2511
        %v2560 = vrot.slane %v2127, 2
        %v2561 = vrot.slane %v2130, 2
        %v2562 = vrot.slane %v2135, 2
        %v2563 = vrot.slane %v2138, 2
        %v2564 = vrot.slane %v2143, 2
        %v2565 = vrot.slane %v2146, 2
        %v2566 = vrot.slane %v2151, 2
        %v2567 = vrot.slane %v2154, 2
        %v2568 = vrot.slane %v2159, 2
        %v2569 = vrot.slane %v2162, 2
        %v2570 = vrot.slane %v2167, 2
        %v2571 = vrot.slane %v2170, 2
        %v2572 = vrot.slane %v2175, 2
        %v2573 = vrot.slane %v2178, 2
        %v2574 = vrot.slane %v2183, 2
        %v2575 = vrot.slane %v2186, 2
        %v2576 = vrot.slane %v2191, 2
        %v2577 = vrot.slane %v2194, 2
        %v2578 = vrot.slane %v2199, 2
        %v2579 = vrot.slane %v2202, 2
        %v2580 = vrot.slane %v2207, 2
        %v2581 = vrot.slane %v2210, 2
        %v2582 = vrot.slane %v2215, 2
        %v2583 = vrot.slane %v2218, 2
        %v2584 = vrot.slane %v2223, 2
        %v2585 = vrot.slane %v2226, 2
        %v2586 = vrot.slane %v2231, 2
        %v2587 = vrot.slane %v2234, 2
        %v2588 = vrot.slane %v2239, 2
        %v2589 = vrot.slane %v2242, 2
        %v2590 = vrot.slane %v2247, 2
        %v2591 = vrot.slane %v2250, 2
        %v2592 = vrot.slane %v2255, 2
        %v2593 = vrot.slane %v2258, 2
        %v2594 = vrot.slane %v2263, 2
        %v2595 = vrot.slane %v2266, 2
        %v2596 = vrot.slane %v2271, 2
        %v2597 = vrot.slane %v2274, 2
        %v2598 = vrot.slane %v2279, 2
        %v2599 = vrot.slane %v2282, 2
        %v2600 = vrot.slane %v2287, 2
        %v2601 = vrot.slane %v2290, 2
        %v2602 = vrot.slane %v2295, 2
        %v2603 = vrot.slane %v2298, 2
        %v2604 = vrot.slane %v2303, 2
        %v2605 = vrot.slane %v2306, 2
        %v2606 = vrot.slane %v2311, 2
        %v2607 = vrot.slane %v2314, 2
        %vm2608 = vcmp.lt.s32.totalorder %v2366, 6
        %v2609 = vsel %vm2608, %v2606, %v2607
        %v2610 = vsel %vm2608, %v2605, %v2606
        %v2611 = vsel %vm2608, %v2604, %v2605
        %v2612 = vsel %vm2608, %v2603, %v2604
        %v2613 = vsel %vm2608, %v2602, %v2603
        %v2614 = vsel %vm2608, %v2601, %v2602
        %v2615 = vsel %vm2608, %v2600, %v2601
        %v2616 = vsel %vm2608, %v2599, %v2600
        %v2617 = vsel %vm2608, %v2598, %v2599
        %v2618 = vsel %vm2608, %v2597, %v2598
        %v2619 = vsel %vm2608, %v2596, %v2597
        %v2620 = vsel %vm2608, %v2595, %v2596
        %v2621 = vsel %vm2608, %v2594, %v2595
        %v2622 = vsel %vm2608, %v2593, %v2594
        %v2623 = vsel %vm2608, %v2592, %v2593
        %v2624 = vsel %vm2608, %v2591, %v2592
        %v2625 = vsel %vm2608, %v2590, %v2591
        %v2626 = vsel %vm2608, %v2589, %v2590
        %v2627 = vsel %vm2608, %v2588, %v2589
        %v2628 = vsel %vm2608, %v2587, %v2588
        %v2629 = vsel %vm2608, %v2586, %v2587
        %v2630 = vsel %vm2608, %v2585, %v2586
        %v2631 = vsel %vm2608, %v2584, %v2585
        %v2632 = vsel %vm2608, %v2583, %v2584
        %v2633 = vsel %vm2608, %v2582, %v2583
        %v2634 = vsel %vm2608, %v2581, %v2582
        %v2635 = vsel %vm2608, %v2580, %v2581
        %v2636 = vsel %vm2608, %v2579, %v2580
        %v2637 = vsel %vm2608, %v2578, %v2579
        %v2638 = vsel %vm2608, %v2577, %v2578
        %v2639 = vsel %vm2608, %v2576, %v2577
        %v2640 = vsel %vm2608, %v2575, %v2576
        %v2641 = vsel %vm2608, %v2574, %v2575
        %v2642 = vsel %vm2608, %v2573, %v2574
        %v2643 = vsel %vm2608, %v2572, %v2573
        %v2644 = vsel %vm2608, %v2571, %v2572
        %v2645 = vsel %vm2608, %v2570, %v2571
        %v2646 = vsel %vm2608, %v2569, %v2570
        %v2647 = vsel %vm2608, %v2568, %v2569
        %v2648 = vsel %vm2608, %v2567, %v2568
        %v2649 = vsel %vm2608, %v2566, %v2567
        %v2650 = vsel %vm2608, %v2565, %v2566
        %v2651 = vsel %vm2608, %v2564, %v2565
        %v2652 = vsel %vm2608, %v2563, %v2564
        %v2653 = vsel %vm2608, %v2562, %v2563
        %v2654 = vsel %vm2608, %v2561, %v2562
        %v2655 = vsel %vm2608, %v2560, %v2561
        %v2656 = vsel %vm2608, %v2607, %v2560
        %2657 = vrot.lane.b32.xlu0 %v2655, 112
        %v2658 = vpop.permute.xlu0 %2657
        %2659 = vrot.lane.b32.xlu0 %v2654, 112
        %v2660 = vpop.permute.xlu0 %2659
        %2661 = vrot.lane.b32.xlu0 %v2653, 112
        %v2662 = vpop.permute.xlu0 %2661
        %2663 = vrot.lane.b32.xlu0 %v2652, 112
        %v2664 = vpop.permute.xlu0 %2663
        %2665 = vrot.lane.b32.xlu0 %v2651, 112
        %v2666 = vpop.permute.xlu0 %2665
        %2667 = vrot.lane.b32.xlu0 %v2650, 112
        %v2668 = vpop.permute.xlu0 %2667
        %2669 = vrot.lane.b32.xlu0 %v2649, 112
        %v2670 = vpop.permute.xlu0 %2669
        %2671 = vrot.lane.b32.xlu0 %v2648, 112
        %v2672 = vpop.permute.xlu0 %2671
        %2673 = vrot.lane.b32.xlu0 %v2647, 112
        %v2674 = vpop.permute.xlu0 %2673
        %2675 = vrot.lane.b32.xlu0 %v2646, 112
        %v2676 = vpop.permute.xlu0 %2675
        %2677 = vrot.lane.b32.xlu0 %v2645, 112
        %v2678 = vpop.permute.xlu0 %2677
        %2679 = vrot.lane.b32.xlu0 %v2644, 112
        %v2680 = vpop.permute.xlu0 %2679
        %2681 = vrot.lane.b32.xlu0 %v2643, 112
        %v2682 = vpop.permute.xlu0 %2681
        %2683 = vrot.lane.b32.xlu0 %v2642, 112
        %v2684 = vpop.permute.xlu0 %2683
        %2685 = vrot.lane.b32.xlu0 %v2641, 112
        %v2686 = vpop.permute.xlu0 %2685
        %2687 = vrot.lane.b32.xlu0 %v2640, 112
        %v2688 = vpop.permute.xlu0 %2687
        %2689 = vrot.lane.b32.xlu0 %v2639, 112
        %v2690 = vpop.permute.xlu0 %2689
        %2691 = vrot.lane.b32.xlu0 %v2638, 112
        %v2692 = vpop.permute.xlu0 %2691
        %2693 = vrot.lane.b32.xlu0 %v2637, 112
        %v2694 = vpop.permute.xlu0 %2693
        %2695 = vrot.lane.b32.xlu0 %v2636, 112
        %v2696 = vpop.permute.xlu0 %2695
        %2697 = vrot.lane.b32.xlu0 %v2635, 112
        %v2698 = vpop.permute.xlu0 %2697
        %2699 = vrot.lane.b32.xlu0 %v2634, 112
        %v2700 = vpop.permute.xlu0 %2699
        %2701 = vrot.lane.b32.xlu0 %v2633, 112
        %v2702 = vpop.permute.xlu0 %2701
        %2703 = vrot.lane.b32.xlu0 %v2632, 112
        %v2704 = vpop.permute.xlu0 %2703
        %2705 = vrot.lane.b32.xlu0 %v2631, 112
        %v2706 = vpop.permute.xlu0 %2705
        %2707 = vrot.lane.b32.xlu0 %v2630, 112
        %v2708 = vpop.permute.xlu0 %2707
        %2709 = vrot.lane.b32.xlu0 %v2629, 112
        %v2710 = vpop.permute.xlu0 %2709
        %2711 = vrot.lane.b32.xlu0 %v2628, 112
        %v2712 = vpop.permute.xlu0 %2711
        %2713 = vrot.lane.b32.xlu0 %v2627, 112
        %v2714 = vpop.permute.xlu0 %2713
        %2715 = vrot.lane.b32.xlu0 %v2626, 112
        %v2716 = vpop.permute.xlu0 %2715
        %2717 = vrot.lane.b32.xlu0 %v2625, 112
        %v2718 = vpop.permute.xlu0 %2717
        %2719 = vrot.lane.b32.xlu0 %v2624, 112
        %v2720 = vpop.permute.xlu0 %2719
        %2721 = vrot.lane.b32.xlu0 %v2623, 112
        %v2722 = vpop.permute.xlu0 %2721
        %2723 = vrot.lane.b32.xlu0 %v2622, 112
        %v2724 = vpop.permute.xlu0 %2723
        %2725 = vrot.lane.b32.xlu0 %v2621, 112
        %v2726 = vpop.permute.xlu0 %2725
        %2727 = vrot.lane.b32.xlu0 %v2620, 112
        %v2728 = vpop.permute.xlu0 %2727
        %2729 = vrot.lane.b32.xlu0 %v2619, 112
        %v2730 = vpop.permute.xlu0 %2729
        %2731 = vrot.lane.b32.xlu0 %v2618, 112
        %v2732 = vpop.permute.xlu0 %2731
        %2733 = vrot.lane.b32.xlu0 %v2617, 112
        %v2734 = vpop.permute.xlu0 %2733
        %2735 = vrot.lane.b32.xlu0 %v2616, 112
        %v2736 = vpop.permute.xlu0 %2735
        %2737 = vrot.lane.b32.xlu0 %v2615, 112
        %v2738 = vpop.permute.xlu0 %2737
        %2739 = vrot.lane.b32.xlu0 %v2614, 112
        %v2740 = vpop.permute.xlu0 %2739
        %2741 = vrot.lane.b32.xlu0 %v2613, 112
        %v2742 = vpop.permute.xlu0 %2741
        %2743 = vrot.lane.b32.xlu0 %v2612, 112
        %v2744 = vpop.permute.xlu0 %2743
        %2745 = vrot.lane.b32.xlu0 %v2611, 112
        %v2746 = vpop.permute.xlu0 %2745
        %2747 = vrot.lane.b32.xlu0 %v2610, 112
        %v2748 = vpop.permute.xlu0 %2747
        %2749 = vrot.lane.b32.xlu0 %v2609, 112
        %v2750 = vpop.permute.xlu0 %2749
        %2751 = vrot.lane.b32.xlu0 %v2656, 112
        %v2752 = vpop.permute.xlu0 %2751
        %v2753 = vadd.f32 %v2512, %v2658
        %v2754 = vadd.f32 %v2513, %v2660
        %v2755 = vadd.f32 %v2514, %v2662
        %v2756 = vadd.f32 %v2515, %v2664
        %v2757 = vadd.f32 %v2516, %v2666
        %v2758 = vadd.f32 %v2517, %v2668
        %v2759 = vadd.f32 %v2518, %v2670
        %v2760 = vadd.f32 %v2519, %v2672
        %v2761 = vadd.f32 %v2520, %v2674
        %v2762 = vadd.f32 %v2521, %v2676
        %v2763 = vadd.f32 %v2522, %v2678
        %v2764 = vadd.f32 %v2523, %v2680
        %v2765 = vadd.f32 %v2524, %v2682
        %v2766 = vadd.f32 %v2525, %v2684
        %v2767 = vadd.f32 %v2526, %v2686
        %v2768 = vadd.f32 %v2527, %v2688
        %v2769 = vadd.f32 %v2528, %v2690
        %v2770 = vadd.f32 %v2529, %v2692
        %v2771 = vadd.f32 %v2530, %v2694
        %v2772 = vadd.f32 %v2531, %v2696
        %v2773 = vadd.f32 %v2532, %v2698
        %v2774 = vadd.f32 %v2533, %v2700
        %v2775 = vadd.f32 %v2534, %v2702
        %v2776 = vadd.f32 %v2535, %v2704
        %v2777 = vadd.f32 %v2536, %v2706
        %v2778 = vadd.f32 %v2537, %v2708
        %v2779 = vadd.f32 %v2538, %v2710
        %v2780 = vadd.f32 %v2539, %v2712
        %v2781 = vadd.f32 %v2540, %v2714
        %v2782 = vadd.f32 %v2541, %v2716
        %v2783 = vadd.f32 %v2542, %v2718
        %v2784 = vadd.f32 %v2543, %v2720
        %v2785 = vadd.f32 %v2544, %v2722
        %v2786 = vadd.f32 %v2545, %v2724
        %v2787 = vadd.f32 %v2546, %v2726
        %v2788 = vadd.f32 %v2547, %v2728
        %v2789 = vadd.f32 %v2548, %v2730
        %v2790 = vadd.f32 %v2549, %v2732
        %v2791 = vadd.f32 %v2550, %v2734
        %v2792 = vadd.f32 %v2551, %v2736
        %v2793 = vadd.f32 %v2552, %v2738
        %v2794 = vadd.f32 %v2553, %v2740
        %v2795 = vadd.f32 %v2554, %v2742
        %v2796 = vadd.f32 %v2555, %v2744
        %v2797 = vadd.f32 %v2556, %v2746
        %v2798 = vadd.f32 %v2557, %v2748
        %v2799 = vadd.f32 %v2558, %v2750
        %v2800 = vadd.f32 %v2559, %v2752
        %v2801 = vrot.slane %v2127, 3
        %v2802 = vrot.slane %v2130, 3
        %v2803 = vrot.slane %v2135, 3
        %v2804 = vrot.slane %v2138, 3
        %v2805 = vrot.slane %v2143, 3
        %v2806 = vrot.slane %v2146, 3
        %v2807 = vrot.slane %v2151, 3
        %v2808 = vrot.slane %v2154, 3
        %v2809 = vrot.slane %v2159, 3
        %v2810 = vrot.slane %v2162, 3
        %v2811 = vrot.slane %v2167, 3
        %v2812 = vrot.slane %v2170, 3
        %v2813 = vrot.slane %v2175, 3
        %v2814 = vrot.slane %v2178, 3
        %v2815 = vrot.slane %v2183, 3
        %v2816 = vrot.slane %v2186, 3
        %v2817 = vrot.slane %v2191, 3
        %v2818 = vrot.slane %v2194, 3
        %v2819 = vrot.slane %v2199, 3
        %v2820 = vrot.slane %v2202, 3
        %v2821 = vrot.slane %v2207, 3
        %v2822 = vrot.slane %v2210, 3
        %v2823 = vrot.slane %v2215, 3
        %v2824 = vrot.slane %v2218, 3
        %v2825 = vrot.slane %v2223, 3
        %v2826 = vrot.slane %v2226, 3
        %v2827 = vrot.slane %v2231, 3
        %v2828 = vrot.slane %v2234, 3
        %v2829 = vrot.slane %v2239, 3
        %v2830 = vrot.slane %v2242, 3
        %v2831 = vrot.slane %v2247, 3
        %v2832 = vrot.slane %v2250, 3
        %v2833 = vrot.slane %v2255, 3
        %v2834 = vrot.slane %v2258, 3
        %v2835 = vrot.slane %v2263, 3
        %v2836 = vrot.slane %v2266, 3
        %v2837 = vrot.slane %v2271, 3
        %v2838 = vrot.slane %v2274, 3
        %v2839 = vrot.slane %v2279, 3
        %v2840 = vrot.slane %v2282, 3
        %v2841 = vrot.slane %v2287, 3
        %v2842 = vrot.slane %v2290, 3
        %v2843 = vrot.slane %v2295, 3
        %v2844 = vrot.slane %v2298, 3
        %v2845 = vrot.slane %v2303, 3
        %v2846 = vrot.slane %v2306, 3
        %v2847 = vrot.slane %v2311, 3
        %v2848 = vrot.slane %v2314, 3
        %vm2849 = vcmp.lt.s32.totalorder %v2366, 5
        %v2850 = vsel %vm2849, %v2847, %v2848
        %v2851 = vsel %vm2849, %v2846, %v2847
        %v2852 = vsel %vm2849, %v2845, %v2846
        %v2853 = vsel %vm2849, %v2844, %v2845
        %v2854 = vsel %vm2849, %v2843, %v2844
        %v2855 = vsel %vm2849, %v2842, %v2843
        %v2856 = vsel %vm2849, %v2841, %v2842
        %v2857 = vsel %vm2849, %v2840, %v2841
        %v2858 = vsel %vm2849, %v2839, %v2840
        %v2859 = vsel %vm2849, %v2838, %v2839
        %v2860 = vsel %vm2849, %v2837, %v2838
        %v2861 = vsel %vm2849, %v2836, %v2837
        %v2862 = vsel %vm2849, %v2835, %v2836
        %v2863 = vsel %vm2849, %v2834, %v2835
        %v2864 = vsel %vm2849, %v2833, %v2834
        %v2865 = vsel %vm2849, %v2832, %v2833
        %v2866 = vsel %vm2849, %v2831, %v2832
        %v2867 = vsel %vm2849, %v2830, %v2831
        %v2868 = vsel %vm2849, %v2829, %v2830
        %v2869 = vsel %vm2849, %v2828, %v2829
        %v2870 = vsel %vm2849, %v2827, %v2828
        %v2871 = vsel %vm2849, %v2826, %v2827
        %v2872 = vsel %vm2849, %v2825, %v2826
        %v2873 = vsel %vm2849, %v2824, %v2825
        %v2874 = vsel %vm2849, %v2823, %v2824
        %v2875 = vsel %vm2849, %v2822, %v2823
        %v2876 = vsel %vm2849, %v2821, %v2822
        %v2877 = vsel %vm2849, %v2820, %v2821
        %v2878 = vsel %vm2849, %v2819, %v2820
        %v2879 = vsel %vm2849, %v2818, %v2819
        %v2880 = vsel %vm2849, %v2817, %v2818
        %v2881 = vsel %vm2849, %v2816, %v2817
        %v2882 = vsel %vm2849, %v2815, %v2816
        %v2883 = vsel %vm2849, %v2814, %v2815
        %v2884 = vsel %vm2849, %v2813, %v2814
        %v2885 = vsel %vm2849, %v2812, %v2813
        %v2886 = vsel %vm2849, %v2811, %v2812
        %v2887 = vsel %vm2849, %v2810, %v2811
        %v2888 = vsel %vm2849, %v2809, %v2810
        %v2889 = vsel %vm2849, %v2808, %v2809
        %v2890 = vsel %vm2849, %v2807, %v2808
        %v2891 = vsel %vm2849, %v2806, %v2807
        %v2892 = vsel %vm2849, %v2805, %v2806
        %v2893 = vsel %vm2849, %v2804, %v2805
        %v2894 = vsel %vm2849, %v2803, %v2804
        %v2895 = vsel %vm2849, %v2802, %v2803
        %v2896 = vsel %vm2849, %v2801, %v2802
        %v2897 = vsel %vm2849, %v2848, %v2801
        %2898 = vrot.lane.b32.xlu0 %v2896, 104
        %v2899 = vpop.permute.xlu0 %2898
        %2900 = vrot.lane.b32.xlu0 %v2895, 104
        %v2901 = vpop.permute.xlu0 %2900
        %2902 = vrot.lane.b32.xlu0 %v2894, 104
        %v2903 = vpop.permute.xlu0 %2902
        %2904 = vrot.lane.b32.xlu0 %v2893, 104
        %v2905 = vpop.permute.xlu0 %2904
        %2906 = vrot.lane.b32.xlu0 %v2892, 104
        %v2907 = vpop.permute.xlu0 %2906
        %2908 = vrot.lane.b32.xlu0 %v2891, 104
        %v2909 = vpop.permute.xlu0 %2908
        %2910 = vrot.lane.b32.xlu0 %v2890, 104
        %v2911 = vpop.permute.xlu0 %2910
        %2912 = vrot.lane.b32.xlu0 %v2889, 104
        %v2913 = vpop.permute.xlu0 %2912
        %2914 = vrot.lane.b32.xlu0 %v2888, 104
        %v2915 = vpop.permute.xlu0 %2914
        %2916 = vrot.lane.b32.xlu0 %v2887, 104
        %v2917 = vpop.permute.xlu0 %2916
        %2918 = vrot.lane.b32.xlu0 %v2886, 104
        %v2919 = vpop.permute.xlu0 %2918
        %2920 = vrot.lane.b32.xlu0 %v2885, 104
        %v2921 = vpop.permute.xlu0 %2920
        %2922 = vrot.lane.b32.xlu0 %v2884, 104
        %v2923 = vpop.permute.xlu0 %2922
        %2924 = vrot.lane.b32.xlu0 %v2883, 104
        %v2925 = vpop.permute.xlu0 %2924
        %2926 = vrot.lane.b32.xlu0 %v2882, 104
        %v2927 = vpop.permute.xlu0 %2926
        %2928 = vrot.lane.b32.xlu0 %v2881, 104
        %v2929 = vpop.permute.xlu0 %2928
        %2930 = vrot.lane.b32.xlu0 %v2880, 104
        %v2931 = vpop.permute.xlu0 %2930
        %2932 = vrot.lane.b32.xlu0 %v2879, 104
        %v2933 = vpop.permute.xlu0 %2932
        %2934 = vrot.lane.b32.xlu0 %v2878, 104
        %v2935 = vpop.permute.xlu0 %2934
        %2936 = vrot.lane.b32.xlu0 %v2877, 104
        %v2937 = vpop.permute.xlu0 %2936
        %2938 = vrot.lane.b32.xlu0 %v2876, 104
        %v2939 = vpop.permute.xlu0 %2938
        %2940 = vrot.lane.b32.xlu0 %v2875, 104
        %v2941 = vpop.permute.xlu0 %2940
        %2942 = vrot.lane.b32.xlu0 %v2874, 104
        %v2943 = vpop.permute.xlu0 %2942
        %2944 = vrot.lane.b32.xlu0 %v2873, 104
        %v2945 = vpop.permute.xlu0 %2944
        %2946 = vrot.lane.b32.xlu0 %v2872, 104
        %v2947 = vpop.permute.xlu0 %2946
        %2948 = vrot.lane.b32.xlu0 %v2871, 104
        %v2949 = vpop.permute.xlu0 %2948
        %2950 = vrot.lane.b32.xlu0 %v2870, 104
        %v2951 = vpop.permute.xlu0 %2950
        %2952 = vrot.lane.b32.xlu0 %v2869, 104
        %v2953 = vpop.permute.xlu0 %2952
        %2954 = vrot.lane.b32.xlu0 %v2868, 104
        %v2955 = vpop.permute.xlu0 %2954
        %2956 = vrot.lane.b32.xlu0 %v2867, 104
        %v2957 = vpop.permute.xlu0 %2956
        %2958 = vrot.lane.b32.xlu0 %v2866, 104
        %v2959 = vpop.permute.xlu0 %2958
        %2960 = vrot.lane.b32.xlu0 %v2865, 104
        %v2961 = vpop.permute.xlu0 %2960
        %2962 = vrot.lane.b32.xlu0 %v2864, 104
        %v2963 = vpop.permute.xlu0 %2962
        %2964 = vrot.lane.b32.xlu0 %v2863, 104
        %v2965 = vpop.permute.xlu0 %2964
        %2966 = vrot.lane.b32.xlu0 %v2862, 104
        %v2967 = vpop.permute.xlu0 %2966
        %2968 = vrot.lane.b32.xlu0 %v2861, 104
        %v2969 = vpop.permute.xlu0 %2968
        %2970 = vrot.lane.b32.xlu0 %v2860, 104
        %v2971 = vpop.permute.xlu0 %2970
        %2972 = vrot.lane.b32.xlu0 %v2859, 104
        %v2973 = vpop.permute.xlu0 %2972
        %2974 = vrot.lane.b32.xlu0 %v2858, 104
        %v2975 = vpop.permute.xlu0 %2974
        %2976 = vrot.lane.b32.xlu0 %v2857, 104
        %v2977 = vpop.permute.xlu0 %2976
        %2978 = vrot.lane.b32.xlu0 %v2856, 104
        %v2979 = vpop.permute.xlu0 %2978
        %2980 = vrot.lane.b32.xlu0 %v2855, 104
        %v2981 = vpop.permute.xlu0 %2980
        %2982 = vrot.lane.b32.xlu0 %v2854, 104
        %v2983 = vpop.permute.xlu0 %2982
        %2984 = vrot.lane.b32.xlu0 %v2853, 104
        %v2985 = vpop.permute.xlu0 %2984
        %2986 = vrot.lane.b32.xlu0 %v2852, 104
        %v2987 = vpop.permute.xlu0 %2986
        %2988 = vrot.lane.b32.xlu0 %v2851, 104
        %v2989 = vpop.permute.xlu0 %2988
        %2990 = vrot.lane.b32.xlu0 %v2850, 104
        %v2991 = vpop.permute.xlu0 %2990
        %2992 = vrot.lane.b32.xlu0 %v2897, 104
        %v2993 = vpop.permute.xlu0 %2992
        %v2994 = vadd.f32 %v2753, %v2899
        %v2995 = vadd.f32 %v2754, %v2901
        %v2996 = vadd.f32 %v2755, %v2903
        %v2997 = vadd.f32 %v2756, %v2905
        %v2998 = vadd.f32 %v2757, %v2907
        %v2999 = vadd.f32 %v2758, %v2909
        %v3000 = vadd.f32 %v2759, %v2911
        %v3001 = vadd.f32 %v2760, %v2913
        %v3002 = vadd.f32 %v2761, %v2915
        %v3003 = vadd.f32 %v2762, %v2917
        %v3004 = vadd.f32 %v2763, %v2919
        %v3005 = vadd.f32 %v2764, %v2921
        %v3006 = vadd.f32 %v2765, %v2923
        %v3007 = vadd.f32 %v2766, %v2925
        %v3008 = vadd.f32 %v2767, %v2927
        %v3009 = vadd.f32 %v2768, %v2929
        %v3010 = vadd.f32 %v2769, %v2931
        %v3011 = vadd.f32 %v2770, %v2933
        %v3012 = vadd.f32 %v2771, %v2935
        %v3013 = vadd.f32 %v2772, %v2937
        %v3014 = vadd.f32 %v2773, %v2939
        %v3015 = vadd.f32 %v2774, %v2941
        %v3016 = vadd.f32 %v2775, %v2943
        %v3017 = vadd.f32 %v2776, %v2945
        %v3018 = vadd.f32 %v2777, %v2947
        %v3019 = vadd.f32 %v2778, %v2949
        %v3020 = vadd.f32 %v2779, %v2951
        %v3021 = vadd.f32 %v2780, %v2953
        %v3022 = vadd.f32 %v2781, %v2955
        %v3023 = vadd.f32 %v2782, %v2957
        %v3024 = vadd.f32 %v2783, %v2959
        %v3025 = vadd.f32 %v2784, %v2961
        %v3026 = vadd.f32 %v2785, %v2963
        %v3027 = vadd.f32 %v2786, %v2965
        %v3028 = vadd.f32 %v2787, %v2967
        %v3029 = vadd.f32 %v2788, %v2969
        %v3030 = vadd.f32 %v2789, %v2971
        %v3031 = vadd.f32 %v2790, %v2973
        %v3032 = vadd.f32 %v2791, %v2975
        %v3033 = vadd.f32 %v2792, %v2977
        %v3034 = vadd.f32 %v2793, %v2979
        %v3035 = vadd.f32 %v2794, %v2981
        %v3036 = vadd.f32 %v2795, %v2983
        %v3037 = vadd.f32 %v2796, %v2985
        %v3038 = vadd.f32 %v2797, %v2987
        %v3039 = vadd.f32 %v2798, %v2989
        %v3040 = vadd.f32 %v2799, %v2991
        %v3041 = vadd.f32 %v2800, %v2993
        %v3042 = vld [vmem:[#allocation9] sm:$0xff]
        %v3043 = vld [vmem:[#allocation9 + $0x8] sm:$0xff]
        %v3044 = vld [vmem:[#allocation9 + $0x10] sm:$0xff]
        %v3045 = vadd.f32 %v2994, %v3042
        %v3046 = vadd.f32 %v2995, %v3043
        %v3047 = vadd.f32 %v2996, %v3044
        %v3048 = vadd.f32 %v2997, %v3042
        %v3049 = vadd.f32 %v2998, %v3043
        %v3050 = vadd.f32 %v2999, %v3044
        %v3051 = vadd.f32 %v3000, %v3042
        %v3052 = vadd.f32 %v3001, %v3043
        %v3053 = vadd.f32 %v3002, %v3044
        %v3054 = vadd.f32 %v3003, %v3042
        %v3055 = vadd.f32 %v3004, %v3043
        %v3056 = vadd.f32 %v3005, %v3044
        %v3057 = vadd.f32 %v3006, %v3042
        %v3058 = vadd.f32 %v3007, %v3043
        %v3059 = vadd.f32 %v3008, %v3044
        %v3060 = vadd.f32 %v3009, %v3042
        %v3061 = vadd.f32 %v3010, %v3043
        %v3062 = vadd.f32 %v3011, %v3044
        %v3063 = vadd.f32 %v3012, %v3042
        %v3064 = vadd.f32 %v3013, %v3043
        %v3065 = vadd.f32 %v3014, %v3044
        %v3066 = vadd.f32 %v3015, %v3042
        %v3067 = vadd.f32 %v3016, %v3043
        %v3068 = vadd.f32 %v3017, %v3044
        %v3069 = vadd.f32 %v3018, %v3042
        %v3070 = vadd.f32 %v3019, %v3043
        %v3071 = vadd.f32 %v3020, %v3044
        %v3072 = vadd.f32 %v3021, %v3042
        %v3073 = vadd.f32 %v3022, %v3043
        %v3074 = vadd.f32 %v3023, %v3044
        %v3075 = vadd.f32 %v3024, %v3042
        %v3076 = vadd.f32 %v3025, %v3043
        %v3077 = vadd.f32 %v3026, %v3044
        %v3078 = vadd.f32 %v3027, %v3042
        %v3079 = vadd.f32 %v3028, %v3043
        %v3080 = vadd.f32 %v3029, %v3044
        %v3081 = vadd.f32 %v3030, %v3042
        %v3082 = vadd.f32 %v3031, %v3043
        %v3083 = vadd.f32 %v3032, %v3044
        %v3084 = vadd.f32 %v3033, %v3042
        %v3085 = vadd.f32 %v3034, %v3043
        %v3086 = vadd.f32 %v3035, %v3044
        %v3087 = vadd.f32 %v3036, %v3042
        %v3088 = vadd.f32 %v3037, %v3043
        %v3089 = vadd.f32 %v3038, %v3044
        %v3090 = vadd.f32 %v3039, %v3042
        %v3091 = vadd.f32 %v3040, %v3043
        %v3092 = vadd.f32 %v3041, %v3044
        %v3093 = vmax.f32 %v3045, %v3046
        %v3094 = vmax.f32 %v3093, %v3047
        %v3095 = vrot.slane %v3094, 4
        %v3096 = vmax.f32 %v3094, %v3095
        %v3097 = vrot.slane %v3096, 2
        %v3098 = vmax.f32 %v3096, %v3097
        %v3099 = vrot.slane %v3098, 1
        %v3100 = vmax.f32 %v3098, %v3099
        %v3101 = vmax.f32 %v3048, %v3049
        %v3102 = vmax.f32 %v3101, %v3050
        %v3103 = vrot.slane %v3102, 4
        %v3104 = vmax.f32 %v3102, %v3103
        %v3105 = vrot.slane %v3104, 2
        %v3106 = vmax.f32 %v3104, %v3105
        %v3107 = vrot.slane %v3106, 1
        %v3108 = vmax.f32 %v3106, %v3107
        %v3109 = vmax.f32 %v3051, %v3052
        %v3110 = vmax.f32 %v3109, %v3053
        %v3111 = vrot.slane %v3110, 4
        %v3112 = vmax.f32 %v3110, %v3111
        %v3113 = vrot.slane %v3112, 2
        %v3114 = vmax.f32 %v3112, %v3113
        %v3115 = vrot.slane %v3114, 1
        %v3116 = vmax.f32 %v3114, %v3115
        %v3117 = vmax.f32 %v3054, %v3055
        %v3118 = vmax.f32 %v3117, %v3056
        %v3119 = vrot.slane %v3118, 4
        %v3120 = vmax.f32 %v3118, %v3119
        %v3121 = vrot.slane %v3120, 2
        %v3122 = vmax.f32 %v3120, %v3121
        %v3123 = vrot.slane %v3122, 1
        %v3124 = vmax.f32 %v3122, %v3123
        %v3125 = vmax.f32 %v3057, %v3058
        %v3126 = vmax.f32 %v3125, %v3059
        %v3127 = vrot.slane %v3126, 4
        %v3128 = vmax.f32 %v3126, %v3127
        %v3129 = vrot.slane %v3128, 2
        %v3130 = vmax.f32 %v3128, %v3129
        %v3131 = vrot.slane %v3130, 1
        %v3132 = vmax.f32 %v3130, %v3131
        %v3133 = vmax.f32 %v3060, %v3061
        %v3134 = vmax.f32 %v3133, %v3062
        %v3135 = vrot.slane %v3134, 4
        %v3136 = vmax.f32 %v3134, %v3135
        %v3137 = vrot.slane %v3136, 2
        %v3138 = vmax.f32 %v3136, %v3137
        %v3139 = vrot.slane %v3138, 1
        %v3140 = vmax.f32 %v3138, %v3139
        %v3141 = vmax.f32 %v3063, %v3064
        %v3142 = vmax.f32 %v3141, %v3065
        %v3143 = vrot.slane %v3142, 4
        %v3144 = vmax.f32 %v3142, %v3143
        %v3145 = vrot.slane %v3144, 2
        %v3146 = vmax.f32 %v3144, %v3145
        %v3147 = vrot.slane %v3146, 1
        %v3148 = vmax.f32 %v3146, %v3147
        %v3149 = vmax.f32 %v3066, %v3067
        %v3150 = vmax.f32 %v3149, %v3068
        %v3151 = vrot.slane %v3150, 4
        %v3152 = vmax.f32 %v3150, %v3151
        %v3153 = vrot.slane %v3152, 2
        %v3154 = vmax.f32 %v3152, %v3153
        %v3155 = vrot.slane %v3154, 1
        %v3156 = vmax.f32 %v3154, %v3155
        %v3157 = vmax.f32 %v3069, %v3070
        %v3158 = vmax.f32 %v3157, %v3071
        %v3159 = vrot.slane %v3158, 4
        %v3160 = vmax.f32 %v3158, %v3159
        %v3161 = vrot.slane %v3160, 2
        %v3162 = vmax.f32 %v3160, %v3161
        %v3163 = vrot.slane %v3162, 1
        %v3164 = vmax.f32 %v3162, %v3163
        %v3165 = vmax.f32 %v3072, %v3073
        %v3166 = vmax.f32 %v3165, %v3074
        %v3167 = vrot.slane %v3166, 4
        %v3168 = vmax.f32 %v3166, %v3167
        %v3169 = vrot.slane %v3168, 2
        %v3170 = vmax.f32 %v3168, %v3169
        %v3171 = vrot.slane %v3170, 1
        %v3172 = vmax.f32 %v3170, %v3171
        %v3173 = vmax.f32 %v3075, %v3076
        %v3174 = vmax.f32 %v3173, %v3077
        %v3175 = vrot.slane %v3174, 4
        %v3176 = vmax.f32 %v3174, %v3175
        %v3177 = vrot.slane %v3176, 2
        %v3178 = vmax.f32 %v3176, %v3177
        %v3179 = vrot.slane %v3178, 1
        %v3180 = vmax.f32 %v3178, %v3179
        %v3181 = vmax.f32 %v3078, %v3079
        %v3182 = vmax.f32 %v3181, %v3080
        %v3183 = vrot.slane %v3182, 4
        %v3184 = vmax.f32 %v3182, %v3183
        %v3185 = vrot.slane %v3184, 2
        %v3186 = vmax.f32 %v3184, %v3185
        %v3187 = vrot.slane %v3186, 1
        %v3188 = vmax.f32 %v3186, %v3187
        %v3189 = vmax.f32 %v3081, %v3082
        %v3190 = vmax.f32 %v3189, %v3083
        %v3191 = vrot.slane %v3190, 4
        %v3192 = vmax.f32 %v3190, %v3191
        %v3193 = vrot.slane %v3192, 2
        %v3194 = vmax.f32 %v3192, %v3193
        %v3195 = vrot.slane %v3194, 1
        %v3196 = vmax.f32 %v3194, %v3195
        %v3197 = vmax.f32 %v3084, %v3085
        %v3198 = vmax.f32 %v3197, %v3086
        %v3199 = vrot.slane %v3198, 4
        %v3200 = vmax.f32 %v3198, %v3199
        %v3201 = vrot.slane %v3200, 2
        %v3202 = vmax.f32 %v3200, %v3201
        %v3203 = vrot.slane %v3202, 1
        %v3204 = vmax.f32 %v3202, %v3203
        %v3205 = vmax.f32 %v3087, %v3088
        %v3206 = vmax.f32 %v3205, %v3089
        %v3207 = vrot.slane %v3206, 4
        %v3208 = vmax.f32 %v3206, %v3207
        %v3209 = vrot.slane %v3208, 2
        %v3210 = vmax.f32 %v3208, %v3209
        %v3211 = vrot.slane %v3210, 1
        %v3212 = vmax.f32 %v3210, %v3211
        %v3213 = vmax.f32 %v3090, %v3091
        %v3214 = vmax.f32 %v3213, %v3092
        %v3215 = vrot.slane %v3214, 4
        %v3216 = vmax.f32 %v3214, %v3215
        %v3217 = vrot.slane %v3216, 2
        %v3218 = vmax.f32 %v3216, %v3217
        %v3219 = vrot.slane %v3218, 1
        %v3220 = vmax.f32 %v3218, %v3219
        %v3221 = vld [vmem:[#allocation8] sm:$0x1]
        %v3223 = vlaneseq
        %v3224 = vshrl.u32 %v3223, 7
        %v3225 = vsub.s32 0, %v3224
        %v3226 = vrot.slane %v3221, %v3225
        %v3228 = vadd.f32 %v3100, %v3226
        %v3229 = vadd.f32 %v3108, %v3226
        %v3230 = vadd.f32 %v3116, %v3226
        %v3231 = vadd.f32 %v3124, %v3226
        %v3232 = vadd.f32 %v3132, %v3226
        %v3233 = vadd.f32 %v3140, %v3226
        %v3234 = vadd.f32 %v3148, %v3226
        %v3235 = vadd.f32 %v3156, %v3226
        %v3236 = vadd.f32 %v3164, %v3226
        %v3237 = vadd.f32 %v3172, %v3226
        %v3238 = vadd.f32 %v3180, %v3226
        %v3239 = vadd.f32 %v3188, %v3226
        %v3240 = vadd.f32 %v3196, %v3226
        %v3241 = vadd.f32 %v3204, %v3226
        %v3242 = vadd.f32 %v3212, %v3226
        %v3243 = vadd.f32 %v3220, %v3226
        %v3244 = vxor.u32 %v3228, 2147483648
        %v3245 = vxor.u32 %v3229, 2147483648
        %v3246 = vxor.u32 %v3230, 2147483648
        %v3247 = vxor.u32 %v3231, 2147483648
        %v3248 = vxor.u32 %v3232, 2147483648
        %v3249 = vxor.u32 %v3233, 2147483648
        %v3250 = vxor.u32 %v3234, 2147483648
        %v3251 = vxor.u32 %v3235, 2147483648
        %v3252 = vxor.u32 %v3236, 2147483648
        %v3253 = vxor.u32 %v3237, 2147483648
        %v3254 = vxor.u32 %v3238, 2147483648
        %v3255 = vxor.u32 %v3239, 2147483648
        %v3256 = vxor.u32 %v3240, 2147483648
        %v3257 = vxor.u32 %v3241, 2147483648
        %v3258 = vxor.u32 %v3242, 2147483648
        %v3259 = vxor.u32 %v3243, 2147483648
        %v3260 = vmul.f32 %v3244, 1.442695
        %v3261 = vpow.pop %v3260
        %v3262 = vmul.f32 %v3245, 1.442695
        %v3263 = vpow.pop %v3262
        %v3264 = vmul.f32 %v3246, 1.442695
        %v3265 = vpow.pop %v3264
        %v3266 = vmul.f32 %v3247, 1.442695
        %v3267 = vpow.pop %v3266
        %v3268 = vmul.f32 %v3248, 1.442695
        %v3269 = vpow.pop %v3268
        %v3270 = vmul.f32 %v3249, 1.442695
        %v3271 = vpow.pop %v3270
        %v3272 = vmul.f32 %v3250, 1.442695
        %v3273 = vpow.pop %v3272
        %v3274 = vmul.f32 %v3251, 1.442695
        %v3275 = vpow.pop %v3274
        %v3276 = vmul.f32 %v3252, 1.442695
        %v3277 = vpow.pop %v3276
        %v3278 = vmul.f32 %v3253, 1.442695
        %v3279 = vpow.pop %v3278
        %v3280 = vmul.f32 %v3254, 1.442695
        %v3281 = vpow.pop %v3280
        %v3282 = vmul.f32 %v3255, 1.442695
        %v3283 = vpow.pop %v3282
        %v3284 = vmul.f32 %v3256, 1.442695
        %v3285 = vpow.pop %v3284
        %v3286 = vmul.f32 %v3257, 1.442695
        %v3287 = vpow.pop %v3286
        %v3288 = vmul.f32 %v3258, 1.442695
        %v3289 = vpow.pop %v3288
        %v3290 = vmul.f32 %v3259, 1.442695
        %v3291 = vpow.pop %v3290
        %v3292 = vadd.f32 %v3261, 1.0
        %v3293 = vadd.f32 %v3263, 1.0
        %v3294 = vadd.f32 %v3265, 1.0
        %v3295 = vadd.f32 %v3267, 1.0
        %v3296 = vadd.f32 %v3269, 1.0
        %v3297 = vadd.f32 %v3271, 1.0
        %v3298 = vadd.f32 %v3273, 1.0
        %v3299 = vadd.f32 %v3275, 1.0
        %v3300 = vadd.f32 %v3277, 1.0
        %v3301 = vadd.f32 %v3279, 1.0
        %v3302 = vadd.f32 %v3281, 1.0
        %v3303 = vadd.f32 %v3283, 1.0
        %v3304 = vadd.f32 %v3285, 1.0
        %v3305 = vadd.f32 %v3287, 1.0
        %v3306 = vadd.f32 %v3289, 1.0
        %v3307 = vadd.f32 %v3291, 1.0
        %v3308 = vrcp.pop %v3292
        %v3309 = vmul.f32 1.0, %v3308
        %v3310 = vrcp.pop %v3293
        %v3311 = vmul.f32 1.0, %v3310
        %v3312 = vrcp.pop %v3294
        %v3313 = vmul.f32 1.0, %v3312
        %v3314 = vrcp.pop %v3295
        %v3315 = vmul.f32 1.0, %v3314
        %v3316 = vrcp.pop %v3296
        %v3317 = vmul.f32 1.0, %v3316
        %v3318 = vrcp.pop %v3297
        %v3319 = vmul.f32 1.0, %v3318
        %v3320 = vrcp.pop %v3298
        %v3321 = vmul.f32 1.0, %v3320
        %v3322 = vrcp.pop %v3299
        %v3323 = vmul.f32 1.0, %v3322
        %v3324 = vrcp.pop %v3300
        %v3325 = vmul.f32 1.0, %v3324
        %v3326 = vrcp.pop %v3301
        %v3327 = vmul.f32 1.0, %v3326
        %v3328 = vrcp.pop %v3302
        %v3329 = vmul.f32 1.0, %v3328
        %v3330 = vrcp.pop %v3303
        %v3331 = vmul.f32 1.0, %v3330
        %v3332 = vrcp.pop %v3304
        %v3333 = vmul.f32 1.0, %v3332
        %v3334 = vrcp.pop %v3305
        %v3335 = vmul.f32 1.0, %v3334
        %v3336 = vrcp.pop %v3306
        %v3337 = vmul.f32 1.0, %v3336
        %v3338 = vrcp.pop %v3307
        %v3339 = vmul.f32 1.0, %v3338
        %v3340 = vld [vmem:[#allocation11] sm:$0x1]
        %v3342 = vlaneseq
        %v3343 = vshrl.u32 %v3342, 7
        %v3344 = vsub.s32 0, %v3343
        %v3345 = vrot.slane %v3340, %v3344
        %v3347 = vmul.f32 %v3309, %v3345
        %v3348 = vmul.f32 %v3311, %v3345
        %v3349 = vmul.f32 %v3313, %v3345
        %v3350 = vmul.f32 %v3315, %v3345
        %v3351 = vmul.f32 %v3317, %v3345
        %v3352 = vmul.f32 %v3319, %v3345
        %v3353 = vmul.f32 %v3321, %v3345
        %v3354 = vmul.f32 %v3323, %v3345
        %v3355 = vmul.f32 %v3325, %v3345
        %v3356 = vmul.f32 %v3327, %v3345
        %v3357 = vmul.f32 %v3329, %v3345
        %v3358 = vmul.f32 %v3331, %v3345
        %v3359 = vmul.f32 %v3333, %v3345
        %v3360 = vmul.f32 %v3335, %v3345
        %v3361 = vmul.f32 %v3337, %v3345
        %v3362 = vmul.f32 %v3339, %v3345
        %v3379 = vrot.slane %v3348, 7
        %vm3380 = vcmask 1041409
        %v3381 = vsel %vm3380, %v3379, %v3347
        %v3382 = vrot.slane %v3349, 6
        %vm3383 = vcmask 1042434
        %v3384 = vsel %vm3383, %v3382, %v3381
        %v3385 = vrot.slane %v3350, 5
        %vm3386 = vcmask 1043459
        %v3387 = vsel %vm3386, %v3385, %v3384
        %v3388 = vrot.slane %v3351, 4
        %vm3389 = vcmask 1044484
        %v3390 = vsel %vm3389, %v3388, %v3387
        %v3391 = vrot.slane %v3352, 3
        %vm3392 = vcmask 1045509
        %v3393 = vsel %vm3392, %v3391, %v3390
        %v3394 = vrot.slane %v3353, 2
        %vm3395 = vcmask 1046534
        %v3396 = vsel %vm3395, %v3394, %v3393
        %v3397 = vrot.slane %v3354, 1
        %vm3398 = vcmask 1047559
        %v3399 = vsel %vm3398, %v3397, %v3396
        %v3400 = vrot.slane %v3356, 7
        %v3401 = vsel %vm3380, %v3400, %v3355
        %v3402 = vrot.slane %v3357, 6
        %v3403 = vsel %vm3383, %v3402, %v3401
        %v3404 = vrot.slane %v3358, 5
        %v3405 = vsel %vm3386, %v3404, %v3403
        %v3406 = vrot.slane %v3359, 4
        %v3407 = vsel %vm3389, %v3406, %v3405
        %v3408 = vrot.slane %v3360, 3
        %v3409 = vsel %vm3392, %v3408, %v3407
        %v3410 = vrot.slane %v3361, 2
        %v3411 = vsel %vm3395, %v3410, %v3409
        %v3412 = vrot.slane %v3362, 1
        %v3413 = vsel %vm3398, %v3412, %v3411
        %3416 = vadd.xlane.f32.xlu0 %v3399
        %v3417 = vpop.xlane.xlu0 %3416
        %3418 = vadd.xlane.f32.xlu0 %v3413
        %v3419 = vpop.xlane.xlu0 %3418
        %v3420 = vld [vmem:[#allocation2] sm:$0x1]
        %v3422 = vlaneseq
        %v3423 = vshrl.u32 %v3422, 7
        %v3424 = vsub.s32 0, %v3423
        %v3425 = vrot.slane %v3420, %v3424
        %v3427 = vadd.f32 %v3417, %v3425
        %v3428 = vadd.f32 %v3419, %v3425
        %v3429 = vld [vmem:[%s6] sm:$0xff]
        %v3430 = vld [vmem:[%s6 + $0x8] sm:$0xff]
        %3432 = vset.pattern.permute.xlu0 0
        %3433 = vperm.xlu0 %3432, %v3427
        %v3434 = vpop.permute.xlu0 %3433
        %3437 = vset.pattern.permute.xlu0 0
        %3438 = vperm.xlu0 %3437, %v3428
        %v3439 = vpop.permute.xlu0 %3438
        %v3441 = vmul.f32 %v3434, %v3429
        %v3442 = vmul.f32 %v3439, %v3430
        %vm3443 = vcmask 15360
        %v3444 = vsel %vm3443, %v3441, 0.0
        %v3445 = vrot.slane %v3444, 4
        %v3446 = vadd.f32 %v3444, %v3445
        %v3447 = vrot.slane %v3446, 2
        %v3448 = vadd.f32 %v3446, %v3447
        %v3449 = vrot.slane %v3448, 1
        %v3450 = vadd.f32 %v3448, %v3449
        %v3451 = vsel %vm3443, %v3442, 0.0
        %v3452 = vrot.slane %v3451, 4
        %v3453 = vadd.f32 %v3451, %v3452
        %v3454 = vrot.slane %v3453, 2
        %v3455 = vadd.f32 %v3453, %v3454
        %v3456 = vrot.slane %v3455, 1
        %v3457 = vadd.f32 %v3455, %v3456
        %v3458 = vld [vmem:[#allocation12] sm:$0x1]
        %v3460 = vlaneseq
        %v3461 = vshrl.u32 %v3460, 7
        %v3462 = vsub.s32 0, %v3461
        %v3463 = vrot.slane %v3458, %v3462
        %v3465 = vadd.f32 %v3450, %v3463
        %v3466 = vadd.f32 %v3457, %v3463
        %v3467 = vmul.f32 %v3465, 0.2
        %v3468 = vmul.f32 %v3466, 0.2
        %v3469 = vxor.u32 %v3467, 2147483648
        %v3470 = vxor.u32 %v3468, 2147483648
        %v3471 = vmul.f32 %v3469, 1.442695
        %v3472 = vpow.pop %v3471
        %v3473 = vmul.f32 %v3470, 1.442695
        %v3474 = vpow.pop %v3473
        %v3475 = vadd.f32 %v3472, 1.0
        %v3476 = vadd.f32 %v3474, 1.0
        %v3477 = vrcp.pop %v3475
        %v3478 = vmul.f32 1.0, %v3477
        %v3479 = vrcp.pop %v3476
        %v3480 = vmul.f32 1.0, %v3479
        %v3483 = vrot.slane %v3480, 7
        %v3484 = vsel %vm3380, %v3483, %v3478
        %vm3486 = vcmask 9216
        %3487 = vst.msk [vmem:[%s392] sm:$0x3] %vm3486, %v3484
        %s3488 = sand.u32 %s211, 1
        %s3489 = scalar_lea.sflag [#allocation5], %s3488
        %s3490 = sand.u32 %s211, 1
        %s3491 = smul.addr %s3490, 2
        %s3492 = scalar_lea.vmem [#allocation14], %s3491
        // Predicated region
        $region77: #{tpu_custom_call.1} parent=51 // pred_check
          %p3493 = pneg %p221
        $region78: #{tpu_custom_call.1} parent=51 // pred_check_branch
          %3495 = sbr.rel (%p3493) target = $region80
        $region79: #{tpu_custom_call.1} parent=51 // pred_region
          %s3497 = ssub.s32 32, 32
          %3498 = vsyncadd %s3489, %s3497
          %s3499 = smul.addr %s30, 32
          %s3500 = scalar_lea.hbm %s8, %s3499
          %s3502 = sshll.u32 %s3492, 4
          %s3503 = int_to_ptr.vmem [resolvable:$true] %s3502
          %3505 = dma.vmem_to_hbm [thread:$0]  %s3503, 32, %s3500, %s3489
        $region80: #{tpu_custom_call.1} parent=51 // pred_fallthru
          _
      $region52: #{tpu_custom_call.1} parent=5 // pred_fallthru
        _
      %p3506 = scmp.le.s32.totalorder 2, %s25
      // Predicated region
      $region81: #{tpu_custom_call.1} parent=5 // pred_check
        %p3507 = pneg %p3506
      $region82: #{tpu_custom_call.1} parent=5 // pred_check_branch
        %3509 = sbr.rel (%p3507) target = $region84
      $region83: #{tpu_custom_call.1} parent=5 // pred_region
        %s3510 = ssub.s32 %s25, 2
        // Predicated region
        $region85: #{tpu_custom_call.1} parent=83 // pred_check
          %p3511 = pneg %p227
        $region86: #{tpu_custom_call.1} parent=83 // pred_check_branch
          %3513 = sbr.rel (%p3511) target = $region88
        $region87: #{tpu_custom_call.1} parent=83 // pred_region
          %s3514 = sand.u32 %s212, 1
          %s3515 = scalar_lea.sflag [#allocation5], %s3514
          %s3516 = sand.u32 %s212, 1
          %s3517 = smul.addr %s3516, 2
          %s3518 = scalar_lea.vmem [#allocation14], %s3517
          %3519 = dma.done %s3515, 32
        $region88: #{tpu_custom_call.1} parent=83 // pred_fallthru
          _
      $region84: #{tpu_custom_call.1} parent=5 // pred_fallthru
        _
    $region6: #{tpu_custom_call.1} parent=1 // loop_footer
      %s29 = sadd.s32 1, %s25
    $region7: #{tpu_custom_call.1} parent=1 // loop_footer_branch
      %24 = sbr.rel target = $region3
    $region8: #{tpu_custom_call.1} parent=1 // loop_exit
      _
    %3520 = vsyncpa [#allocation4], 1
    %s3521 = scalar_lea.sflag [#allocation4], 1
    %3522 = vsyncpa %s3521, 1
    %3523 = vsyncpa [#allocation7], 1
    %3524 = vsyncpa [#allocation10], 1
    %3525 = vsyncpa [#allocation13], 1
    %3526 = vsyncpa [#allocation5], 1
    %s3527 = scalar_lea.sflag [#allocation5], 1
    %3528 = vsyncpa %s3527, 1

</llo_original>
